<compile_context>
chip_gen: v7x
topology: tpu7x:2x2x1
jax: 0.10.0
libtpu: 0.0.40
codegen_flags: <defaults>
</compile_context>

<pallas_src>
import jax
import jax.numpy as jnp
from jax.experimental import pallas as pl
from jax.experimental.pallas import tpu as pltpu

BN_EPS = 1e-5
LANE = 128
NEG_BIG = -1e30


def _round_up(x, m):
    return ((x + m - 1) // m) * m


def _batchnorm(x, gamma, beta):
    """Training-mode BatchNorm1d (biased var) applied as one scale/shift.

    Single-pass statistics (sum + sum-of-squares from one read); the per-row
    apply is x * scale + shift (2 VPU ops/element), with the per-lane algebra
    done once on [1, PAD] vectors.
    """
    n = x.shape[0]
    inv_n = 1.0 / n
    s = jnp.sum(x, axis=0, keepdims=True)
    s2 = jnp.sum(x * x, axis=0, keepdims=True)
    mean = s * inv_n
    var = jnp.maximum(s2 * inv_n - mean * mean, 0.0)   # biased variance
    scale = jax.lax.rsqrt(var + BN_EPS) * gamma
    shift = beta - mean * scale
    return x * scale + shift


def _make_kernel(n_features, row_base, n_hidden, rpad):
    def kernel(cat_ref, emb_ref, w_ref, v_ref, o_ref):
        # cat_ref : [B, F]        int32 raw categorical codes
        # emb_ref : [RPAD, PAD]   f32   fused, column-placed, zero-padded table
        # w_ref   : [L, PAD, PAD] bf16  stacked, zero-padded, pre-transposed W
        # v_ref   : [n_vec, PAD]  f32   bn0_g, bn0_b, (b, g, beta)*hidden, out_b
        #                               (out_b padded lanes pre-filled with NEG_BIG)
        # o_ref   : [B, PAD]      f32   softmax (real classes in lanes [:out_size])
        B = cat_ref.shape[0]

        # --- fused embedding lookup + concat: build a summed one-hot selector
        # over the fused table rows, then one f32 MXU matmul. Exact: every
        # feature's rows and columns are disjoint in the fused table.
        col = jax.lax.broadcasted_iota(jnp.int32, (B, rpad), 1)
        onehot = jnp.zeros((B, rpad), jnp.float32)
        for f in range(n_features):
            idx = cat_ref[:, f:f + 1] + row_base[f]            # [B, 1] int32
            onehot = onehot + (col == idx).astype(jnp.float32)
        x = jnp.dot(onehot, emb_ref[...], preferred_element_type=jnp.float32)

        x = _batchnorm(x, v_ref[0:1, :], v_ref[1:2, :])
        # TODO(synk): dropout is RNG-dependent; treated as identity (p=0 / eval).

        row = 2
        for i in range(n_hidden):
            w = w_ref[i]                                       # [PAD, PAD] bf16
            b = v_ref[row:row + 1, :]
            g = v_ref[row + 1:row + 2, :]
            be = v_ref[row + 2:row + 3, :]
            row += 3
            h = jnp.dot(x.astype(jnp.bfloat16), w,
                        preferred_element_type=jnp.float32) + b
            h = jnp.maximum(h, 0.0)
            x = _batchnorm(h, g, be)

        # output layer: padded logit lanes are pinned to NEG_BIG purely through
        # the pre-baked bias row (padded weight columns are zero), so no
        # iota/where mask is needed before the softmax reduction.
        logits = jnp.dot(x.astype(jnp.bfloat16), w_ref[n_hidden],
                         preferred_element_type=jnp.float32) + v_ref[row:row + 1, :]

        m = jnp.max(logits, axis=1, keepdims=True)
        e = jnp.exp(logits - m)
        denom = jnp.sum(e, axis=1, keepdims=True)
        o_ref[...] = e * pl.reciprocal(denom, approx=True)

    return kernel


def _vmem_limit_bytes():
    """Per-generation VMEM limit (v5e/v6e: up to 96 MiB; v7x: ~48 MiB)."""
    try:
        info = pltpu.get_tpu_info()
        phys = getattr(info, "vmem_capacity_bytes", None)
        if phys:
            return int(min(phys * 3 // 4, 96 * 1024 * 1024))
    except Exception:
        pass
    return 48 * 1024 * 1024   # conservative fallback, fits v7x's 64 MiB


def gotta_torch_forward(cat_data, params):
    """cat_data: int32 [B, n_features]; params: dict from init_params."""
    B, F = cat_data.shape
    PAD = params["pad"]
    out_size = params["output_size"]
    n_hidden = params["n_hidden"]
    fused_emb = params["fused_emb"]
    RPAD = fused_emb.shape[0]
    w_stack = params["w_stack"]
    v_stack = params["v_stack"]

    vmem_limit = _vmem_limit_bytes()

    # VMEM budget: operands + output + ~5 live [B, PAD] intermediates
    # (x, h, x*x, e, bf16 casts) that the compiler keeps alive in the body.
    act_buf = B * PAD * 4
    operand_bytes = (cat_data.size * 4 + fused_emb.size * 4
                     + w_stack.size * 2 + v_stack.size * 4)
    resident = operand_bytes + 6 * act_buf
    if resident > int(vmem_limit * 0.8):
        # TODO(synk): batch-tiled grid with two-pass-per-layer BN (accumulate
        # per-tile sum/sumsq, then normalize) would remove this ceiling.
        raise ValueError("batch too large for the VMEM-resident fused kernel")

    flops = 2 * B * (RPAD * PAD + PAD * PAD * (n_hidden + 1))
    cost = pl.CostEstimate(flops=flops,
                           transcendentals=B * PAD,
                           bytes_accessed=operand_bytes + B * PAD * 4)

    vmem = pl.BlockSpec(memory_space=pltpu.MemorySpace.VMEM)
    out_padded = pl.pallas_call(
        _make_kernel(F, params["row_base"], n_hidden, RPAD),
        out_shape=jax.ShapeDtypeStruct((B, PAD), jnp.float32),
        in_specs=[vmem, vmem, vmem, vmem],
        out_specs=vmem,
        cost_estimate=cost,
        compiler_params=pltpu.CompilerParams(vmem_limit_bytes=vmem_limit),
    )(cat_data.astype(jnp.int32), fused_emb, w_stack, v_stack)
    return out_padded[:, :out_size]


def init_params(key, emb_dims, lin_layer_sizes, output_size):
    """Parameter init mirroring the module shapes, plus packed/padded copies."""
    no_of_embs = sum(d for _, d in emb_dims)
    n_hidden = len(lin_layer_sizes)
    # TODO(synk): for strongly heterogeneous layer widths, pad each layer to its
    # own (round_up(in,128), round_up(out,128)) instead of one global PAD; for
    # this config every width collapses to 128 so uniform padding is already optimal.
    PAD = _round_up(max([no_of_embs] + list(lin_layer_sizes) + [output_size]), LANE)

    keys = iter(jax.random.split(key, 64))

    # raw per-feature embedding tables (also used by the pure-JAX reference)
    emb_tables = [jax.random.normal(next(keys), (n, d), dtype=jnp.float32)
                  for (n, d) in emb_dims]

    # fused, column-placed, zero-padded table (rows padded to a 128-multiple
    # so the in-kernel one-hot matmul runs on aligned MXU tiles)
    col_off, row_base, c, r = [], [], 0, 0
    for n, d in emb_dims:
        col_off.append(c)
        row_base.append(r)
        c += d
        r += n
    RPAD = _round_up(max(r, 1), LANE)
    fused = jnp.zeros((RPAD, PAD), jnp.float32)
    for i, (n, d) in enumerate(emb_dims):
        fused = fused.at[row_base[i]:row_base[i] + n,
                         col_off[i]:col_off[i] + d].set(emb_tables[i])

    def kaiming(k, fan_in, fan_out):
        std = (2.0 / fan_in) ** 0.5
        return jax.random.normal(k, (fan_in, fan_out), dtype=jnp.float32) * std

    lin_Wt, lin_b = [], []
    in_dim = no_of_embs
    for size in lin_layer_sizes:
        lin_Wt.append(kaiming(next(keys), in_dim, size))          # [in, out]
        bound = 1.0 / (in_dim ** 0.5)
        lin_b.append(jax.random.uniform(next(keys), (size,), jnp.float32,
                                        -bound, bound))
        in_dim = size
    out_Wt = kaiming(next(keys), in_dim, output_size)
    bound = 1.0 / (in_dim ** 0.5)
    out_b = jax.random.uniform(next(keys), (output_size,), jnp.float32,
                               -bound, bound)

    # packed, zero-padded bf16 weight stack [L, PAD, PAD]
    w_stack = jnp.zeros((n_hidden + 1, PAD, PAD), jnp.float32)
    in_dim = no_of_embs
    for i, size in enumerate(lin_layer_sizes):
        w_stack = w_stack.at[i, :in_dim, :size].set(lin_Wt[i])
        in_dim = size
    w_stack = w_stack.at[n_hidden, :in_dim, :output_size].set(out_Wt)
    w_stack = w_stack.astype(jnp.bfloat16)

    # packed f32 vector stack: bn0_gamma, bn0_beta, (b, gamma, beta)*hidden, out_b
    n_vec = 2 + 3 * n_hidden + 1
    v_stack = jnp.zeros((n_vec, PAD), jnp.float32)
    v_stack = v_stack.at[0, :no_of_embs].set(1.0)                 # bn0 gamma
    row = 2
    for i, size in enumerate(lin_layer_sizes):
        v_stack = v_stack.at[row, :size].set(lin_b[i])            # linear bias
        v_stack = v_stack.at[row + 1, :size].set(1.0)             # bn gamma
        row += 3                                                  # bn beta = 0
    v_stack = v_stack.at[row, :output_size].set(out_b)            # out bias
    # bake the softmax padding mask into the output-bias row: padded weight
    # columns are zero, so those lanes' logits become exactly NEG_BIG.
    v_stack = v_stack.at[row, output_size:].set(NEG_BIG)

    return {
        "emb_tables": emb_tables,
        "fused_emb": fused,
        "row_base": tuple(int(x) for x in row_base),   # static, closed over by kernel
        "lin_Wt": lin_Wt, "lin_b": lin_b,
        "out_Wt": out_Wt, "out_b": out_b,
        "w_stack": w_stack, "v_stack": v_stack,
        "pad": PAD, "n_hidden": n_hidden, "output_size": output_size,
        "no_of_embs": no_of_embs,
    }


def reference_forward(cat_data, params):
    """Pure-JAX reference mirroring the kernel numerics (bf16 matmuls, f32 BN)."""
    emb_cols = [tbl[cat_data[:, i]] for i, tbl in enumerate(params["emb_tables"])]
    x = jnp.concatenate(emb_cols, axis=1).astype(jnp.float32)
    ones = jnp.ones((1, x.shape[1]), jnp.float32)
    x = _batchnorm(x, ones, jnp.zeros_like(ones))
    for Wt, b in zip(params["lin_Wt"], params["lin_b"]):
        h = jnp.dot(x.astype(jnp.bfloat16), Wt.astype(jnp.bfloat16),
                    preferred_element_type=jnp.float32) + b[None, :]
        h = jnp.maximum(h, 0.0)
        ones_h = jnp.ones((1, h.shape[1]), jnp.float32)
        x = _batchnorm(h, ones_h, jnp.zeros_like(ones_h))
    logits = jnp.dot(x.astype(jnp.bfloat16), params["out_Wt"].astype(jnp.bfloat16),
                     preferred_element_type=jnp.float32) + params["out_b"][None, :]
    return jax.nn.softmax(logits, axis=1)


if __name__ == "__main__":
    # small synthetic config:
    #   4 categorical features with cardinalities 10, 7, 12, 5
    #   emb dims = (x+1)//2 capped at 50 -> 5, 4, 6, 3 (no_of_embs = 18 -> padded 128)
    emb_dims = [(10, 5), (7, 4), (12, 6), (5, 3)]
    lin_layer_sizes = [32, 16]
    output_size = 3
    batch = 256            # fills the MXU M dimension (multiple of 128)

    key = jax.random.PRNGKey(0)
    k_params, k_data = jax.random.split(key)
    params = init_params(k_params, emb_dims, lin_layer_sizes, output_size)

    cards = jnp.array([n for n, _ in emb_dims], dtype=jnp.int32)
    cat_data = (jax.random.randint(k_data, (batch, len(emb_dims)), 0, 10_000)
                % cards).astype(jnp.int32)

    out = jax.block_until_ready(gotta_torch_forward(cat_data, params))
    ref = reference_forward(cat_data, params)

    assert out.shape == (batch, output_size)
    assert jnp.allclose(out, ref, atol=2e-3, rtol=2e-3), "mismatch vs JAX reference"
    assert jnp.allclose(jnp.sum(out, axis=1), 1.0, atol=2e-3), "softmax rows must sum to ~1"

    print("KERNEL_OK")
</pallas_src>

<mosaic_0001>
module attributes {stable_mosaic.version = 11 : i64} {
  func.func @kernel(%arg0: memref<256x4xi32, #tpu.memory_space<vmem>>, %arg1: memref<128x128xf32, #tpu.memory_space<vmem>>, %arg2: memref<3x128x128xbf16, #tpu.memory_space<vmem>>, %arg3: memref<9x128xf32, #tpu.memory_space<vmem>>, %arg4: memref<256x128xf32, #tpu.memory_space<vmem>>) attributes {dimension_semantics = [], scalar_prefetch = 0 : i64, scratch_operands = 0 : i64, tpu.core_type = #tpu.core_type<tc>} {
    %0 = tpu.iota {dimensions = array<i32: 1>} : vector<256x128xi32>
    %cst = arith.constant 0.000000e+00 : f32
    %1 = vector.broadcast %cst : f32 to vector<256x128xf32>
    %c0 = arith.constant 0 : index
    %c0_0 = arith.constant 0 : index
    %2 = vector.load %arg0[%c0, %c0_0] : memref<256x4xi32, #tpu.memory_space<vmem>>, vector<256x1xi32>
    %c0_i32 = arith.constant 0 : i32
    %3 = vector.broadcast %c0_i32 : i32 to vector<256x1xi32>
    %4 = arith.addi %2, %3 : vector<256x1xi32>
    %5 = vector.broadcast %4 : vector<256x1xi32> to vector<256x128xi32>
    %6 = arith.cmpi eq, %0, %5 : vector<256x128xi32>
    %7 = arith.extui %6 : vector<256x128xi1> to vector<256x128xi32>
    %8 = arith.sitofp %7 : vector<256x128xi32> to vector<256x128xf32>
    %9 = arith.addf %1, %8 : vector<256x128xf32>
    %c0_1 = arith.constant 0 : index
    %c1 = arith.constant 1 : index
    %10 = vector.load %arg0[%c0_1, %c1] : memref<256x4xi32, #tpu.memory_space<vmem>>, vector<256x1xi32>
    %c10_i32 = arith.constant 10 : i32
    %11 = vector.broadcast %c10_i32 : i32 to vector<256x1xi32>
    %12 = arith.addi %10, %11 : vector<256x1xi32>
    %13 = vector.broadcast %12 : vector<256x1xi32> to vector<256x128xi32>
    %14 = arith.cmpi eq, %0, %13 : vector<256x128xi32>
    %15 = arith.extui %14 : vector<256x128xi1> to vector<256x128xi32>
    %16 = arith.sitofp %15 : vector<256x128xi32> to vector<256x128xf32>
    %17 = arith.addf %9, %16 : vector<256x128xf32>
    %c0_2 = arith.constant 0 : index
    %c2 = arith.constant 2 : index
    %18 = vector.load %arg0[%c0_2, %c2] : memref<256x4xi32, #tpu.memory_space<vmem>>, vector<256x1xi32>
    %c17_i32 = arith.constant 17 : i32
    %19 = vector.broadcast %c17_i32 : i32 to vector<256x1xi32>
    %20 = arith.addi %18, %19 : vector<256x1xi32>
    %21 = vector.broadcast %20 : vector<256x1xi32> to vector<256x128xi32>
    %22 = arith.cmpi eq, %0, %21 : vector<256x128xi32>
    %23 = arith.extui %22 : vector<256x128xi1> to vector<256x128xi32>
    %24 = arith.sitofp %23 : vector<256x128xi32> to vector<256x128xf32>
    %25 = arith.addf %17, %24 : vector<256x128xf32>
    %c0_3 = arith.constant 0 : index
    %c3 = arith.constant 3 : index
    %26 = vector.load %arg0[%c0_3, %c3] : memref<256x4xi32, #tpu.memory_space<vmem>>, vector<256x1xi32>
    %c29_i32 = arith.constant 29 : i32
    %27 = vector.broadcast %c29_i32 : i32 to vector<256x1xi32>
    %28 = arith.addi %26, %27 : vector<256x1xi32>
    %29 = vector.broadcast %28 : vector<256x1xi32> to vector<256x128xi32>
    %30 = arith.cmpi eq, %0, %29 : vector<256x128xi32>
    %31 = arith.extui %30 : vector<256x128xi1> to vector<256x128xi32>
    %32 = arith.sitofp %31 : vector<256x128xi32> to vector<256x128xf32>
    %33 = arith.addf %25, %32 : vector<256x128xf32>
    %c0_4 = arith.constant 0 : index
    %c0_5 = arith.constant 0 : index
    %34 = vector.load %arg1[%c0_4, %c0_5] : memref<128x128xf32, #tpu.memory_space<vmem>>, vector<128x128xf32>
    %cst_6 = arith.constant dense<0.000000e+00> : vector<256x128xf32>
    %35 = tpu.matmul %33, %34, %cst_6 {dimension_numbers = #tpu.dot_dimension_numbers<[1], [0], [0], [1], [0, 0, 1, 1], [], []>} : vector<256x128xf32>, vector<128x128xf32>, vector<256x128xf32> -> vector<256x128xf32>
    %c0_7 = arith.constant 0 : index
    %c0_8 = arith.constant 0 : index
    %36 = vector.load %arg3[%c0_7, %c0_8] : memref<9x128xf32, #tpu.memory_space<vmem>>, vector<1x128xf32>
    %c1_9 = arith.constant 1 : index
    %c0_10 = arith.constant 0 : index
    %37 = vector.load %arg3[%c1_9, %c0_10] : memref<9x128xf32, #tpu.memory_space<vmem>>, vector<1x128xf32>
    %cst_11 = arith.constant dense<0.000000e+00> : vector<128xf32>
    %38 = vector.multi_reduction <add>, %35, %cst_11 [0] : vector<256x128xf32> to vector<128xf32>
    %39 = vector.shape_cast %38 : vector<128xf32> to vector<1x128xf32>
    %40 = arith.mulf %35, %35 : vector<256x128xf32>
    %cst_12 = arith.constant dense<0.000000e+00> : vector<128xf32>
    %41 = vector.multi_reduction <add>, %40, %cst_12 [0] : vector<256x128xf32> to vector<128xf32>
    %42 = vector.shape_cast %41 : vector<128xf32> to vector<1x128xf32>
    %cst_13 = arith.constant 3.906250e-03 : f32
    %43 = vector.broadcast %cst_13 : f32 to vector<1x128xf32>
    %44 = arith.mulf %39, %43 : vector<1x128xf32>
    %cst_14 = arith.constant 3.906250e-03 : f32
    %45 = vector.broadcast %cst_14 : f32 to vector<1x128xf32>
    %46 = arith.mulf %42, %45 : vector<1x128xf32>
    %47 = arith.mulf %44, %44 : vector<1x128xf32>
    %48 = arith.subf %46, %47 : vector<1x128xf32>
    %cst_15 = arith.constant 0.000000e+00 : f32
    %49 = vector.broadcast %cst_15 : f32 to vector<1x128xf32>
    %50 = arith.maximumf %48, %49 : vector<1x128xf32>
    %cst_16 = arith.constant 9.99999974E-6 : f32
    %51 = vector.broadcast %cst_16 : f32 to vector<1x128xf32>
    %52 = arith.addf %50, %51 : vector<1x128xf32>
    %53 = math.rsqrt %52 : vector<1x128xf32>
    %54 = arith.mulf %53, %36 : vector<1x128xf32>
    %55 = arith.mulf %44, %54 : vector<1x128xf32>
    %56 = arith.subf %37, %55 : vector<1x128xf32>
    %57 = vector.broadcast %54 : vector<1x128xf32> to vector<256x128xf32>
    %58 = arith.mulf %35, %57 : vector<256x128xf32>
    %59 = vector.broadcast %56 : vector<1x128xf32> to vector<256x128xf32>
    %60 = arith.addf %58, %59 : vector<256x128xf32>
    %c0_17 = arith.constant 0 : index
    %c0_18 = arith.constant 0 : index
    %c0_19 = arith.constant 0 : index
    %61 = vector.load %arg2[%c0_17, %c0_18, %c0_19] : memref<3x128x128xbf16, #tpu.memory_space<vmem>>, vector<1x128x128xbf16>
    %62 = vector.shape_cast %61 : vector<1x128x128xbf16> to vector<128x128xbf16>
    %c2_20 = arith.constant 2 : index
    %c0_21 = arith.constant 0 : index
    %63 = vector.load %arg3[%c2_20, %c0_21] : memref<9x128xf32, #tpu.memory_space<vmem>>, vector<1x128xf32>
    %c3_22 = arith.constant 3 : index
    %c0_23 = arith.constant 0 : index
    %64 = vector.load %arg3[%c3_22, %c0_23] : memref<9x128xf32, #tpu.memory_space<vmem>>, vector<1x128xf32>
    %c4 = arith.constant 4 : index
    %c0_24 = arith.constant 0 : index
    %65 = vector.load %arg3[%c4, %c0_24] : memref<9x128xf32, #tpu.memory_space<vmem>>, vector<1x128xf32>
    %66 = arith.truncf %60 : vector<256x128xf32> to vector<256x128xbf16>
    %cst_25 = arith.constant dense<0.000000e+00> : vector<256x128xf32>
    %67 = tpu.matmul %66, %62, %cst_25 {dimension_numbers = #tpu.dot_dimension_numbers<[1], [0], [0], [1], [0, 0, 1, 1], [], []>} : vector<256x128xbf16>, vector<128x128xbf16>, vector<256x128xf32> -> vector<256x128xf32>
    %68 = vector.broadcast %63 : vector<1x128xf32> to vector<256x128xf32>
    %69 = arith.addf %67, %68 : vector<256x128xf32>
    %cst_26 = arith.constant 0.000000e+00 : f32
    %70 = vector.broadcast %cst_26 : f32 to vector<256x128xf32>
    %71 = arith.maximumf %69, %70 : vector<256x128xf32>
    %cst_27 = arith.constant dense<0.000000e+00> : vector<128xf32>
    %72 = vector.multi_reduction <add>, %71, %cst_27 [0] : vector<256x128xf32> to vector<128xf32>
    %73 = vector.shape_cast %72 : vector<128xf32> to vector<1x128xf32>
    %74 = arith.mulf %71, %71 : vector<256x128xf32>
    %cst_28 = arith.constant dense<0.000000e+00> : vector<128xf32>
    %75 = vector.multi_reduction <add>, %74, %cst_28 [0] : vector<256x128xf32> to vector<128xf32>
    %76 = vector.shape_cast %75 : vector<128xf32> to vector<1x128xf32>
    %cst_29 = arith.constant 3.906250e-03 : f32
    %77 = vector.broadcast %cst_29 : f32 to vector<1x128xf32>
    %78 = arith.mulf %73, %77 : vector<1x128xf32>
    %cst_30 = arith.constant 3.906250e-03 : f32
    %79 = vector.broadcast %cst_30 : f32 to vector<1x128xf32>
    %80 = arith.mulf %76, %79 : vector<1x128xf32>
    %81 = arith.mulf %78, %78 : vector<1x128xf32>
    %82 = arith.subf %80, %81 : vector<1x128xf32>
    %cst_31 = arith.constant 0.000000e+00 : f32
    %83 = vector.broadcast %cst_31 : f32 to vector<1x128xf32>
    %84 = arith.maximumf %82, %83 : vector<1x128xf32>
    %cst_32 = arith.constant 9.99999974E-6 : f32
    %85 = vector.broadcast %cst_32 : f32 to vector<1x128xf32>
    %86 = arith.addf %84, %85 : vector<1x128xf32>
    %87 = math.rsqrt %86 : vector<1x128xf32>
    %88 = arith.mulf %87, %64 : vector<1x128xf32>
    %89 = arith.mulf %78, %88 : vector<1x128xf32>
    %90 = arith.subf %65, %89 : vector<1x128xf32>
    %91 = vector.broadcast %88 : vector<1x128xf32> to vector<256x128xf32>
    %92 = arith.mulf %71, %91 : vector<256x128xf32>
    %93 = vector.broadcast %90 : vector<1x128xf32> to vector<256x128xf32>
    %94 = arith.addf %92, %93 : vector<256x128xf32>
    %c1_33 = arith.constant 1 : index
    %c0_34 = arith.constant 0 : index
    %c0_35 = arith.constant 0 : index
    %95 = vector.load %arg2[%c1_33, %c0_34, %c0_35] : memref<3x128x128xbf16, #tpu.memory_space<vmem>>, vector<1x128x128xbf16>
    %96 = vector.shape_cast %95 : vector<1x128x128xbf16> to vector<128x128xbf16>
    %c5 = arith.constant 5 : index
    %c0_36 = arith.constant 0 : index
    %97 = vector.load %arg3[%c5, %c0_36] : memref<9x128xf32, #tpu.memory_space<vmem>>, vector<1x128xf32>
    %c6 = arith.constant 6 : index
    %c0_37 = arith.constant 0 : index
    %98 = vector.load %arg3[%c6, %c0_37] : memref<9x128xf32, #tpu.memory_space<vmem>>, vector<1x128xf32>
    %c7 = arith.constant 7 : index
    %c0_38 = arith.constant 0 : index
    %99 = vector.load %arg3[%c7, %c0_38] : memref<9x128xf32, #tpu.memory_space<vmem>>, vector<1x128xf32>
    %100 = arith.truncf %94 : vector<256x128xf32> to vector<256x128xbf16>
    %cst_39 = arith.constant dense<0.000000e+00> : vector<256x128xf32>
    %101 = tpu.matmul %100, %96, %cst_39 {dimension_numbers = #tpu.dot_dimension_numbers<[1], [0], [0], [1], [0, 0, 1, 1], [], []>} : vector<256x128xbf16>, vector<128x128xbf16>, vector<256x128xf32> -> vector<256x128xf32>
    %102 = vector.broadcast %97 : vector<1x128xf32> to vector<256x128xf32>
    %103 = arith.addf %101, %102 : vector<256x128xf32>
    %cst_40 = arith.constant 0.000000e+00 : f32
    %104 = vector.broadcast %cst_40 : f32 to vector<256x128xf32>
    %105 = arith.maximumf %103, %104 : vector<256x128xf32>
    %cst_41 = arith.constant dense<0.000000e+00> : vector<128xf32>
    %106 = vector.multi_reduction <add>, %105, %cst_41 [0] : vector<256x128xf32> to vector<128xf32>
    %107 = vector.shape_cast %106 : vector<128xf32> to vector<1x128xf32>
    %108 = arith.mulf %105, %105 : vector<256x128xf32>
    %cst_42 = arith.constant dense<0.000000e+00> : vector<128xf32>
    %109 = vector.multi_reduction <add>, %108, %cst_42 [0] : vector<256x128xf32> to vector<128xf32>
    %110 = vector.shape_cast %109 : vector<128xf32> to vector<1x128xf32>
    %cst_43 = arith.constant 3.906250e-03 : f32
    %111 = vector.broadcast %cst_43 : f32 to vector<1x128xf32>
    %112 = arith.mulf %107, %111 : vector<1x128xf32>
    %cst_44 = arith.constant 3.906250e-03 : f32
    %113 = vector.broadcast %cst_44 : f32 to vector<1x128xf32>
    %114 = arith.mulf %110, %113 : vector<1x128xf32>
    %115 = arith.mulf %112, %112 : vector<1x128xf32>
    %116 = arith.subf %114, %115 : vector<1x128xf32>
    %cst_45 = arith.constant 0.000000e+00 : f32
    %117 = vector.broadcast %cst_45 : f32 to vector<1x128xf32>
    %118 = arith.maximumf %116, %117 : vector<1x128xf32>
    %cst_46 = arith.constant 9.99999974E-6 : f32
    %119 = vector.broadcast %cst_46 : f32 to vector<1x128xf32>
    %120 = arith.addf %118, %119 : vector<1x128xf32>
    %121 = math.rsqrt %120 : vector<1x128xf32>
    %122 = arith.mulf %121, %98 : vector<1x128xf32>
    %123 = arith.mulf %112, %122 : vector<1x128xf32>
    %124 = arith.subf %99, %123 : vector<1x128xf32>
    %125 = vector.broadcast %122 : vector<1x128xf32> to vector<256x128xf32>
    %126 = arith.mulf %105, %125 : vector<256x128xf32>
    %127 = vector.broadcast %124 : vector<1x128xf32> to vector<256x128xf32>
    %128 = arith.addf %126, %127 : vector<256x128xf32>
    %129 = arith.truncf %128 : vector<256x128xf32> to vector<256x128xbf16>
    %c2_47 = arith.constant 2 : index
    %c0_48 = arith.constant 0 : index
    %c0_49 = arith.constant 0 : index
    %130 = vector.load %arg2[%c2_47, %c0_48, %c0_49] : memref<3x128x128xbf16, #tpu.memory_space<vmem>>, vector<1x128x128xbf16>
    %131 = vector.shape_cast %130 : vector<1x128x128xbf16> to vector<128x128xbf16>
    %cst_50 = arith.constant dense<0.000000e+00> : vector<256x128xf32>
    %132 = tpu.matmul %129, %131, %cst_50 {dimension_numbers = #tpu.dot_dimension_numbers<[1], [0], [0], [1], [0, 0, 1, 1], [], []>} : vector<256x128xbf16>, vector<128x128xbf16>, vector<256x128xf32> -> vector<256x128xf32>
    %c8 = arith.constant 8 : index
    %c0_51 = arith.constant 0 : index
    %133 = vector.load %arg3[%c8, %c0_51] : memref<9x128xf32, #tpu.memory_space<vmem>>, vector<1x128xf32>
    %134 = vector.broadcast %133 : vector<1x128xf32> to vector<256x128xf32>
    %135 = arith.addf %132, %134 : vector<256x128xf32>
    %cst_52 = arith.constant dense<0xFF800000> : vector<256xf32>
    %136 = vector.multi_reduction <maximumf>, %135, %cst_52 [1] : vector<256x128xf32> to vector<256xf32>
    %137 = vector.shape_cast %136 : vector<256xf32> to vector<256x1xf32>
    %138 = vector.broadcast %137 : vector<256x1xf32> to vector<256x128xf32>
    %139 = arith.subf %135, %138 : vector<256x128xf32>
    %140 = math.exp %139 : vector<256x128xf32>
    %cst_53 = arith.constant dense<0.000000e+00> : vector<256xf32>
    %141 = vector.multi_reduction <add>, %140, %cst_53 [1] : vector<256x128xf32> to vector<256xf32>
    %142 = vector.shape_cast %141 : vector<256xf32> to vector<256x1xf32>
    %143 = tpu.reciprocal %142 {approx = true} : vector<256x1xf32> -> vector<256x1xf32>
    %144 = vector.broadcast %143 : vector<256x1xf32> to vector<256x128xf32>
    %145 = arith.mulf %140, %144 : vector<256x128xf32>
    %c0_54 = arith.constant 0 : index
    %c0_55 = arith.constant 0 : index
    %146 = vector.load %arg4[%c0_54, %c0_55] : memref<256x128xf32, #tpu.memory_space<vmem>>, vector<256x128xf32>
    tpu.vector_store %arg4[%c0_54, %c0_55], %145 {strides = array<i32>} : memref<256x128xf32, #tpu.memory_space<vmem>>, vector<256x128xf32>,
    return
  }
}

</mosaic_0001>

<llo_original>
// kernel: tpu_custom_call.1
$region0: #{tpu_custom_call.1}
  #allocation0 [shape = 'u32[]', space=smem, size = 0x4, offset = 0x4, fixed_abs, tag = 'smem constant byte address 0x4 - core index']
  #allocation1 [shape = 'u32[144,128]{1,0:T(1,128)}', space=vmem, size = 0x12000, scoped, tag = 'internal scratch']
  %s0 = inlined_call_operand.vmem [shape: s32[256,4], index: 0, kind: input, shape index: {}]
  %s1 = inlined_call_operand.hbm [shape: f32[128,128], index: 1, kind: input, shape index: {}]
  %s2 = inlined_call_operand.vmem [shape: bf16[3,128,128], index: 2, kind: input, shape index: {}]
  %s3 = inlined_call_operand.vmem [shape: f32[9,128], index: 3, kind: input, shape index: {}]
  %s4 = inlined_call_operand.hbm [shape: f32[256,128], index: 4, kind: output, shape index: {}]
  %s5 = sld [smem:[#allocation0]]
  $region30: #{tpu_custom_call.1} parent=0
    _
  %s7 = ssub.s32 1, %s5
  %s8 = scalar_select 0, %s7, %s5
  $region1: #{tpu_custom_call.1} parent=0
    #allocation2 [shape = 'u8[65536]{0}', space=vmem, size = 0x10000, scoped, tag = 'input window, operand 1, single buffered']
    #allocation3 [shape = 's32[1]{0}', space=sflag, size = 0x4, scoped, tag = 'scoped memory for tpu_custom_call.1']
    #allocation4 [shape = 's32[1]{0}', space=sflag, size = 0x4, scoped, tag = 'scoped memory for tpu_custom_call.1']
    #allocation5 [shape = 'u8[131072]{0}', space=vmem, size = 0x20000, scoped, tag = 'output window, operand 0, single buffered']
    %9 = vsyncpa [#allocation3], 0
    %10 = vsyncpa [#allocation4], 0
    // Predicated region
    $region2: #{tpu_custom_call.1} parent=1 // pred_check
      _
    $region3: #{tpu_custom_call.1} parent=1 // pred_check_branch
      %12 = sbr.rel (0) target = $region5
    $region4: #{tpu_custom_call.1} parent=1 // pred_region
      _
    $region5: #{tpu_custom_call.1} parent=1 // pred_fallthru
      _
    // Predicated region
    $region6: #{tpu_custom_call.1} parent=1 // pred_check
      _
    $region7: #{tpu_custom_call.1} parent=1 // pred_check_branch
      %14 = sbr.rel (0) target = $region9
    $region8: #{tpu_custom_call.1} parent=1 // pred_region
      %s16 = ssub.s32 2048, 2048
      %17 = vsyncadd [#allocation3], %s16
      %s18 = sshll.u32 [#allocation2], 4
      %s19 = int_to_ptr.vmem [resolvable:$true] %s18
      %24 = dma.hbm_to_vmem [thread:$0]  %s1, 2048, %s19, [#allocation3], 128, 128, 8
    $region9: #{tpu_custom_call.1} parent=1 // pred_fallthru
      _
    // Predicated region
    $region10: #{tpu_custom_call.1} parent=1 // pred_check
      _
    $region11: #{tpu_custom_call.1} parent=1 // pred_check_branch
      %26 = sbr.rel (0) target = $region13
    $region12: #{tpu_custom_call.1} parent=1 // pred_region
      _
    $region13: #{tpu_custom_call.1} parent=1 // pred_fallthru
      _
    // Predicated region
    $region14: #{tpu_custom_call.1} parent=1 // pred_check
      _
    $region15: #{tpu_custom_call.1} parent=1 // pred_check_branch
      %28 = sbr.rel (0) target = $region17
    $region16: #{tpu_custom_call.1} parent=1 // pred_region
      _
    $region17: #{tpu_custom_call.1} parent=1 // pred_fallthru
      _
    // Predicated region
    $region18: #{tpu_custom_call.1} parent=1 // pred_check
      _
    $region19: #{tpu_custom_call.1} parent=1 // pred_check_branch
      %30 = sbr.rel (0) target = $region21
    $region20: #{tpu_custom_call.1} parent=1 // pred_region
      %31 = dma.done [#allocation3], 2048
    $region21: #{tpu_custom_call.1} parent=1 // pred_fallthru
      _
    %v33 = vlaneseq
    %v34 = vand.u32 %v33, 127
    %v35 = vld [vmem:[%s0] sm:$0xff]
    %v36 = vld [vmem:[%s0 + $0x8] sm:$0xff]
    %v37 = vld [vmem:[%s0 + $0x10] sm:$0xff]
    %v38 = vld [vmem:[%s0 + $0x18] sm:$0xff]
    %v39 = vld [vmem:[%s0 + $0x20] sm:$0xff]
    %v40 = vld [vmem:[%s0 + $0x28] sm:$0xff]
    %v41 = vld [vmem:[%s0 + $0x30] sm:$0xff]
    %v42 = vld [vmem:[%s0 + $0x38] sm:$0xff]
    %v43 = vld [vmem:[%s0 + $0x40] sm:$0xff]
    %v44 = vld [vmem:[%s0 + $0x48] sm:$0xff]
    %v45 = vld [vmem:[%s0 + $0x50] sm:$0xff]
    %v46 = vld [vmem:[%s0 + $0x58] sm:$0xff]
    %v47 = vld [vmem:[%s0 + $0x60] sm:$0xff]
    %v48 = vld [vmem:[%s0 + $0x68] sm:$0xff]
    %v49 = vld [vmem:[%s0 + $0x70] sm:$0xff]
    %v50 = vld [vmem:[%s0 + $0x78] sm:$0xff]
    %v51 = vld [vmem:[%s0 + $0x80] sm:$0xff]
    %v52 = vld [vmem:[%s0 + $0x88] sm:$0xff]
    %v53 = vld [vmem:[%s0 + $0x90] sm:$0xff]
    %v54 = vld [vmem:[%s0 + $0x98] sm:$0xff]
    %v55 = vld [vmem:[%s0 + $0xa0] sm:$0xff]
    %v56 = vld [vmem:[%s0 + $0xa8] sm:$0xff]
    %v57 = vld [vmem:[%s0 + $0xb0] sm:$0xff]
    %v58 = vld [vmem:[%s0 + $0xb8] sm:$0xff]
    %v59 = vld [vmem:[%s0 + $0xc0] sm:$0xff]
    %v60 = vld [vmem:[%s0 + $0xc8] sm:$0xff]
    %v61 = vld [vmem:[%s0 + $0xd0] sm:$0xff]
    %v62 = vld [vmem:[%s0 + $0xd8] sm:$0xff]
    %v63 = vld [vmem:[%s0 + $0xe0] sm:$0xff]
    %v64 = vld [vmem:[%s0 + $0xe8] sm:$0xff]
    %v65 = vld [vmem:[%s0 + $0xf0] sm:$0xff]
    %v66 = vld [vmem:[%s0 + $0xf8] sm:$0xff]
    %67 = vset.pattern.permute.xlu0 0
    %68 = vperm.xlu0 %67, %v35
    %v69 = vpop.permute.xlu0 %68
    %70 = vset.pattern.permute.xlu0 0
    %71 = vperm.xlu0 %70, %v36
    %v72 = vpop.permute.xlu0 %71
    %73 = vset.pattern.permute.xlu0 0
    %74 = vperm.xlu0 %73, %v37
    %v75 = vpop.permute.xlu0 %74
    %76 = vset.pattern.permute.xlu0 0
    %77 = vperm.xlu0 %76, %v38
    %v78 = vpop.permute.xlu0 %77
    %79 = vset.pattern.permute.xlu0 0
    %80 = vperm.xlu0 %79, %v39
    %v81 = vpop.permute.xlu0 %80
    %82 = vset.pattern.permute.xlu0 0
    %83 = vperm.xlu0 %82, %v40
    %v84 = vpop.permute.xlu0 %83
    %85 = vset.pattern.permute.xlu0 0
    %86 = vperm.xlu0 %85, %v41
    %v87 = vpop.permute.xlu0 %86
    %88 = vset.pattern.permute.xlu0 0
    %89 = vperm.xlu0 %88, %v42
    %v90 = vpop.permute.xlu0 %89
    %91 = vset.pattern.permute.xlu0 0
    %92 = vperm.xlu0 %91, %v43
    %v93 = vpop.permute.xlu0 %92
    %94 = vset.pattern.permute.xlu0 0
    %95 = vperm.xlu0 %94, %v44
    %v96 = vpop.permute.xlu0 %95
    %97 = vset.pattern.permute.xlu0 0
    %98 = vperm.xlu0 %97, %v45
    %v99 = vpop.permute.xlu0 %98
    %100 = vset.pattern.permute.xlu0 0
    %101 = vperm.xlu0 %100, %v46
    %v102 = vpop.permute.xlu0 %101
    %103 = vset.pattern.permute.xlu0 0
    %104 = vperm.xlu0 %103, %v47
    %v105 = vpop.permute.xlu0 %104
    %106 = vset.pattern.permute.xlu0 0
    %107 = vperm.xlu0 %106, %v48
    %v108 = vpop.permute.xlu0 %107
    %109 = vset.pattern.permute.xlu0 0
    %110 = vperm.xlu0 %109, %v49
    %v111 = vpop.permute.xlu0 %110
    %112 = vset.pattern.permute.xlu0 0
    %113 = vperm.xlu0 %112, %v50
    %v114 = vpop.permute.xlu0 %113
    %115 = vset.pattern.permute.xlu0 0
    %116 = vperm.xlu0 %115, %v51
    %v117 = vpop.permute.xlu0 %116
    %118 = vset.pattern.permute.xlu0 0
    %119 = vperm.xlu0 %118, %v52
    %v120 = vpop.permute.xlu0 %119
    %121 = vset.pattern.permute.xlu0 0
    %122 = vperm.xlu0 %121, %v53
    %v123 = vpop.permute.xlu0 %122
    %124 = vset.pattern.permute.xlu0 0
    %125 = vperm.xlu0 %124, %v54
    %v126 = vpop.permute.xlu0 %125
    %127 = vset.pattern.permute.xlu0 0
    %128 = vperm.xlu0 %127, %v55
    %v129 = vpop.permute.xlu0 %128
    %130 = vset.pattern.permute.xlu0 0
    %131 = vperm.xlu0 %130, %v56
    %v132 = vpop.permute.xlu0 %131
    %133 = vset.pattern.permute.xlu0 0
    %134 = vperm.xlu0 %133, %v57
    %v135 = vpop.permute.xlu0 %134
    %136 = vset.pattern.permute.xlu0 0
    %137 = vperm.xlu0 %136, %v58
    %v138 = vpop.permute.xlu0 %137
    %139 = vset.pattern.permute.xlu0 0
    %140 = vperm.xlu0 %139, %v59
    %v141 = vpop.permute.xlu0 %140
    %142 = vset.pattern.permute.xlu0 0
    %143 = vperm.xlu0 %142, %v60
    %v144 = vpop.permute.xlu0 %143
    %145 = vset.pattern.permute.xlu0 0
    %146 = vperm.xlu0 %145, %v61
    %v147 = vpop.permute.xlu0 %146
    %148 = vset.pattern.permute.xlu0 0
    %149 = vperm.xlu0 %148, %v62
    %v150 = vpop.permute.xlu0 %149
    %151 = vset.pattern.permute.xlu0 0
    %152 = vperm.xlu0 %151, %v63
    %v153 = vpop.permute.xlu0 %152
    %154 = vset.pattern.permute.xlu0 0
    %155 = vperm.xlu0 %154, %v64
    %v156 = vpop.permute.xlu0 %155
    %157 = vset.pattern.permute.xlu0 0
    %158 = vperm.xlu0 %157, %v65
    %v159 = vpop.permute.xlu0 %158
    %160 = vset.pattern.permute.xlu0 0
    %161 = vperm.xlu0 %160, %v66
    %v162 = vpop.permute.xlu0 %161
    %vm163 = vcmp.eq.s32.totalorder %v34, %v69
    %vm164 = vcmp.eq.s32.totalorder %v34, %v72
    %vm165 = vcmp.eq.s32.totalorder %v34, %v75
    %vm166 = vcmp.eq.s32.totalorder %v34, %v78
    %vm167 = vcmp.eq.s32.totalorder %v34, %v81
    %vm168 = vcmp.eq.s32.totalorder %v34, %v84
    %vm169 = vcmp.eq.s32.totalorder %v34, %v87
    %vm170 = vcmp.eq.s32.totalorder %v34, %v90
    %vm171 = vcmp.eq.s32.totalorder %v34, %v93
    %vm172 = vcmp.eq.s32.totalorder %v34, %v96
    %vm173 = vcmp.eq.s32.totalorder %v34, %v99
    %vm174 = vcmp.eq.s32.totalorder %v34, %v102
    %vm175 = vcmp.eq.s32.totalorder %v34, %v105
    %vm176 = vcmp.eq.s32.totalorder %v34, %v108
    %vm177 = vcmp.eq.s32.totalorder %v34, %v111
    %vm178 = vcmp.eq.s32.totalorder %v34, %v114
    %vm179 = vcmp.eq.s32.totalorder %v34, %v117
    %vm180 = vcmp.eq.s32.totalorder %v34, %v120
    %vm181 = vcmp.eq.s32.totalorder %v34, %v123
    %vm182 = vcmp.eq.s32.totalorder %v34, %v126
    %vm183 = vcmp.eq.s32.totalorder %v34, %v129
    %vm184 = vcmp.eq.s32.totalorder %v34, %v132
    %vm185 = vcmp.eq.s32.totalorder %v34, %v135
    %vm186 = vcmp.eq.s32.totalorder %v34, %v138
    %vm187 = vcmp.eq.s32.totalorder %v34, %v141
    %vm188 = vcmp.eq.s32.totalorder %v34, %v144
    %vm189 = vcmp.eq.s32.totalorder %v34, %v147
    %vm190 = vcmp.eq.s32.totalorder %v34, %v150
    %vm191 = vcmp.eq.s32.totalorder %v34, %v153
    %vm192 = vcmp.eq.s32.totalorder %v34, %v156
    %vm193 = vcmp.eq.s32.totalorder %v34, %v159
    %vm194 = vcmp.eq.s32.totalorder %v34, %v162
    %v195 = vsel %vm163, 1, 0
    %v196 = vsel %vm164, 1, 0
    %v197 = vsel %vm165, 1, 0
    %v198 = vsel %vm166, 1, 0
    %v199 = vsel %vm167, 1, 0
    %v200 = vsel %vm168, 1, 0
    %v201 = vsel %vm169, 1, 0
    %v202 = vsel %vm170, 1, 0
    %v203 = vsel %vm171, 1, 0
    %v204 = vsel %vm172, 1, 0
    %v205 = vsel %vm173, 1, 0
    %v206 = vsel %vm174, 1, 0
    %v207 = vsel %vm175, 1, 0
    %v208 = vsel %vm176, 1, 0
    %v209 = vsel %vm177, 1, 0
    %v210 = vsel %vm178, 1, 0
    %v211 = vsel %vm179, 1, 0
    %v212 = vsel %vm180, 1, 0
    %v213 = vsel %vm181, 1, 0
    %v214 = vsel %vm182, 1, 0
    %v215 = vsel %vm183, 1, 0
    %v216 = vsel %vm184, 1, 0
    %v217 = vsel %vm185, 1, 0
    %v218 = vsel %vm186, 1, 0
    %v219 = vsel %vm187, 1, 0
    %v220 = vsel %vm188, 1, 0
    %v221 = vsel %vm189, 1, 0
    %v222 = vsel %vm190, 1, 0
    %v223 = vsel %vm191, 1, 0
    %v224 = vsel %vm192, 1, 0
    %v225 = vsel %vm193, 1, 0
    %v226 = vsel %vm194, 1, 0
    %v227 = vcvt.s32.f32 %v195
    %v228 = vcvt.s32.f32 %v196
    %v229 = vcvt.s32.f32 %v197
    %v230 = vcvt.s32.f32 %v198
    %v231 = vcvt.s32.f32 %v199
    %v232 = vcvt.s32.f32 %v200
    %v233 = vcvt.s32.f32 %v201
    %v234 = vcvt.s32.f32 %v202
    %v235 = vcvt.s32.f32 %v203
    %v236 = vcvt.s32.f32 %v204
    %v237 = vcvt.s32.f32 %v205
    %v238 = vcvt.s32.f32 %v206
    %v239 = vcvt.s32.f32 %v207
    %v240 = vcvt.s32.f32 %v208
    %v241 = vcvt.s32.f32 %v209
    %v242 = vcvt.s32.f32 %v210
    %v243 = vcvt.s32.f32 %v211
    %v244 = vcvt.s32.f32 %v212
    %v245 = vcvt.s32.f32 %v213
    %v246 = vcvt.s32.f32 %v214
    %v247 = vcvt.s32.f32 %v215
    %v248 = vcvt.s32.f32 %v216
    %v249 = vcvt.s32.f32 %v217
    %v250 = vcvt.s32.f32 %v218
    %v251 = vcvt.s32.f32 %v219
    %v252 = vcvt.s32.f32 %v220
    %v253 = vcvt.s32.f32 %v221
    %v254 = vcvt.s32.f32 %v222
    %v255 = vcvt.s32.f32 %v223
    %v256 = vcvt.s32.f32 %v224
    %v257 = vcvt.s32.f32 %v225
    %v258 = vcvt.s32.f32 %v226
    %v259 = vadd.f32 %v227, 0.0
    %v260 = vadd.f32 %v228, 0.0
    %v261 = vadd.f32 %v229, 0.0
    %v262 = vadd.f32 %v230, 0.0
    %v263 = vadd.f32 %v231, 0.0
    %v264 = vadd.f32 %v232, 0.0
    %v265 = vadd.f32 %v233, 0.0
    %v266 = vadd.f32 %v234, 0.0
    %v267 = vadd.f32 %v235, 0.0
    %v268 = vadd.f32 %v236, 0.0
    %v269 = vadd.f32 %v237, 0.0
    %v270 = vadd.f32 %v238, 0.0
    %v271 = vadd.f32 %v239, 0.0
    %v272 = vadd.f32 %v240, 0.0
    %v273 = vadd.f32 %v241, 0.0
    %v274 = vadd.f32 %v242, 0.0
    %v275 = vadd.f32 %v243, 0.0
    %v276 = vadd.f32 %v244, 0.0
    %v277 = vadd.f32 %v245, 0.0
    %v278 = vadd.f32 %v246, 0.0
    %v279 = vadd.f32 %v247, 0.0
    %v280 = vadd.f32 %v248, 0.0
    %v281 = vadd.f32 %v249, 0.0
    %v282 = vadd.f32 %v250, 0.0
    %v283 = vadd.f32 %v251, 0.0
    %v284 = vadd.f32 %v252, 0.0
    %v285 = vadd.f32 %v253, 0.0
    %v286 = vadd.f32 %v254, 0.0
    %v287 = vadd.f32 %v255, 0.0
    %v288 = vadd.f32 %v256, 0.0
    %v289 = vadd.f32 %v257, 0.0
    %v290 = vadd.f32 %v258, 0.0
    %v291 = vadd.s32 %v35, 10
    %v292 = vadd.s32 %v36, 10
    %v293 = vadd.s32 %v37, 10
    %v294 = vadd.s32 %v38, 10
    %v295 = vadd.s32 %v39, 10
    %v296 = vadd.s32 %v40, 10
    %v297 = vadd.s32 %v41, 10
    %v298 = vadd.s32 %v42, 10
    %v299 = vadd.s32 %v43, 10
    %v300 = vadd.s32 %v44, 10
    %v301 = vadd.s32 %v45, 10
    %v302 = vadd.s32 %v46, 10
    %v303 = vadd.s32 %v47, 10
    %v304 = vadd.s32 %v48, 10
    %v305 = vadd.s32 %v49, 10
    %v306 = vadd.s32 %v50, 10
    %v307 = vadd.s32 %v51, 10
    %v308 = vadd.s32 %v52, 10
    %v309 = vadd.s32 %v53, 10
    %v310 = vadd.s32 %v54, 10
    %v311 = vadd.s32 %v55, 10
    %v312 = vadd.s32 %v56, 10
    %v313 = vadd.s32 %v57, 10
    %v314 = vadd.s32 %v58, 10
    %v315 = vadd.s32 %v59, 10
    %v316 = vadd.s32 %v60, 10
    %v317 = vadd.s32 %v61, 10
    %v318 = vadd.s32 %v62, 10
    %v319 = vadd.s32 %v63, 10
    %v320 = vadd.s32 %v64, 10
    %v321 = vadd.s32 %v65, 10
    %v322 = vadd.s32 %v66, 10
    %323 = vset.pattern.permute.xlu0 1
    %324 = vperm.xlu0 %323, %v291
    %v325 = vpop.permute.xlu0 %324
    %326 = vset.pattern.permute.xlu0 1
    %327 = vperm.xlu0 %326, %v292
    %v328 = vpop.permute.xlu0 %327
    %329 = vset.pattern.permute.xlu0 1
    %330 = vperm.xlu0 %329, %v293
    %v331 = vpop.permute.xlu0 %330
    %332 = vset.pattern.permute.xlu0 1
    %333 = vperm.xlu0 %332, %v294
    %v334 = vpop.permute.xlu0 %333
    %335 = vset.pattern.permute.xlu0 1
    %336 = vperm.xlu0 %335, %v295
    %v337 = vpop.permute.xlu0 %336
    %338 = vset.pattern.permute.xlu0 1
    %339 = vperm.xlu0 %338, %v296
    %v340 = vpop.permute.xlu0 %339
    %341 = vset.pattern.permute.xlu0 1
    %342 = vperm.xlu0 %341, %v297
    %v343 = vpop.permute.xlu0 %342
    %344 = vset.pattern.permute.xlu0 1
    %345 = vperm.xlu0 %344, %v298
    %v346 = vpop.permute.xlu0 %345
    %347 = vset.pattern.permute.xlu0 1
    %348 = vperm.xlu0 %347, %v299
    %v349 = vpop.permute.xlu0 %348
    %350 = vset.pattern.permute.xlu0 1
    %351 = vperm.xlu0 %350, %v300
    %v352 = vpop.permute.xlu0 %351
    %353 = vset.pattern.permute.xlu0 1
    %354 = vperm.xlu0 %353, %v301
    %v355 = vpop.permute.xlu0 %354
    %356 = vset.pattern.permute.xlu0 1
    %357 = vperm.xlu0 %356, %v302
    %v358 = vpop.permute.xlu0 %357
    %359 = vset.pattern.permute.xlu0 1
    %360 = vperm.xlu0 %359, %v303
    %v361 = vpop.permute.xlu0 %360
    %362 = vset.pattern.permute.xlu0 1
    %363 = vperm.xlu0 %362, %v304
    %v364 = vpop.permute.xlu0 %363
    %365 = vset.pattern.permute.xlu0 1
    %366 = vperm.xlu0 %365, %v305
    %v367 = vpop.permute.xlu0 %366
    %368 = vset.pattern.permute.xlu0 1
    %369 = vperm.xlu0 %368, %v306
    %v370 = vpop.permute.xlu0 %369
    %371 = vset.pattern.permute.xlu0 1
    %372 = vperm.xlu0 %371, %v307
    %v373 = vpop.permute.xlu0 %372
    %374 = vset.pattern.permute.xlu0 1
    %375 = vperm.xlu0 %374, %v308
    %v376 = vpop.permute.xlu0 %375
    %377 = vset.pattern.permute.xlu0 1
    %378 = vperm.xlu0 %377, %v309
    %v379 = vpop.permute.xlu0 %378
    %380 = vset.pattern.permute.xlu0 1
    %381 = vperm.xlu0 %380, %v310
    %v382 = vpop.permute.xlu0 %381
    %383 = vset.pattern.permute.xlu0 1
    %384 = vperm.xlu0 %383, %v311
    %v385 = vpop.permute.xlu0 %384
    %386 = vset.pattern.permute.xlu0 1
    %387 = vperm.xlu0 %386, %v312
    %v388 = vpop.permute.xlu0 %387
    %389 = vset.pattern.permute.xlu0 1
    %390 = vperm.xlu0 %389, %v313
    %v391 = vpop.permute.xlu0 %390
    %392 = vset.pattern.permute.xlu0 1
    %393 = vperm.xlu0 %392, %v314
    %v394 = vpop.permute.xlu0 %393
    %395 = vset.pattern.permute.xlu0 1
    %396 = vperm.xlu0 %395, %v315
    %v397 = vpop.permute.xlu0 %396
    %398 = vset.pattern.permute.xlu0 1
    %399 = vperm.xlu0 %398, %v316
    %v400 = vpop.permute.xlu0 %399
    %401 = vset.pattern.permute.xlu0 1
    %402 = vperm.xlu0 %401, %v317
    %v403 = vpop.permute.xlu0 %402
    %404 = vset.pattern.permute.xlu0 1
    %405 = vperm.xlu0 %404, %v318
    %v406 = vpop.permute.xlu0 %405
    %407 = vset.pattern.permute.xlu0 1
    %408 = vperm.xlu0 %407, %v319
    %v409 = vpop.permute.xlu0 %408
    %410 = vset.pattern.permute.xlu0 1
    %411 = vperm.xlu0 %410, %v320
    %v412 = vpop.permute.xlu0 %411
    %413 = vset.pattern.permute.xlu0 1
    %414 = vperm.xlu0 %413, %v321
    %v415 = vpop.permute.xlu0 %414
    %416 = vset.pattern.permute.xlu0 1
    %417 = vperm.xlu0 %416, %v322
    %v418 = vpop.permute.xlu0 %417
    %vm419 = vcmp.eq.s32.totalorder %v34, %v325
    %vm420 = vcmp.eq.s32.totalorder %v34, %v328
    %vm421 = vcmp.eq.s32.totalorder %v34, %v331
    %vm422 = vcmp.eq.s32.totalorder %v34, %v334
    %vm423 = vcmp.eq.s32.totalorder %v34, %v337
    %vm424 = vcmp.eq.s32.totalorder %v34, %v340
    %vm425 = vcmp.eq.s32.totalorder %v34, %v343
    %vm426 = vcmp.eq.s32.totalorder %v34, %v346
    %vm427 = vcmp.eq.s32.totalorder %v34, %v349
    %vm428 = vcmp.eq.s32.totalorder %v34, %v352
    %vm429 = vcmp.eq.s32.totalorder %v34, %v355
    %vm430 = vcmp.eq.s32.totalorder %v34, %v358
    %vm431 = vcmp.eq.s32.totalorder %v34, %v361
    %vm432 = vcmp.eq.s32.totalorder %v34, %v364
    %vm433 = vcmp.eq.s32.totalorder %v34, %v367
    %vm434 = vcmp.eq.s32.totalorder %v34, %v370
    %vm435 = vcmp.eq.s32.totalorder %v34, %v373
    %vm436 = vcmp.eq.s32.totalorder %v34, %v376
    %vm437 = vcmp.eq.s32.totalorder %v34, %v379
    %vm438 = vcmp.eq.s32.totalorder %v34, %v382
    %vm439 = vcmp.eq.s32.totalorder %v34, %v385
    %vm440 = vcmp.eq.s32.totalorder %v34, %v388
    %vm441 = vcmp.eq.s32.totalorder %v34, %v391
    %vm442 = vcmp.eq.s32.totalorder %v34, %v394
    %vm443 = vcmp.eq.s32.totalorder %v34, %v397
    %vm444 = vcmp.eq.s32.totalorder %v34, %v400
    %vm445 = vcmp.eq.s32.totalorder %v34, %v403
    %vm446 = vcmp.eq.s32.totalorder %v34, %v406
    %vm447 = vcmp.eq.s32.totalorder %v34, %v409
    %vm448 = vcmp.eq.s32.totalorder %v34, %v412
    %vm449 = vcmp.eq.s32.totalorder %v34, %v415
    %vm450 = vcmp.eq.s32.totalorder %v34, %v418
    %v451 = vsel %vm419, 1, 0
    %v452 = vsel %vm420, 1, 0
    %v453 = vsel %vm421, 1, 0
    %v454 = vsel %vm422, 1, 0
    %v455 = vsel %vm423, 1, 0
    %v456 = vsel %vm424, 1, 0
    %v457 = vsel %vm425, 1, 0
    %v458 = vsel %vm426, 1, 0
    %v459 = vsel %vm427, 1, 0
    %v460 = vsel %vm428, 1, 0
    %v461 = vsel %vm429, 1, 0
    %v462 = vsel %vm430, 1, 0
    %v463 = vsel %vm431, 1, 0
    %v464 = vsel %vm432, 1, 0
    %v465 = vsel %vm433, 1, 0
    %v466 = vsel %vm434, 1, 0
    %v467 = vsel %vm435, 1, 0
    %v468 = vsel %vm436, 1, 0
    %v469 = vsel %vm437, 1, 0
    %v470 = vsel %vm438, 1, 0
    %v471 = vsel %vm439, 1, 0
    %v472 = vsel %vm440, 1, 0
    %v473 = vsel %vm441, 1, 0
    %v474 = vsel %vm442, 1, 0
    %v475 = vsel %vm443, 1, 0
    %v476 = vsel %vm444, 1, 0
    %v477 = vsel %vm445, 1, 0
    %v478 = vsel %vm446, 1, 0
    %v479 = vsel %vm447, 1, 0
    %v480 = vsel %vm448, 1, 0
    %v481 = vsel %vm449, 1, 0
    %v482 = vsel %vm450, 1, 0
    %v483 = vcvt.s32.f32 %v451
    %v484 = vcvt.s32.f32 %v452
    %v485 = vcvt.s32.f32 %v453
    %v486 = vcvt.s32.f32 %v454
    %v487 = vcvt.s32.f32 %v455
    %v488 = vcvt.s32.f32 %v456
    %v489 = vcvt.s32.f32 %v457
    %v490 = vcvt.s32.f32 %v458
    %v491 = vcvt.s32.f32 %v459
    %v492 = vcvt.s32.f32 %v460
    %v493 = vcvt.s32.f32 %v461
    %v494 = vcvt.s32.f32 %v462
    %v495 = vcvt.s32.f32 %v463
    %v496 = vcvt.s32.f32 %v464
    %v497 = vcvt.s32.f32 %v465
    %v498 = vcvt.s32.f32 %v466
    %v499 = vcvt.s32.f32 %v467
    %v500 = vcvt.s32.f32 %v468
    %v501 = vcvt.s32.f32 %v469
    %v502 = vcvt.s32.f32 %v470
    %v503 = vcvt.s32.f32 %v471
    %v504 = vcvt.s32.f32 %v472
    %v505 = vcvt.s32.f32 %v473
    %v506 = vcvt.s32.f32 %v474
    %v507 = vcvt.s32.f32 %v475
    %v508 = vcvt.s32.f32 %v476
    %v509 = vcvt.s32.f32 %v477
    %v510 = vcvt.s32.f32 %v478
    %v511 = vcvt.s32.f32 %v479
    %v512 = vcvt.s32.f32 %v480
    %v513 = vcvt.s32.f32 %v481
    %v514 = vcvt.s32.f32 %v482
    %v515 = vadd.f32 %v259, %v483
    %v516 = vadd.f32 %v260, %v484
    %v517 = vadd.f32 %v261, %v485
    %v518 = vadd.f32 %v262, %v486
    %v519 = vadd.f32 %v263, %v487
    %v520 = vadd.f32 %v264, %v488
    %v521 = vadd.f32 %v265, %v489
    %v522 = vadd.f32 %v266, %v490
    %v523 = vadd.f32 %v267, %v491
    %v524 = vadd.f32 %v268, %v492
    %v525 = vadd.f32 %v269, %v493
    %v526 = vadd.f32 %v270, %v494
    %v527 = vadd.f32 %v271, %v495
    %v528 = vadd.f32 %v272, %v496
    %v529 = vadd.f32 %v273, %v497
    %v530 = vadd.f32 %v274, %v498
    %v531 = vadd.f32 %v275, %v499
    %v532 = vadd.f32 %v276, %v500
    %v533 = vadd.f32 %v277, %v501
    %v534 = vadd.f32 %v278, %v502
    %v535 = vadd.f32 %v279, %v503
    %v536 = vadd.f32 %v280, %v504
    %v537 = vadd.f32 %v281, %v505
    %v538 = vadd.f32 %v282, %v506
    %v539 = vadd.f32 %v283, %v507
    %v540 = vadd.f32 %v284, %v508
    %v541 = vadd.f32 %v285, %v509
    %v542 = vadd.f32 %v286, %v510
    %v543 = vadd.f32 %v287, %v511
    %v544 = vadd.f32 %v288, %v512
    %v545 = vadd.f32 %v289, %v513
    %v546 = vadd.f32 %v290, %v514
    %v547 = vadd.s32 %v35, 17
    %v548 = vadd.s32 %v36, 17
    %v549 = vadd.s32 %v37, 17
    %v550 = vadd.s32 %v38, 17
    %v551 = vadd.s32 %v39, 17
    %v552 = vadd.s32 %v40, 17
    %v553 = vadd.s32 %v41, 17
    %v554 = vadd.s32 %v42, 17
    %v555 = vadd.s32 %v43, 17
    %v556 = vadd.s32 %v44, 17
    %v557 = vadd.s32 %v45, 17
    %v558 = vadd.s32 %v46, 17
    %v559 = vadd.s32 %v47, 17
    %v560 = vadd.s32 %v48, 17
    %v561 = vadd.s32 %v49, 17
    %v562 = vadd.s32 %v50, 17
    %v563 = vadd.s32 %v51, 17
    %v564 = vadd.s32 %v52, 17
    %v565 = vadd.s32 %v53, 17
    %v566 = vadd.s32 %v54, 17
    %v567 = vadd.s32 %v55, 17
    %v568 = vadd.s32 %v56, 17
    %v569 = vadd.s32 %v57, 17
    %v570 = vadd.s32 %v58, 17
    %v571 = vadd.s32 %v59, 17
    %v572 = vadd.s32 %v60, 17
    %v573 = vadd.s32 %v61, 17
    %v574 = vadd.s32 %v62, 17
    %v575 = vadd.s32 %v63, 17
    %v576 = vadd.s32 %v64, 17
    %v577 = vadd.s32 %v65, 17
    %v578 = vadd.s32 %v66, 17
    %579 = vset.pattern.permute.xlu0 2
    %580 = vperm.xlu0 %579, %v547
    %v581 = vpop.permute.xlu0 %580
    %582 = vset.pattern.permute.xlu0 2
    %583 = vperm.xlu0 %582, %v548
    %v584 = vpop.permute.xlu0 %583
    %585 = vset.pattern.permute.xlu0 2
    %586 = vperm.xlu0 %585, %v549
    %v587 = vpop.permute.xlu0 %586
    %588 = vset.pattern.permute.xlu0 2
    %589 = vperm.xlu0 %588, %v550
    %v590 = vpop.permute.xlu0 %589
    %591 = vset.pattern.permute.xlu0 2
    %592 = vperm.xlu0 %591, %v551
    %v593 = vpop.permute.xlu0 %592
    %594 = vset.pattern.permute.xlu0 2
    %595 = vperm.xlu0 %594, %v552
    %v596 = vpop.permute.xlu0 %595
    %597 = vset.pattern.permute.xlu0 2
    %598 = vperm.xlu0 %597, %v553
    %v599 = vpop.permute.xlu0 %598
    %600 = vset.pattern.permute.xlu0 2
    %601 = vperm.xlu0 %600, %v554
    %v602 = vpop.permute.xlu0 %601
    %603 = vset.pattern.permute.xlu0 2
    %604 = vperm.xlu0 %603, %v555
    %v605 = vpop.permute.xlu0 %604
    %606 = vset.pattern.permute.xlu0 2
    %607 = vperm.xlu0 %606, %v556
    %v608 = vpop.permute.xlu0 %607
    %609 = vset.pattern.permute.xlu0 2
    %610 = vperm.xlu0 %609, %v557
    %v611 = vpop.permute.xlu0 %610
    %612 = vset.pattern.permute.xlu0 2
    %613 = vperm.xlu0 %612, %v558
    %v614 = vpop.permute.xlu0 %613
    %615 = vset.pattern.permute.xlu0 2
    %616 = vperm.xlu0 %615, %v559
    %v617 = vpop.permute.xlu0 %616
    %618 = vset.pattern.permute.xlu0 2
    %619 = vperm.xlu0 %618, %v560
    %v620 = vpop.permute.xlu0 %619
    %621 = vset.pattern.permute.xlu0 2
    %622 = vperm.xlu0 %621, %v561
    %v623 = vpop.permute.xlu0 %622
    %624 = vset.pattern.permute.xlu0 2
    %625 = vperm.xlu0 %624, %v562
    %v626 = vpop.permute.xlu0 %625
    %627 = vset.pattern.permute.xlu0 2
    %628 = vperm.xlu0 %627, %v563
    %v629 = vpop.permute.xlu0 %628
    %630 = vset.pattern.permute.xlu0 2
    %631 = vperm.xlu0 %630, %v564
    %v632 = vpop.permute.xlu0 %631
    %633 = vset.pattern.permute.xlu0 2
    %634 = vperm.xlu0 %633, %v565
    %v635 = vpop.permute.xlu0 %634
    %636 = vset.pattern.permute.xlu0 2
    %637 = vperm.xlu0 %636, %v566
    %v638 = vpop.permute.xlu0 %637
    %639 = vset.pattern.permute.xlu0 2
    %640 = vperm.xlu0 %639, %v567
    %v641 = vpop.permute.xlu0 %640
    %642 = vset.pattern.permute.xlu0 2
    %643 = vperm.xlu0 %642, %v568
    %v644 = vpop.permute.xlu0 %643
    %645 = vset.pattern.permute.xlu0 2
    %646 = vperm.xlu0 %645, %v569
    %v647 = vpop.permute.xlu0 %646
    %648 = vset.pattern.permute.xlu0 2
    %649 = vperm.xlu0 %648, %v570
    %v650 = vpop.permute.xlu0 %649
    %651 = vset.pattern.permute.xlu0 2
    %652 = vperm.xlu0 %651, %v571
    %v653 = vpop.permute.xlu0 %652
    %654 = vset.pattern.permute.xlu0 2
    %655 = vperm.xlu0 %654, %v572
    %v656 = vpop.permute.xlu0 %655
    %657 = vset.pattern.permute.xlu0 2
    %658 = vperm.xlu0 %657, %v573
    %v659 = vpop.permute.xlu0 %658
    %660 = vset.pattern.permute.xlu0 2
    %661 = vperm.xlu0 %660, %v574
    %v662 = vpop.permute.xlu0 %661
    %663 = vset.pattern.permute.xlu0 2
    %664 = vperm.xlu0 %663, %v575
    %v665 = vpop.permute.xlu0 %664
    %666 = vset.pattern.permute.xlu0 2
    %667 = vperm.xlu0 %666, %v576
    %v668 = vpop.permute.xlu0 %667
    %669 = vset.pattern.permute.xlu0 2
    %670 = vperm.xlu0 %669, %v577
    %v671 = vpop.permute.xlu0 %670
    %672 = vset.pattern.permute.xlu0 2
    %673 = vperm.xlu0 %672, %v578
    %v674 = vpop.permute.xlu0 %673
    %vm675 = vcmp.eq.s32.totalorder %v34, %v581
    %vm676 = vcmp.eq.s32.totalorder %v34, %v584
    %vm677 = vcmp.eq.s32.totalorder %v34, %v587
    %vm678 = vcmp.eq.s32.totalorder %v34, %v590
    %vm679 = vcmp.eq.s32.totalorder %v34, %v593
    %vm680 = vcmp.eq.s32.totalorder %v34, %v596
    %vm681 = vcmp.eq.s32.totalorder %v34, %v599
    %vm682 = vcmp.eq.s32.totalorder %v34, %v602
    %vm683 = vcmp.eq.s32.totalorder %v34, %v605
    %vm684 = vcmp.eq.s32.totalorder %v34, %v608
    %vm685 = vcmp.eq.s32.totalorder %v34, %v611
    %vm686 = vcmp.eq.s32.totalorder %v34, %v614
    %vm687 = vcmp.eq.s32.totalorder %v34, %v617
    %vm688 = vcmp.eq.s32.totalorder %v34, %v620
    %vm689 = vcmp.eq.s32.totalorder %v34, %v623
    %vm690 = vcmp.eq.s32.totalorder %v34, %v626
    %vm691 = vcmp.eq.s32.totalorder %v34, %v629
    %vm692 = vcmp.eq.s32.totalorder %v34, %v632
    %vm693 = vcmp.eq.s32.totalorder %v34, %v635
    %vm694 = vcmp.eq.s32.totalorder %v34, %v638
    %vm695 = vcmp.eq.s32.totalorder %v34, %v641
    %vm696 = vcmp.eq.s32.totalorder %v34, %v644
    %vm697 = vcmp.eq.s32.totalorder %v34, %v647
    %vm698 = vcmp.eq.s32.totalorder %v34, %v650
    %vm699 = vcmp.eq.s32.totalorder %v34, %v653
    %vm700 = vcmp.eq.s32.totalorder %v34, %v656
    %vm701 = vcmp.eq.s32.totalorder %v34, %v659
    %vm702 = vcmp.eq.s32.totalorder %v34, %v662
    %vm703 = vcmp.eq.s32.totalorder %v34, %v665
    %vm704 = vcmp.eq.s32.totalorder %v34, %v668
    %vm705 = vcmp.eq.s32.totalorder %v34, %v671
    %vm706 = vcmp.eq.s32.totalorder %v34, %v674
    %v707 = vsel %vm675, 1, 0
    %v708 = vsel %vm676, 1, 0
    %v709 = vsel %vm677, 1, 0
    %v710 = vsel %vm678, 1, 0
    %v711 = vsel %vm679, 1, 0
    %v712 = vsel %vm680, 1, 0
    %v713 = vsel %vm681, 1, 0
    %v714 = vsel %vm682, 1, 0
    %v715 = vsel %vm683, 1, 0
    %v716 = vsel %vm684, 1, 0
    %v717 = vsel %vm685, 1, 0
    %v718 = vsel %vm686, 1, 0
    %v719 = vsel %vm687, 1, 0
    %v720 = vsel %vm688, 1, 0
    %v721 = vsel %vm689, 1, 0
    %v722 = vsel %vm690, 1, 0
    %v723 = vsel %vm691, 1, 0
    %v724 = vsel %vm692, 1, 0
    %v725 = vsel %vm693, 1, 0
    %v726 = vsel %vm694, 1, 0
    %v727 = vsel %vm695, 1, 0
    %v728 = vsel %vm696, 1, 0
    %v729 = vsel %vm697, 1, 0
    %v730 = vsel %vm698, 1, 0
    %v731 = vsel %vm699, 1, 0
    %v732 = vsel %vm700, 1, 0
    %v733 = vsel %vm701, 1, 0
    %v734 = vsel %vm702, 1, 0
    %v735 = vsel %vm703, 1, 0
    %v736 = vsel %vm704, 1, 0
    %v737 = vsel %vm705, 1, 0
    %v738 = vsel %vm706, 1, 0
    %v739 = vcvt.s32.f32 %v707
    %v740 = vcvt.s32.f32 %v708
    %v741 = vcvt.s32.f32 %v709
    %v742 = vcvt.s32.f32 %v710
    %v743 = vcvt.s32.f32 %v711
    %v744 = vcvt.s32.f32 %v712
    %v745 = vcvt.s32.f32 %v713
    %v746 = vcvt.s32.f32 %v714
    %v747 = vcvt.s32.f32 %v715
    %v748 = vcvt.s32.f32 %v716
    %v749 = vcvt.s32.f32 %v717
    %v750 = vcvt.s32.f32 %v718
    %v751 = vcvt.s32.f32 %v719
    %v752 = vcvt.s32.f32 %v720
    %v753 = vcvt.s32.f32 %v721
    %v754 = vcvt.s32.f32 %v722
    %v755 = vcvt.s32.f32 %v723
    %v756 = vcvt.s32.f32 %v724
    %v757 = vcvt.s32.f32 %v725
    %v758 = vcvt.s32.f32 %v726
    %v759 = vcvt.s32.f32 %v727
    %v760 = vcvt.s32.f32 %v728
    %v761 = vcvt.s32.f32 %v729
    %v762 = vcvt.s32.f32 %v730
    %v763 = vcvt.s32.f32 %v731
    %v764 = vcvt.s32.f32 %v732
    %v765 = vcvt.s32.f32 %v733
    %v766 = vcvt.s32.f32 %v734
    %v767 = vcvt.s32.f32 %v735
    %v768 = vcvt.s32.f32 %v736
    %v769 = vcvt.s32.f32 %v737
    %v770 = vcvt.s32.f32 %v738
    %v771 = vadd.f32 %v515, %v739
    %v772 = vadd.f32 %v516, %v740
    %v773 = vadd.f32 %v517, %v741
    %v774 = vadd.f32 %v518, %v742
    %v775 = vadd.f32 %v519, %v743
    %v776 = vadd.f32 %v520, %v744
    %v777 = vadd.f32 %v521, %v745
    %v778 = vadd.f32 %v522, %v746
    %v779 = vadd.f32 %v523, %v747
    %v780 = vadd.f32 %v524, %v748
    %v781 = vadd.f32 %v525, %v749
    %v782 = vadd.f32 %v526, %v750
    %v783 = vadd.f32 %v527, %v751
    %v784 = vadd.f32 %v528, %v752
    %v785 = vadd.f32 %v529, %v753
    %v786 = vadd.f32 %v530, %v754
    %v787 = vadd.f32 %v531, %v755
    %v788 = vadd.f32 %v532, %v756
    %v789 = vadd.f32 %v533, %v757
    %v790 = vadd.f32 %v534, %v758
    %v791 = vadd.f32 %v535, %v759
    %v792 = vadd.f32 %v536, %v760
    %v793 = vadd.f32 %v537, %v761
    %v794 = vadd.f32 %v538, %v762
    %v795 = vadd.f32 %v539, %v763
    %v796 = vadd.f32 %v540, %v764
    %v797 = vadd.f32 %v541, %v765
    %v798 = vadd.f32 %v542, %v766
    %v799 = vadd.f32 %v543, %v767
    %v800 = vadd.f32 %v544, %v768
    %v801 = vadd.f32 %v545, %v769
    %v802 = vadd.f32 %v546, %v770
    %v803 = vadd.s32 %v35, 29
    %v804 = vadd.s32 %v36, 29
    %v805 = vadd.s32 %v37, 29
    %v806 = vadd.s32 %v38, 29
    %v807 = vadd.s32 %v39, 29
    %v808 = vadd.s32 %v40, 29
    %v809 = vadd.s32 %v41, 29
    %v810 = vadd.s32 %v42, 29
    %v811 = vadd.s32 %v43, 29
    %v812 = vadd.s32 %v44, 29
    %v813 = vadd.s32 %v45, 29
    %v814 = vadd.s32 %v46, 29
    %v815 = vadd.s32 %v47, 29
    %v816 = vadd.s32 %v48, 29
    %v817 = vadd.s32 %v49, 29
    %v818 = vadd.s32 %v50, 29
    %v819 = vadd.s32 %v51, 29
    %v820 = vadd.s32 %v52, 29
    %v821 = vadd.s32 %v53, 29
    %v822 = vadd.s32 %v54, 29
    %v823 = vadd.s32 %v55, 29
    %v824 = vadd.s32 %v56, 29
    %v825 = vadd.s32 %v57, 29
    %v826 = vadd.s32 %v58, 29
    %v827 = vadd.s32 %v59, 29
    %v828 = vadd.s32 %v60, 29
    %v829 = vadd.s32 %v61, 29
    %v830 = vadd.s32 %v62, 29
    %v831 = vadd.s32 %v63, 29
    %v832 = vadd.s32 %v64, 29
    %v833 = vadd.s32 %v65, 29
    %v834 = vadd.s32 %v66, 29
    %835 = vset.pattern.permute.xlu0 3
    %836 = vperm.xlu0 %835, %v803
    %v837 = vpop.permute.xlu0 %836
    %838 = vset.pattern.permute.xlu0 3
    %839 = vperm.xlu0 %838, %v804
    %v840 = vpop.permute.xlu0 %839
    %841 = vset.pattern.permute.xlu0 3
    %842 = vperm.xlu0 %841, %v805
    %v843 = vpop.permute.xlu0 %842
    %844 = vset.pattern.permute.xlu0 3
    %845 = vperm.xlu0 %844, %v806
    %v846 = vpop.permute.xlu0 %845
    %847 = vset.pattern.permute.xlu0 3
    %848 = vperm.xlu0 %847, %v807
    %v849 = vpop.permute.xlu0 %848
    %850 = vset.pattern.permute.xlu0 3
    %851 = vperm.xlu0 %850, %v808
    %v852 = vpop.permute.xlu0 %851
    %853 = vset.pattern.permute.xlu0 3
    %854 = vperm.xlu0 %853, %v809
    %v855 = vpop.permute.xlu0 %854
    %856 = vset.pattern.permute.xlu0 3
    %857 = vperm.xlu0 %856, %v810
    %v858 = vpop.permute.xlu0 %857
    %859 = vset.pattern.permute.xlu0 3
    %860 = vperm.xlu0 %859, %v811
    %v861 = vpop.permute.xlu0 %860
    %862 = vset.pattern.permute.xlu0 3
    %863 = vperm.xlu0 %862, %v812
    %v864 = vpop.permute.xlu0 %863
    %865 = vset.pattern.permute.xlu0 3
    %866 = vperm.xlu0 %865, %v813
    %v867 = vpop.permute.xlu0 %866
    %868 = vset.pattern.permute.xlu0 3
    %869 = vperm.xlu0 %868, %v814
    %v870 = vpop.permute.xlu0 %869
    %871 = vset.pattern.permute.xlu0 3
    %872 = vperm.xlu0 %871, %v815
    %v873 = vpop.permute.xlu0 %872
    %874 = vset.pattern.permute.xlu0 3
    %875 = vperm.xlu0 %874, %v816
    %v876 = vpop.permute.xlu0 %875
    %877 = vset.pattern.permute.xlu0 3
    %878 = vperm.xlu0 %877, %v817
    %v879 = vpop.permute.xlu0 %878
    %880 = vset.pattern.permute.xlu0 3
    %881 = vperm.xlu0 %880, %v818
    %v882 = vpop.permute.xlu0 %881
    %883 = vset.pattern.permute.xlu0 3
    %884 = vperm.xlu0 %883, %v819
    %v885 = vpop.permute.xlu0 %884
    %886 = vset.pattern.permute.xlu0 3
    %887 = vperm.xlu0 %886, %v820
    %v888 = vpop.permute.xlu0 %887
    %889 = vset.pattern.permute.xlu0 3
    %890 = vperm.xlu0 %889, %v821
    %v891 = vpop.permute.xlu0 %890
    %892 = vset.pattern.permute.xlu0 3
    %893 = vperm.xlu0 %892, %v822
    %v894 = vpop.permute.xlu0 %893
    %895 = vset.pattern.permute.xlu0 3
    %896 = vperm.xlu0 %895, %v823
    %v897 = vpop.permute.xlu0 %896
    %898 = vset.pattern.permute.xlu0 3
    %899 = vperm.xlu0 %898, %v824
    %v900 = vpop.permute.xlu0 %899
    %901 = vset.pattern.permute.xlu0 3
    %902 = vperm.xlu0 %901, %v825
    %v903 = vpop.permute.xlu0 %902
    %904 = vset.pattern.permute.xlu0 3
    %905 = vperm.xlu0 %904, %v826
    %v906 = vpop.permute.xlu0 %905
    %907 = vset.pattern.permute.xlu0 3
    %908 = vperm.xlu0 %907, %v827
    %v909 = vpop.permute.xlu0 %908
    %910 = vset.pattern.permute.xlu0 3
    %911 = vperm.xlu0 %910, %v828
    %v912 = vpop.permute.xlu0 %911
    %913 = vset.pattern.permute.xlu0 3
    %914 = vperm.xlu0 %913, %v829
    %v915 = vpop.permute.xlu0 %914
    %916 = vset.pattern.permute.xlu0 3
    %917 = vperm.xlu0 %916, %v830
    %v918 = vpop.permute.xlu0 %917
    %919 = vset.pattern.permute.xlu0 3
    %920 = vperm.xlu0 %919, %v831
    %v921 = vpop.permute.xlu0 %920
    %922 = vset.pattern.permute.xlu0 3
    %923 = vperm.xlu0 %922, %v832
    %v924 = vpop.permute.xlu0 %923
    %925 = vset.pattern.permute.xlu0 3
    %926 = vperm.xlu0 %925, %v833
    %v927 = vpop.permute.xlu0 %926
    %928 = vset.pattern.permute.xlu0 3
    %929 = vperm.xlu0 %928, %v834
    %v930 = vpop.permute.xlu0 %929
    %vm931 = vcmp.eq.s32.totalorder %v34, %v837
    %vm932 = vcmp.eq.s32.totalorder %v34, %v840
    %vm933 = vcmp.eq.s32.totalorder %v34, %v843
    %vm934 = vcmp.eq.s32.totalorder %v34, %v846
    %vm935 = vcmp.eq.s32.totalorder %v34, %v849
    %vm936 = vcmp.eq.s32.totalorder %v34, %v852
    %vm937 = vcmp.eq.s32.totalorder %v34, %v855
    %vm938 = vcmp.eq.s32.totalorder %v34, %v858
    %vm939 = vcmp.eq.s32.totalorder %v34, %v861
    %vm940 = vcmp.eq.s32.totalorder %v34, %v864
    %vm941 = vcmp.eq.s32.totalorder %v34, %v867
    %vm942 = vcmp.eq.s32.totalorder %v34, %v870
    %vm943 = vcmp.eq.s32.totalorder %v34, %v873
    %vm944 = vcmp.eq.s32.totalorder %v34, %v876
    %vm945 = vcmp.eq.s32.totalorder %v34, %v879
    %vm946 = vcmp.eq.s32.totalorder %v34, %v882
    %vm947 = vcmp.eq.s32.totalorder %v34, %v885
    %vm948 = vcmp.eq.s32.totalorder %v34, %v888
    %vm949 = vcmp.eq.s32.totalorder %v34, %v891
    %vm950 = vcmp.eq.s32.totalorder %v34, %v894
    %vm951 = vcmp.eq.s32.totalorder %v34, %v897
    %vm952 = vcmp.eq.s32.totalorder %v34, %v900
    %vm953 = vcmp.eq.s32.totalorder %v34, %v903
    %vm954 = vcmp.eq.s32.totalorder %v34, %v906
    %vm955 = vcmp.eq.s32.totalorder %v34, %v909
    %vm956 = vcmp.eq.s32.totalorder %v34, %v912
    %vm957 = vcmp.eq.s32.totalorder %v34, %v915
    %vm958 = vcmp.eq.s32.totalorder %v34, %v918
    %vm959 = vcmp.eq.s32.totalorder %v34, %v921
    %vm960 = vcmp.eq.s32.totalorder %v34, %v924
    %vm961 = vcmp.eq.s32.totalorder %v34, %v927
    %vm962 = vcmp.eq.s32.totalorder %v34, %v930
    %v963 = vsel %vm931, 1, 0
    %v964 = vsel %vm932, 1, 0
    %v965 = vsel %vm933, 1, 0
    %v966 = vsel %vm934, 1, 0
    %v967 = vsel %vm935, 1, 0
    %v968 = vsel %vm936, 1, 0
    %v969 = vsel %vm937, 1, 0
    %v970 = vsel %vm938, 1, 0
    %v971 = vsel %vm939, 1, 0
    %v972 = vsel %vm940, 1, 0
    %v973 = vsel %vm941, 1, 0
    %v974 = vsel %vm942, 1, 0
    %v975 = vsel %vm943, 1, 0
    %v976 = vsel %vm944, 1, 0
    %v977 = vsel %vm945, 1, 0
    %v978 = vsel %vm946, 1, 0
    %v979 = vsel %vm947, 1, 0
    %v980 = vsel %vm948, 1, 0
    %v981 = vsel %vm949, 1, 0
    %v982 = vsel %vm950, 1, 0
    %v983 = vsel %vm951, 1, 0
    %v984 = vsel %vm952, 1, 0
    %v985 = vsel %vm953, 1, 0
    %v986 = vsel %vm954, 1, 0
    %v987 = vsel %vm955, 1, 0
    %v988 = vsel %vm956, 1, 0
    %v989 = vsel %vm957, 1, 0
    %v990 = vsel %vm958, 1, 0
    %v991 = vsel %vm959, 1, 0
    %v992 = vsel %vm960, 1, 0
    %v993 = vsel %vm961, 1, 0
    %v994 = vsel %vm962, 1, 0
    %v995 = vcvt.s32.f32 %v963
    %v996 = vcvt.s32.f32 %v964
    %v997 = vcvt.s32.f32 %v965
    %v998 = vcvt.s32.f32 %v966
    %v999 = vcvt.s32.f32 %v967
    %v1000 = vcvt.s32.f32 %v968
    %v1001 = vcvt.s32.f32 %v969
    %v1002 = vcvt.s32.f32 %v970
    %v1003 = vcvt.s32.f32 %v971
    %v1004 = vcvt.s32.f32 %v972
    %v1005 = vcvt.s32.f32 %v973
    %v1006 = vcvt.s32.f32 %v974
    %v1007 = vcvt.s32.f32 %v975
    %v1008 = vcvt.s32.f32 %v976
    %v1009 = vcvt.s32.f32 %v977
    %v1010 = vcvt.s32.f32 %v978
    %v1011 = vcvt.s32.f32 %v979
    %v1012 = vcvt.s32.f32 %v980
    %v1013 = vcvt.s32.f32 %v981
    %v1014 = vcvt.s32.f32 %v982
    %v1015 = vcvt.s32.f32 %v983
    %v1016 = vcvt.s32.f32 %v984
    %v1017 = vcvt.s32.f32 %v985
    %v1018 = vcvt.s32.f32 %v986
    %v1019 = vcvt.s32.f32 %v987
    %v1020 = vcvt.s32.f32 %v988
    %v1021 = vcvt.s32.f32 %v989
    %v1022 = vcvt.s32.f32 %v990
    %v1023 = vcvt.s32.f32 %v991
    %v1024 = vcvt.s32.f32 %v992
    %v1025 = vcvt.s32.f32 %v993
    %v1026 = vcvt.s32.f32 %v994
    %v1027 = vadd.f32 %v771, %v995
    %v1028 = vadd.f32 %v772, %v996
    %v1029 = vadd.f32 %v773, %v997
    %v1030 = vadd.f32 %v774, %v998
    %v1031 = vadd.f32 %v775, %v999
    %v1032 = vadd.f32 %v776, %v1000
    %v1033 = vadd.f32 %v777, %v1001
    %v1034 = vadd.f32 %v778, %v1002
    %v1035 = vadd.f32 %v779, %v1003
    %v1036 = vadd.f32 %v780, %v1004
    %v1037 = vadd.f32 %v781, %v1005
    %v1038 = vadd.f32 %v782, %v1006
    %v1039 = vadd.f32 %v783, %v1007
    %v1040 = vadd.f32 %v784, %v1008
    %v1041 = vadd.f32 %v785, %v1009
    %v1042 = vadd.f32 %v786, %v1010
    %v1043 = vadd.f32 %v787, %v1011
    %v1044 = vadd.f32 %v788, %v1012
    %v1045 = vadd.f32 %v789, %v1013
    %v1046 = vadd.f32 %v790, %v1014
    %v1047 = vadd.f32 %v791, %v1015
    %v1048 = vadd.f32 %v792, %v1016
    %v1049 = vadd.f32 %v793, %v1017
    %v1050 = vadd.f32 %v794, %v1018
    %v1051 = vadd.f32 %v795, %v1019
    %v1052 = vadd.f32 %v796, %v1020
    %v1053 = vadd.f32 %v797, %v1021
    %v1054 = vadd.f32 %v798, %v1022
    %v1055 = vadd.f32 %v799, %v1023
    %v1056 = vadd.f32 %v800, %v1024
    %v1057 = vadd.f32 %v801, %v1025
    %v1058 = vadd.f32 %v802, %v1026
    %v1059 = vld [vmem:[#allocation2] sm:$0xff]
    %v1060 = vld [vmem:[#allocation2 + $0x8] sm:$0xff]
    %v1061 = vld [vmem:[#allocation2 + $0x10] sm:$0xff]
    %v1062 = vld [vmem:[#allocation2 + $0x18] sm:$0xff]
    %v1063 = vld [vmem:[#allocation2 + $0x20] sm:$0xff]
    %v1064 = vld [vmem:[#allocation2 + $0x28] sm:$0xff]
    %v1065 = vld [vmem:[#allocation2 + $0x30] sm:$0xff]
    %v1066 = vld [vmem:[#allocation2 + $0x38] sm:$0xff]
    %v1067 = vld [vmem:[#allocation2 + $0x40] sm:$0xff]
    %v1068 = vld [vmem:[#allocation2 + $0x48] sm:$0xff]
    %v1069 = vld [vmem:[#allocation2 + $0x50] sm:$0xff]
    %v1070 = vld [vmem:[#allocation2 + $0x58] sm:$0xff]
    %v1071 = vld [vmem:[#allocation2 + $0x60] sm:$0xff]
    %v1072 = vld [vmem:[#allocation2 + $0x68] sm:$0xff]
    %v1073 = vld [vmem:[#allocation2 + $0x70] sm:$0xff]
    %v1074 = vld [vmem:[#allocation2 + $0x78] sm:$0xff]
    %1075 = vmatprep.subr.mxu0 0.0
    %1076 = vmatpush1.msra.mxu0 %v1059
    %1077 = vmatprep.subr.mxu0 0.0
    %1078 = vmatpush1.msra.mxu0 %v1060
    %1079 = vmatprep.subr.mxu0 0.0
    %1080 = vmatpush1.msra.mxu0 %v1061
    %1081 = vmatprep.subr.mxu0 0.0
    %1082 = vmatpush1.msra.mxu0 %v1062
    %1083 = vmatprep.subr.mxu0 0.0
    %1084 = vmatpush1.msra.mxu0 %v1063
    %1085 = vmatprep.subr.mxu0 0.0
    %1086 = vmatpush1.msra.mxu0 %v1064
    %1087 = vmatprep.subr.mxu0 0.0
    %1088 = vmatpush1.msra.mxu0 %v1065
    %1089 = vmatprep.subr.mxu0 0.0
    %1090 = vmatpush1.msra.mxu0 %v1066
    %1091 = vmatprep.subr.mxu0 0.0
    %1092 = vmatpush1.msra.mxu0 %v1067
    %1093 = vmatprep.subr.mxu0 0.0
    %1094 = vmatpush1.msra.mxu0 %v1068
    %1095 = vmatprep.subr.mxu0 0.0
    %1096 = vmatpush1.msra.mxu0 %v1069
    %1097 = vmatprep.subr.mxu0 0.0
    %1098 = vmatpush1.msra.mxu0 %v1070
    %1099 = vmatprep.subr.mxu0 0.0
    %1100 = vmatpush1.msra.mxu0 %v1071
    %1101 = vmatprep.subr.mxu0 0.0
    %1102 = vmatpush1.msra.mxu0 %v1072
    %1103 = vmatprep.subr.mxu0 0.0
    %1104 = vmatpush1.msra.mxu0 %v1073
    %1105 = vmatprep.subr.mxu0 0.0
    %1106 = vmatpush1.msra.mxu0 %v1074
    %1107 = vmatprep.subr.mxu0 0.0
    %1108 = vmatpush1.msra.mxu0 0.0
    %1109 = vmatprep.subr.mxu0 0.0
    %1110 = vmatpush1.msra.mxu0 0.0
    %1111 = vmatprep.subr.mxu0 0.0
    %1112 = vmatpush1.msra.mxu0 0.0
    %1113 = vmatprep.subr.mxu0 0.0
    %1114 = vmatpush1.msra.mxu0 0.0
    %1115 = vmatprep.subr.mxu0 0.0
    %1116 = vmatpush1.msra.mxu0 0.0
    %1117 = vmatprep.subr.mxu0 0.0
    %1118 = vmatpush1.msra.mxu0 0.0
    %1119 = vmatprep.subr.mxu0 0.0
    %1120 = vmatpush1.msra.mxu0 0.0
    %1121 = vmatprep.subr.mxu0 0.0
    %1122 = vmatpush1.msra.mxu0 0.0
    %1123 = vmatprep.subr.mxu0 0.0
    %1124 = vmatpush1.msra.mxu0 0.0
    %1125 = vmatprep.subr.mxu0 0.0
    %1126 = vmatpush1.msra.mxu0 0.0
    %1127 = vmatprep.subr.mxu0 0.0
    %1128 = vmatpush1.msra.mxu0 0.0
    %1129 = vmatprep.subr.mxu0 0.0
    %1130 = vmatpush1.msra.mxu0 0.0
    %1131 = vmatprep.subr.mxu0 0.0
    %1132 = vmatpush1.msra.mxu0 0.0
    %1133 = vmatprep.subr.mxu0 0.0
    %1134 = vmatpush1.msra.mxu0 0.0
    %1135 = vmatprep.subr.mxu0 0.0
    %1136 = vmatpush1.msra.mxu0 0.0
    %1137 = vmatprep.subr.mxu0 0.0
    %1138 = vmatpush1.msra.mxu0 0.0
    %1139 = vmatprep.mubr.f32.mxu0 0.0
    %1140 = vmatmul.mubr.f32.gmra.mrb[0].mxu0 %v1027
    %v1141 = vpop.f32.mrb[0].mxu0
    %v1142 = vadd.f32 0.0, %v1141
    %v1143 = vpop.f32.mrb[0].mxu0
    %1144 = vmatprep.mubr.f32.mxu0 0.0
    %1145 = vmatmul.mubr.f32.gmra.mrb[0].mxu0 %v1028
    %v1146 = vpop.f32.mrb[0].mxu0
    %v1147 = vadd.f32 0.0, %v1146
    %v1148 = vpop.f32.mrb[0].mxu0
    %1149 = vmatprep.mubr.f32.mxu0 0.0
    %1150 = vmatmul.mubr.f32.gmra.mrb[0].mxu0 %v1029
    %v1151 = vpop.f32.mrb[0].mxu0
    %v1152 = vadd.f32 0.0, %v1151
    %v1153 = vpop.f32.mrb[0].mxu0
    %1154 = vmatprep.mubr.f32.mxu0 0.0
    %1155 = vmatmul.mubr.f32.gmra.mrb[0].mxu0 %v1030
    %v1156 = vpop.f32.mrb[0].mxu0
    %v1157 = vadd.f32 0.0, %v1156
    %v1158 = vpop.f32.mrb[0].mxu0
    %1159 = vmatprep.mubr.f32.mxu0 0.0
    %1160 = vmatmul.mubr.f32.gmra.mrb[0].mxu0 %v1031
    %v1161 = vpop.f32.mrb[0].mxu0
    %v1162 = vadd.f32 0.0, %v1161
    %v1163 = vpop.f32.mrb[0].mxu0
    %1164 = vmatprep.mubr.f32.mxu0 0.0
    %1165 = vmatmul.mubr.f32.gmra.mrb[0].mxu0 %v1032
    %v1166 = vpop.f32.mrb[0].mxu0
    %v1167 = vadd.f32 0.0, %v1166
    %v1168 = vpop.f32.mrb[0].mxu0
    %1169 = vmatprep.mubr.f32.mxu0 0.0
    %1170 = vmatmul.mubr.f32.gmra.mrb[0].mxu0 %v1033
    %v1171 = vpop.f32.mrb[0].mxu0
    %v1172 = vadd.f32 0.0, %v1171
    %v1173 = vpop.f32.mrb[0].mxu0
    %1174 = vmatprep.mubr.f32.mxu0 0.0
    %1175 = vmatmul.mubr.f32.gmra.mrb[0].mxu0 %v1034
    %v1176 = vpop.f32.mrb[0].mxu0
    %v1177 = vadd.f32 0.0, %v1176
    %v1178 = vpop.f32.mrb[0].mxu0
    %1179 = vmatprep.mubr.f32.mxu0 0.0
    %1180 = vmatmul.mubr.f32.gmra.mrb[0].mxu0 %v1035
    %v1181 = vpop.f32.mrb[0].mxu0
    %v1182 = vadd.f32 0.0, %v1181
    %v1183 = vpop.f32.mrb[0].mxu0
    %1184 = vmatprep.mubr.f32.mxu0 0.0
    %1185 = vmatmul.mubr.f32.gmra.mrb[0].mxu0 %v1036
    %v1186 = vpop.f32.mrb[0].mxu0
    %v1187 = vadd.f32 0.0, %v1186
    %v1188 = vpop.f32.mrb[0].mxu0
    %1189 = vmatprep.mubr.f32.mxu0 0.0
    %1190 = vmatmul.mubr.f32.gmra.mrb[0].mxu0 %v1037
    %v1191 = vpop.f32.mrb[0].mxu0
    %v1192 = vadd.f32 0.0, %v1191
    %v1193 = vpop.f32.mrb[0].mxu0
    %1194 = vmatprep.mubr.f32.mxu0 0.0
    %1195 = vmatmul.mubr.f32.gmra.mrb[0].mxu0 %v1038
    %v1196 = vpop.f32.mrb[0].mxu0
    %v1197 = vadd.f32 0.0, %v1196
    %v1198 = vpop.f32.mrb[0].mxu0
    %1199 = vmatprep.mubr.f32.mxu0 0.0
    %1200 = vmatmul.mubr.f32.gmra.mrb[0].mxu0 %v1039
    %v1201 = vpop.f32.mrb[0].mxu0
    %v1202 = vadd.f32 0.0, %v1201
    %v1203 = vpop.f32.mrb[0].mxu0
    %1204 = vmatprep.mubr.f32.mxu0 0.0
    %1205 = vmatmul.mubr.f32.gmra.mrb[0].mxu0 %v1040
    %v1206 = vpop.f32.mrb[0].mxu0
    %v1207 = vadd.f32 0.0, %v1206
    %v1208 = vpop.f32.mrb[0].mxu0
    %1209 = vmatprep.mubr.f32.mxu0 0.0
    %1210 = vmatmul.mubr.f32.gmra.mrb[0].mxu0 %v1041
    %v1211 = vpop.f32.mrb[0].mxu0
    %v1212 = vadd.f32 0.0, %v1211
    %v1213 = vpop.f32.mrb[0].mxu0
    %1214 = vmatprep.mubr.f32.mxu0 0.0
    %1215 = vmatmul.mubr.f32.gmra.mrb[0].mxu0 %v1042
    %v1216 = vpop.f32.mrb[0].mxu0
    %v1217 = vadd.f32 0.0, %v1216
    %v1218 = vpop.f32.mrb[0].mxu0
    %1219 = vmatprep.mubr.f32.mxu0 0.0
    %1220 = vmatmul.mubr.f32.gmra.mrb[0].mxu0 %v1043
    %v1221 = vpop.f32.mrb[0].mxu0
    %v1222 = vadd.f32 0.0, %v1221
    %v1223 = vpop.f32.mrb[0].mxu0
    %1224 = vmatprep.mubr.f32.mxu0 0.0
    %1225 = vmatmul.mubr.f32.gmra.mrb[0].mxu0 %v1044
    %v1226 = vpop.f32.mrb[0].mxu0
    %v1227 = vadd.f32 0.0, %v1226
    %v1228 = vpop.f32.mrb[0].mxu0
    %1229 = vmatprep.mubr.f32.mxu0 0.0
    %1230 = vmatmul.mubr.f32.gmra.mrb[0].mxu0 %v1045
    %v1231 = vpop.f32.mrb[0].mxu0
    %v1232 = vadd.f32 0.0, %v1231
    %v1233 = vpop.f32.mrb[0].mxu0
    %1234 = vmatprep.mubr.f32.mxu0 0.0
    %1235 = vmatmul.mubr.f32.gmra.mrb[0].mxu0 %v1046
    %v1236 = vpop.f32.mrb[0].mxu0
    %v1237 = vadd.f32 0.0, %v1236
    %v1238 = vpop.f32.mrb[0].mxu0
    %1239 = vmatprep.mubr.f32.mxu0 0.0
    %1240 = vmatmul.mubr.f32.gmra.mrb[0].mxu0 %v1047
    %v1241 = vpop.f32.mrb[0].mxu0
    %v1242 = vadd.f32 0.0, %v1241
    %v1243 = vpop.f32.mrb[0].mxu0
    %1244 = vmatprep.mubr.f32.mxu0 0.0
    %1245 = vmatmul.mubr.f32.gmra.mrb[0].mxu0 %v1048
    %v1246 = vpop.f32.mrb[0].mxu0
    %v1247 = vadd.f32 0.0, %v1246
    %v1248 = vpop.f32.mrb[0].mxu0
    %1249 = vmatprep.mubr.f32.mxu0 0.0
    %1250 = vmatmul.mubr.f32.gmra.mrb[0].mxu0 %v1049
    %v1251 = vpop.f32.mrb[0].mxu0
    %v1252 = vadd.f32 0.0, %v1251
    %v1253 = vpop.f32.mrb[0].mxu0
    %1254 = vmatprep.mubr.f32.mxu0 0.0
    %1255 = vmatmul.mubr.f32.gmra.mrb[0].mxu0 %v1050
    %v1256 = vpop.f32.mrb[0].mxu0
    %v1257 = vadd.f32 0.0, %v1256
    %v1258 = vpop.f32.mrb[0].mxu0
    %1259 = vmatprep.mubr.f32.mxu0 0.0
    %1260 = vmatmul.mubr.f32.gmra.mrb[0].mxu0 %v1051
    %v1261 = vpop.f32.mrb[0].mxu0
    %v1262 = vadd.f32 0.0, %v1261
    %v1263 = vpop.f32.mrb[0].mxu0
    %1264 = vmatprep.mubr.f32.mxu0 0.0
    %1265 = vmatmul.mubr.f32.gmra.mrb[0].mxu0 %v1052
    %v1266 = vpop.f32.mrb[0].mxu0
    %v1267 = vadd.f32 0.0, %v1266
    %v1268 = vpop.f32.mrb[0].mxu0
    %1269 = vmatprep.mubr.f32.mxu0 0.0
    %1270 = vmatmul.mubr.f32.gmra.mrb[0].mxu0 %v1053
    %v1271 = vpop.f32.mrb[0].mxu0
    %v1272 = vadd.f32 0.0, %v1271
    %v1273 = vpop.f32.mrb[0].mxu0
    %1274 = vmatprep.mubr.f32.mxu0 0.0
    %1275 = vmatmul.mubr.f32.gmra.mrb[0].mxu0 %v1054
    %v1276 = vpop.f32.mrb[0].mxu0
    %v1277 = vadd.f32 0.0, %v1276
    %v1278 = vpop.f32.mrb[0].mxu0
    %1279 = vmatprep.mubr.f32.mxu0 0.0
    %1280 = vmatmul.mubr.f32.gmra.mrb[0].mxu0 %v1055
    %v1281 = vpop.f32.mrb[0].mxu0
    %v1282 = vadd.f32 0.0, %v1281
    %v1283 = vpop.f32.mrb[0].mxu0
    %1284 = vmatprep.mubr.f32.mxu0 0.0
    %1285 = vmatmul.mubr.f32.gmra.mrb[0].mxu0 %v1056
    %v1286 = vpop.f32.mrb[0].mxu0
    %v1287 = vadd.f32 0.0, %v1286
    %v1288 = vpop.f32.mrb[0].mxu0
    %1289 = vmatprep.mubr.f32.mxu0 0.0
    %1290 = vmatmul.mubr.f32.gmra.mrb[0].mxu0 %v1057
    %v1291 = vpop.f32.mrb[0].mxu0
    %v1292 = vadd.f32 0.0, %v1291
    %v1293 = vpop.f32.mrb[0].mxu0
    %1294 = vmatprep.mubr.f32.mxu0 0.0
    %1295 = vmatmul.mubr.f32.gmra.mrb[0].mxu0 %v1058
    %v1296 = vpop.f32.mrb[0].mxu0
    %v1297 = vadd.f32 0.0, %v1296
    %v1298 = vpop.f32.mrb[0].mxu0
    %1299 = vdwg.mxu0
    %v1300 = vld [vmem:[%s3] sm:$0x1]
    %v1301 = vld [vmem:[%s3 + $0x1] sm:$0x1]
    %v1302 = vadd.f32 %v1142, %v1147
    %v1303 = vadd.f32 %v1302, %v1152
    %v1304 = vadd.f32 %v1303, %v1157
    %v1305 = vadd.f32 %v1304, %v1162
    %v1306 = vadd.f32 %v1305, %v1167
    %v1307 = vadd.f32 %v1306, %v1172
    %v1308 = vadd.f32 %v1307, %v1177
    %v1309 = vadd.f32 %v1308, %v1182
    %v1310 = vadd.f32 %v1309, %v1187
    %v1311 = vadd.f32 %v1310, %v1192
    %v1312 = vadd.f32 %v1311, %v1197
    %v1313 = vadd.f32 %v1312, %v1202
    %v1314 = vadd.f32 %v1313, %v1207
    %v1315 = vadd.f32 %v1314, %v1212
    %v1316 = vadd.f32 %v1315, %v1217
    %v1317 = vadd.f32 %v1316, %v1222
    %v1318 = vadd.f32 %v1317, %v1227
    %v1319 = vadd.f32 %v1318, %v1232
    %v1320 = vadd.f32 %v1319, %v1237
    %v1321 = vadd.f32 %v1320, %v1242
    %v1322 = vadd.f32 %v1321, %v1247
    %v1323 = vadd.f32 %v1322, %v1252
    %v1324 = vadd.f32 %v1323, %v1257
    %v1325 = vadd.f32 %v1324, %v1262
    %v1326 = vadd.f32 %v1325, %v1267
    %v1327 = vadd.f32 %v1326, %v1272
    %v1328 = vadd.f32 %v1327, %v1277
    %v1329 = vadd.f32 %v1328, %v1282
    %v1330 = vadd.f32 %v1329, %v1287
    %v1331 = vadd.f32 %v1330, %v1292
    %v1332 = vadd.f32 %v1331, %v1297
    %v1333 = vrot.slane %v1332, 4
    %v1334 = vadd.f32 %v1332, %v1333
    %v1335 = vrot.slane %v1334, 2
    %v1336 = vadd.f32 %v1334, %v1335
    %v1337 = vrot.slane %v1336, 1
    %v1338 = vadd.f32 %v1336, %v1337
    %v1339 = vmul.f32 %v1142, %v1142
    %v1340 = vmul.f32 %v1147, %v1147
    %v1341 = vmul.f32 %v1152, %v1152
    %v1342 = vmul.f32 %v1157, %v1157
    %v1343 = vmul.f32 %v1162, %v1162
    %v1344 = vmul.f32 %v1167, %v1167
    %v1345 = vmul.f32 %v1172, %v1172
    %v1346 = vmul.f32 %v1177, %v1177
    %v1347 = vmul.f32 %v1182, %v1182
    %v1348 = vmul.f32 %v1187, %v1187
    %v1349 = vmul.f32 %v1192, %v1192
    %v1350 = vmul.f32 %v1197, %v1197
    %v1351 = vmul.f32 %v1202, %v1202
    %v1352 = vmul.f32 %v1207, %v1207
    %v1353 = vmul.f32 %v1212, %v1212
    %v1354 = vmul.f32 %v1217, %v1217
    %v1355 = vmul.f32 %v1222, %v1222
    %v1356 = vmul.f32 %v1227, %v1227
    %v1357 = vmul.f32 %v1232, %v1232
    %v1358 = vmul.f32 %v1237, %v1237
    %v1359 = vmul.f32 %v1242, %v1242
    %v1360 = vmul.f32 %v1247, %v1247
    %v1361 = vmul.f32 %v1252, %v1252
    %v1362 = vmul.f32 %v1257, %v1257
    %v1363 = vmul.f32 %v1262, %v1262
    %v1364 = vmul.f32 %v1267, %v1267
    %v1365 = vmul.f32 %v1272, %v1272
    %v1366 = vmul.f32 %v1277, %v1277
    %v1367 = vmul.f32 %v1282, %v1282
    %v1368 = vmul.f32 %v1287, %v1287
    %v1369 = vmul.f32 %v1292, %v1292
    %v1370 = vmul.f32 %v1297, %v1297
    %v1371 = vadd.f32 %v1339, %v1340
    %v1372 = vadd.f32 %v1371, %v1341
    %v1373 = vadd.f32 %v1372, %v1342
    %v1374 = vadd.f32 %v1373, %v1343
    %v1375 = vadd.f32 %v1374, %v1344
    %v1376 = vadd.f32 %v1375, %v1345
    %v1377 = vadd.f32 %v1376, %v1346
    %v1378 = vadd.f32 %v1377, %v1347
    %v1379 = vadd.f32 %v1378, %v1348
    %v1380 = vadd.f32 %v1379, %v1349
    %v1381 = vadd.f32 %v1380, %v1350
    %v1382 = vadd.f32 %v1381, %v1351
    %v1383 = vadd.f32 %v1382, %v1352
    %v1384 = vadd.f32 %v1383, %v1353
    %v1385 = vadd.f32 %v1384, %v1354
    %v1386 = vadd.f32 %v1385, %v1355
    %v1387 = vadd.f32 %v1386, %v1356
    %v1388 = vadd.f32 %v1387, %v1357
    %v1389 = vadd.f32 %v1388, %v1358
    %v1390 = vadd.f32 %v1389, %v1359
    %v1391 = vadd.f32 %v1390, %v1360
    %v1392 = vadd.f32 %v1391, %v1361
    %v1393 = vadd.f32 %v1392, %v1362
    %v1394 = vadd.f32 %v1393, %v1363
    %v1395 = vadd.f32 %v1394, %v1364
    %v1396 = vadd.f32 %v1395, %v1365
    %v1397 = vadd.f32 %v1396, %v1366
    %v1398 = vadd.f32 %v1397, %v1367
    %v1399 = vadd.f32 %v1398, %v1368
    %v1400 = vadd.f32 %v1399, %v1369
    %v1401 = vadd.f32 %v1400, %v1370
    %v1402 = vrot.slane %v1401, 4
    %v1403 = vadd.f32 %v1401, %v1402
    %v1404 = vrot.slane %v1403, 2
    %v1405 = vadd.f32 %v1403, %v1404
    %v1406 = vrot.slane %v1405, 1
    %v1407 = vadd.f32 %v1405, %v1406
    %v1408 = vmul.f32 %v1338, 0.00390625
    %v1409 = vmul.f32 %v1407, 0.00390625
    %v1410 = vmul.f32 %v1408, %v1408
    %v1411 = vsub.f32 %v1409, %v1410
    %v1412 = vmax.f32 %v1411, 0.0
    %v1413 = vadd.f32 %v1412, 1e-05
    %v1414 = vrsqrt.pop %v1413
    %v1415 = vmul.f32 %v1414, %v1300
    %v1416 = vmul.f32 %v1408, %v1415
    %v1417 = vsub.f32 %v1301, %v1416
    %v1418 = vlaneseq
    %v1419 = vshrl.u32 %v1418, 7
    %v1420 = vsub.s32 0, %v1419
    %v1421 = vrot.slane %v1415, %v1420
    %v1422 = vmul.f32 %v1142, %v1421
    %v1423 = vmul.f32 %v1147, %v1421
    %v1424 = vmul.f32 %v1152, %v1421
    %v1425 = vmul.f32 %v1157, %v1421
    %v1426 = vmul.f32 %v1162, %v1421
    %v1427 = vmul.f32 %v1167, %v1421
    %v1428 = vmul.f32 %v1172, %v1421
    %v1429 = vmul.f32 %v1177, %v1421
    %v1430 = vmul.f32 %v1182, %v1421
    %v1431 = vmul.f32 %v1187, %v1421
    %v1432 = vmul.f32 %v1192, %v1421
    %v1433 = vmul.f32 %v1197, %v1421
    %v1434 = vmul.f32 %v1202, %v1421
    %v1435 = vmul.f32 %v1207, %v1421
    %v1436 = vmul.f32 %v1212, %v1421
    %v1437 = vmul.f32 %v1217, %v1421
    %v1438 = vmul.f32 %v1222, %v1421
    %v1439 = vmul.f32 %v1227, %v1421
    %v1440 = vmul.f32 %v1232, %v1421
    %v1441 = vmul.f32 %v1237, %v1421
    %v1442 = vmul.f32 %v1242, %v1421
    %v1443 = vmul.f32 %v1247, %v1421
    %v1444 = vmul.f32 %v1252, %v1421
    %v1445 = vmul.f32 %v1257, %v1421
    %v1446 = vmul.f32 %v1262, %v1421
    %v1447 = vmul.f32 %v1267, %v1421
    %v1448 = vmul.f32 %v1272, %v1421
    %v1449 = vmul.f32 %v1277, %v1421
    %v1450 = vmul.f32 %v1282, %v1421
    %v1451 = vmul.f32 %v1287, %v1421
    %v1452 = vmul.f32 %v1292, %v1421
    %v1453 = vmul.f32 %v1297, %v1421
    %v1454 = vlaneseq
    %v1455 = vshrl.u32 %v1454, 7
    %v1456 = vsub.s32 0, %v1455
    %v1457 = vrot.slane %v1417, %v1456
    %v1458 = vadd.f32 %v1422, %v1457
    %v1459 = vadd.f32 %v1423, %v1457
    %v1460 = vadd.f32 %v1424, %v1457
    %v1461 = vadd.f32 %v1425, %v1457
    %v1462 = vadd.f32 %v1426, %v1457
    %v1463 = vadd.f32 %v1427, %v1457
    %v1464 = vadd.f32 %v1428, %v1457
    %v1465 = vadd.f32 %v1429, %v1457
    %v1466 = vadd.f32 %v1430, %v1457
    %v1467 = vadd.f32 %v1431, %v1457
    %v1468 = vadd.f32 %v1432, %v1457
    %v1469 = vadd.f32 %v1433, %v1457
    %v1470 = vadd.f32 %v1434, %v1457
    %v1471 = vadd.f32 %v1435, %v1457
    %v1472 = vadd.f32 %v1436, %v1457
    %v1473 = vadd.f32 %v1437, %v1457
    %v1474 = vadd.f32 %v1438, %v1457
    %v1475 = vadd.f32 %v1439, %v1457
    %v1476 = vadd.f32 %v1440, %v1457
    %v1477 = vadd.f32 %v1441, %v1457
    %v1478 = vadd.f32 %v1442, %v1457
    %v1479 = vadd.f32 %v1443, %v1457
    %v1480 = vadd.f32 %v1444, %v1457
    %v1481 = vadd.f32 %v1445, %v1457
    %v1482 = vadd.f32 %v1446, %v1457
    %v1483 = vadd.f32 %v1447, %v1457
    %v1484 = vadd.f32 %v1448, %v1457
    %v1485 = vadd.f32 %v1449, %v1457
    %v1486 = vadd.f32 %v1450, %v1457
    %v1487 = vadd.f32 %v1451, %v1457
    %v1488 = vadd.f32 %v1452, %v1457
    %v1489 = vadd.f32 %v1453, %v1457
    %v1490 = vld [vmem:[%s2] sm:$0xf]
    %v1491 = vld [vmem:[%s2 + $0x4] sm:$0xf]
    %v1492 = vld [vmem:[%s2 + $0x8] sm:$0xf]
    %v1493 = vld [vmem:[%s2 + $0xc] sm:$0xf]
    %v1494 = vld [vmem:[%s2 + $0x10] sm:$0xf]
    %v1495 = vld [vmem:[%s2 + $0x14] sm:$0xf]
    %v1496 = vld [vmem:[%s2 + $0x18] sm:$0xf]
    %v1497 = vld [vmem:[%s2 + $0x1c] sm:$0xf]
    %v1498 = vld [vmem:[%s2 + $0x20] sm:$0xf]
    %v1499 = vld [vmem:[%s2 + $0x24] sm:$0xf]
    %v1500 = vld [vmem:[%s2 + $0x28] sm:$0xf]
    %v1501 = vld [vmem:[%s2 + $0x2c] sm:$0xf]
    %v1502 = vld [vmem:[%s2 + $0x30] sm:$0xf]
    %v1503 = vld [vmem:[%s2 + $0x34] sm:$0xf]
    %v1504 = vld [vmem:[%s2 + $0x38] sm:$0xf]
    %v1505 = vld [vmem:[%s2 + $0x3c] sm:$0xf]
    %v1506 = vld [vmem:[%s3 + $0x2] sm:$0x1]
    %v1507 = vld [vmem:[%s3 + $0x3] sm:$0x1]
    %v1508 = vld [vmem:[%s3 + $0x4] sm:$0x1]
    %v1509 = vpack.c.bf16 %v1459, %v1458
    %v1510 = vpack.c.bf16 %v1461, %v1460
    %v1511 = vpack.c.bf16 %v1463, %v1462
    %v1512 = vpack.c.bf16 %v1465, %v1464
    %v1513 = vpack.c.bf16 %v1467, %v1466
    %v1514 = vpack.c.bf16 %v1469, %v1468
    %v1515 = vpack.c.bf16 %v1471, %v1470
    %v1516 = vpack.c.bf16 %v1473, %v1472
    %v1517 = vpack.c.bf16 %v1475, %v1474
    %v1518 = vpack.c.bf16 %v1477, %v1476
    %v1519 = vpack.c.bf16 %v1479, %v1478
    %v1520 = vpack.c.bf16 %v1481, %v1480
    %v1521 = vpack.c.bf16 %v1483, %v1482
    %v1522 = vpack.c.bf16 %v1485, %v1484
    %v1523 = vpack.c.bf16 %v1487, %v1486
    %v1524 = vpack.c.bf16 %v1489, %v1488
    %v1525 = vlaneseq
    %v1526 = vshrl.u32 %v1525, 7
    %v1527 = vsub.s32 0, %v1526
    %v1528 = vrot.slane %v1506, %v1527
    %v1545 = vunpack.c.l.b16 %v1490
    %v1546 = vunpack.c.l.b16 %v1491
    %v1547 = vunpack.c.l.b16 %v1492
    %v1548 = vunpack.c.l.b16 %v1493
    %v1549 = vunpack.c.l.b16 %v1494
    %v1550 = vunpack.c.l.b16 %v1495
    %v1551 = vunpack.c.l.b16 %v1496
    %v1552 = vunpack.c.l.b16 %v1497
    %v1553 = vunpack.c.l.b16 %v1498
    %v1554 = vunpack.c.l.b16 %v1499
    %v1555 = vunpack.c.l.b16 %v1500
    %v1556 = vunpack.c.l.b16 %v1501
    %v1557 = vunpack.c.l.b16 %v1502
    %v1558 = vunpack.c.l.b16 %v1503
    %v1559 = vunpack.c.l.b16 %v1504
    %v1560 = vunpack.c.l.b16 %v1505
    %v1561 = vpack.c.b16 %v1546, %v1545
    %v1562 = vpack.c.b16 %v1548, %v1547
    %v1563 = vpack.c.b16 %v1550, %v1549
    %v1564 = vpack.c.b16 %v1552, %v1551
    %v1565 = vpack.c.b16 %v1554, %v1553
    %v1566 = vpack.c.b16 %v1556, %v1555
    %v1567 = vpack.c.b16 %v1558, %v1557
    %v1568 = vpack.c.b16 %v1560, %v1559
    %1577 = vmatprep.subr.bf16.mxu0 0
    %1578 = vmatpush1.bf16.msra.mxu0 %v1561
    %1579 = vmatprep.subr.bf16.mxu0 0
    %1580 = vmatpush1.bf16.msra.mxu0 %v1562
    %1581 = vmatprep.subr.bf16.mxu0 0
    %1582 = vmatpush1.bf16.msra.mxu0 %v1563
    %1583 = vmatprep.subr.bf16.mxu0 0
    %1584 = vmatpush1.bf16.msra.mxu0 %v1564
    %1585 = vmatprep.subr.bf16.mxu0 0
    %1586 = vmatpush1.bf16.msra.mxu0 %v1565
    %1587 = vmatprep.subr.bf16.mxu0 0
    %1588 = vmatpush1.bf16.msra.mxu0 %v1566
    %1589 = vmatprep.subr.bf16.mxu0 0
    %1590 = vmatpush1.bf16.msra.mxu0 %v1567
    %1591 = vmatprep.subr.bf16.mxu0 0
    %1592 = vmatpush1.bf16.msra.mxu0 %v1568
    %1593 = vmatprep.subr.bf16.mxu0 0
    %1594 = vmatpush1.bf16.msra.mxu0 0
    %1595 = vmatprep.subr.bf16.mxu0 0
    %1596 = vmatpush1.bf16.msra.mxu0 0
    %1597 = vmatprep.subr.bf16.mxu0 0
    %1598 = vmatpush1.bf16.msra.mxu0 0
    %1599 = vmatprep.subr.bf16.mxu0 0
    %1600 = vmatpush1.bf16.msra.mxu0 0
    %1601 = vmatprep.subr.bf16.mxu0 0
    %1602 = vmatpush1.bf16.msra.mxu0 0
    %1603 = vmatprep.subr.bf16.mxu0 0
    %1604 = vmatpush1.bf16.msra.mxu0 0
    %1605 = vmatprep.subr.bf16.mxu0 0
    %1606 = vmatpush1.bf16.msra.mxu0 0
    %1607 = vmatprep.subr.bf16.mxu0 0
    %1608 = vmatpush1.bf16.msra.mxu0 0
    %1609 = vmatprep.mubr.bf16.mxu0 0
    %1610 = vmatmul.mubr.bf16.gmra.mrb[0].mxu0 %v1509
    %v1611 = vpop.f32.mrb[0].mxu0
    %v1612 = vadd.f32 %v1528, %v1611
    %v1613 = vpop.f32.mrb[0].mxu0
    %v1614 = vpop.f32.mrb[0].mxu0
    %v1615 = vadd.f32 %v1528, %v1614
    %v1616 = vpop.f32.mrb[0].mxu0
    %1617 = vmatprep.mubr.bf16.mxu0 0
    %1618 = vmatmul.mubr.bf16.gmra.mrb[0].mxu0 %v1510
    %v1619 = vpop.f32.mrb[0].mxu0
    %v1620 = vadd.f32 %v1528, %v1619
    %v1621 = vpop.f32.mrb[0].mxu0
    %v1622 = vpop.f32.mrb[0].mxu0
    %v1623 = vadd.f32 %v1528, %v1622
    %v1624 = vpop.f32.mrb[0].mxu0
    %1625 = vmatprep.mubr.bf16.mxu0 0
    %1626 = vmatmul.mubr.bf16.gmra.mrb[0].mxu0 %v1511
    %v1627 = vpop.f32.mrb[0].mxu0
    %v1628 = vadd.f32 %v1528, %v1627
    %v1629 = vpop.f32.mrb[0].mxu0
    %v1630 = vpop.f32.mrb[0].mxu0
    %v1631 = vadd.f32 %v1528, %v1630
    %v1632 = vpop.f32.mrb[0].mxu0
    %1633 = vmatprep.mubr.bf16.mxu0 0
    %1634 = vmatmul.mubr.bf16.gmra.mrb[0].mxu0 %v1512
    %v1635 = vpop.f32.mrb[0].mxu0
    %v1636 = vadd.f32 %v1528, %v1635
    %v1637 = vpop.f32.mrb[0].mxu0
    %v1638 = vpop.f32.mrb[0].mxu0
    %v1639 = vadd.f32 %v1528, %v1638
    %v1640 = vpop.f32.mrb[0].mxu0
    %1641 = vmatprep.mubr.bf16.mxu0 0
    %1642 = vmatmul.mubr.bf16.gmra.mrb[0].mxu0 %v1513
    %v1643 = vpop.f32.mrb[0].mxu0
    %v1644 = vadd.f32 %v1528, %v1643
    %v1645 = vpop.f32.mrb[0].mxu0
    %v1646 = vpop.f32.mrb[0].mxu0
    %v1647 = vadd.f32 %v1528, %v1646
    %v1648 = vpop.f32.mrb[0].mxu0
    %1649 = vmatprep.mubr.bf16.mxu0 0
    %1650 = vmatmul.mubr.bf16.gmra.mrb[0].mxu0 %v1514
    %v1651 = vpop.f32.mrb[0].mxu0
    %v1652 = vadd.f32 %v1528, %v1651
    %v1653 = vpop.f32.mrb[0].mxu0
    %v1654 = vpop.f32.mrb[0].mxu0
    %v1655 = vadd.f32 %v1528, %v1654
    %v1656 = vpop.f32.mrb[0].mxu0
    %1657 = vmatprep.mubr.bf16.mxu0 0
    %1658 = vmatmul.mubr.bf16.gmra.mrb[0].mxu0 %v1515
    %v1659 = vpop.f32.mrb[0].mxu0
    %v1660 = vadd.f32 %v1528, %v1659
    %v1661 = vpop.f32.mrb[0].mxu0
    %v1662 = vpop.f32.mrb[0].mxu0
    %v1663 = vadd.f32 %v1528, %v1662
    %v1664 = vpop.f32.mrb[0].mxu0
    %1665 = vmatprep.mubr.bf16.mxu0 0
    %1666 = vmatmul.mubr.bf16.gmra.mrb[0].mxu0 %v1516
    %v1667 = vpop.f32.mrb[0].mxu0
    %v1668 = vadd.f32 %v1528, %v1667
    %v1669 = vpop.f32.mrb[0].mxu0
    %v1670 = vpop.f32.mrb[0].mxu0
    %v1671 = vadd.f32 %v1528, %v1670
    %v1672 = vpop.f32.mrb[0].mxu0
    %1673 = vmatprep.mubr.bf16.mxu0 0
    %1674 = vmatmul.mubr.bf16.gmra.mrb[0].mxu0 %v1517
    %v1675 = vpop.f32.mrb[0].mxu0
    %v1676 = vadd.f32 %v1528, %v1675
    %v1677 = vpop.f32.mrb[0].mxu0
    %v1678 = vpop.f32.mrb[0].mxu0
    %v1679 = vadd.f32 %v1528, %v1678
    %v1680 = vpop.f32.mrb[0].mxu0
    %1681 = vmatprep.mubr.bf16.mxu0 0
    %1682 = vmatmul.mubr.bf16.gmra.mrb[0].mxu0 %v1518
    %v1683 = vpop.f32.mrb[0].mxu0
    %v1684 = vadd.f32 %v1528, %v1683
    %v1685 = vpop.f32.mrb[0].mxu0
    %v1686 = vpop.f32.mrb[0].mxu0
    %v1687 = vadd.f32 %v1528, %v1686
    %v1688 = vpop.f32.mrb[0].mxu0
    %1689 = vmatprep.mubr.bf16.mxu0 0
    %1690 = vmatmul.mubr.bf16.gmra.mrb[0].mxu0 %v1519
    %v1691 = vpop.f32.mrb[0].mxu0
    %v1692 = vadd.f32 %v1528, %v1691
    %v1693 = vpop.f32.mrb[0].mxu0
    %v1694 = vpop.f32.mrb[0].mxu0
    %v1695 = vadd.f32 %v1528, %v1694
    %v1696 = vpop.f32.mrb[0].mxu0
    %1697 = vmatprep.mubr.bf16.mxu0 0
    %1698 = vmatmul.mubr.bf16.gmra.mrb[0].mxu0 %v1520
    %v1699 = vpop.f32.mrb[0].mxu0
    %v1700 = vadd.f32 %v1528, %v1699
    %v1701 = vpop.f32.mrb[0].mxu0
    %v1702 = vpop.f32.mrb[0].mxu0
    %v1703 = vadd.f32 %v1528, %v1702
    %v1704 = vpop.f32.mrb[0].mxu0
    %1705 = vmatprep.mubr.bf16.mxu0 0
    %1706 = vmatmul.mubr.bf16.gmra.mrb[0].mxu0 %v1521
    %v1707 = vpop.f32.mrb[0].mxu0
    %v1708 = vadd.f32 %v1528, %v1707
    %v1709 = vpop.f32.mrb[0].mxu0
    %v1710 = vpop.f32.mrb[0].mxu0
    %v1711 = vadd.f32 %v1528, %v1710
    %v1712 = vpop.f32.mrb[0].mxu0
    %1713 = vmatprep.mubr.bf16.mxu0 0
    %1714 = vmatmul.mubr.bf16.gmra.mrb[0].mxu0 %v1522
    %v1715 = vpop.f32.mrb[0].mxu0
    %v1716 = vadd.f32 %v1528, %v1715
    %v1717 = vpop.f32.mrb[0].mxu0
    %v1718 = vpop.f32.mrb[0].mxu0
    %v1719 = vadd.f32 %v1528, %v1718
    %v1720 = vpop.f32.mrb[0].mxu0
    %1721 = vmatprep.mubr.bf16.mxu0 0
    %1722 = vmatmul.mubr.bf16.gmra.mrb[0].mxu0 %v1523
    %v1723 = vpop.f32.mrb[0].mxu0
    %v1724 = vadd.f32 %v1528, %v1723
    %v1725 = vpop.f32.mrb[0].mxu0
    %v1726 = vpop.f32.mrb[0].mxu0
    %v1727 = vadd.f32 %v1528, %v1726
    %v1728 = vpop.f32.mrb[0].mxu0
    %1729 = vmatprep.mubr.bf16.mxu0 0
    %1730 = vmatmul.mubr.bf16.gmra.mrb[0].mxu0 %v1524
    %v1731 = vpop.f32.mrb[0].mxu0
    %v1732 = vadd.f32 %v1528, %v1731
    %v1733 = vpop.f32.mrb[0].mxu0
    %v1734 = vpop.f32.mrb[0].mxu0
    %v1735 = vadd.f32 %v1528, %v1734
    %v1736 = vpop.f32.mrb[0].mxu0
    %1737 = vdwg.mxu0
    %v1738 = vmax.f32 %v1612, 0.0
    %v1739 = vmax.f32 %v1615, 0.0
    %v1740 = vmax.f32 %v1620, 0.0
    %v1741 = vmax.f32 %v1623, 0.0
    %v1742 = vmax.f32 %v1628, 0.0
    %v1743 = vmax.f32 %v1631, 0.0
    %v1744 = vmax.f32 %v1636, 0.0
    %v1745 = vmax.f32 %v1639, 0.0
    %v1746 = vmax.f32 %v1644, 0.0
    %v1747 = vmax.f32 %v1647, 0.0
    %v1748 = vmax.f32 %v1652, 0.0
    %v1749 = vmax.f32 %v1655, 0.0
    %v1750 = vmax.f32 %v1660, 0.0
    %v1751 = vmax.f32 %v1663, 0.0
    %v1752 = vmax.f32 %v1668, 0.0
    %v1753 = vmax.f32 %v1671, 0.0
    %v1754 = vmax.f32 %v1676, 0.0
    %v1755 = vmax.f32 %v1679, 0.0
    %v1756 = vmax.f32 %v1684, 0.0
    %v1757 = vmax.f32 %v1687, 0.0
    %v1758 = vmax.f32 %v1692, 0.0
    %v1759 = vmax.f32 %v1695, 0.0
    %v1760 = vmax.f32 %v1700, 0.0
    %v1761 = vmax.f32 %v1703, 0.0
    %v1762 = vmax.f32 %v1708, 0.0
    %v1763 = vmax.f32 %v1711, 0.0
    %v1764 = vmax.f32 %v1716, 0.0
    %v1765 = vmax.f32 %v1719, 0.0
    %v1766 = vmax.f32 %v1724, 0.0
    %v1767 = vmax.f32 %v1727, 0.0
    %v1768 = vmax.f32 %v1732, 0.0
    %v1769 = vmax.f32 %v1735, 0.0
    %v1770 = vadd.f32 %v1738, %v1739
    %v1771 = vadd.f32 %v1770, %v1740
    %v1772 = vadd.f32 %v1771, %v1741
    %v1773 = vadd.f32 %v1772, %v1742
    %v1774 = vadd.f32 %v1773, %v1743
    %v1775 = vadd.f32 %v1774, %v1744
    %v1776 = vadd.f32 %v1775, %v1745
    %v1777 = vadd.f32 %v1776, %v1746
    %v1778 = vadd.f32 %v1777, %v1747
    %v1779 = vadd.f32 %v1778, %v1748
    %v1780 = vadd.f32 %v1779, %v1749
    %v1781 = vadd.f32 %v1780, %v1750
    %v1782 = vadd.f32 %v1781, %v1751
    %v1783 = vadd.f32 %v1782, %v1752
    %v1784 = vadd.f32 %v1783, %v1753
    %v1785 = vadd.f32 %v1784, %v1754
    %v1786 = vadd.f32 %v1785, %v1755
    %v1787 = vadd.f32 %v1786, %v1756
    %v1788 = vadd.f32 %v1787, %v1757
    %v1789 = vadd.f32 %v1788, %v1758
    %v1790 = vadd.f32 %v1789, %v1759
    %v1791 = vadd.f32 %v1790, %v1760
    %v1792 = vadd.f32 %v1791, %v1761
    %v1793 = vadd.f32 %v1792, %v1762
    %v1794 = vadd.f32 %v1793, %v1763
    %v1795 = vadd.f32 %v1794, %v1764
    %v1796 = vadd.f32 %v1795, %v1765
    %v1797 = vadd.f32 %v1796, %v1766
    %v1798 = vadd.f32 %v1797, %v1767
    %v1799 = vadd.f32 %v1798, %v1768
    %v1800 = vadd.f32 %v1799, %v1769
    %v1801 = vrot.slane %v1800, 4
    %v1802 = vadd.f32 %v1800, %v1801
    %v1803 = vrot.slane %v1802, 2
    %v1804 = vadd.f32 %v1802, %v1803
    %v1805 = vrot.slane %v1804, 1
    %v1806 = vadd.f32 %v1804, %v1805
    %v1807 = vmul.f32 %v1738, %v1738
    %v1808 = vmul.f32 %v1739, %v1739
    %v1809 = vmul.f32 %v1740, %v1740
    %v1810 = vmul.f32 %v1741, %v1741
    %v1811 = vmul.f32 %v1742, %v1742
    %v1812 = vmul.f32 %v1743, %v1743
    %v1813 = vmul.f32 %v1744, %v1744
    %v1814 = vmul.f32 %v1745, %v1745
    %v1815 = vmul.f32 %v1746, %v1746
    %v1816 = vmul.f32 %v1747, %v1747
    %v1817 = vmul.f32 %v1748, %v1748
    %v1818 = vmul.f32 %v1749, %v1749
    %v1819 = vmul.f32 %v1750, %v1750
    %v1820 = vmul.f32 %v1751, %v1751
    %v1821 = vmul.f32 %v1752, %v1752
    %v1822 = vmul.f32 %v1753, %v1753
    %v1823 = vmul.f32 %v1754, %v1754
    %v1824 = vmul.f32 %v1755, %v1755
    %v1825 = vmul.f32 %v1756, %v1756
    %v1826 = vmul.f32 %v1757, %v1757
    %v1827 = vmul.f32 %v1758, %v1758
    %v1828 = vmul.f32 %v1759, %v1759
    %v1829 = vmul.f32 %v1760, %v1760
    %v1830 = vmul.f32 %v1761, %v1761
    %v1831 = vmul.f32 %v1762, %v1762
    %v1832 = vmul.f32 %v1763, %v1763
    %v1833 = vmul.f32 %v1764, %v1764
    %v1834 = vmul.f32 %v1765, %v1765
    %v1835 = vmul.f32 %v1766, %v1766
    %v1836 = vmul.f32 %v1767, %v1767
    %v1837 = vmul.f32 %v1768, %v1768
    %v1838 = vmul.f32 %v1769, %v1769
    %v1839 = vadd.f32 %v1807, %v1808
    %v1840 = vadd.f32 %v1839, %v1809
    %v1841 = vadd.f32 %v1840, %v1810
    %v1842 = vadd.f32 %v1841, %v1811
    %v1843 = vadd.f32 %v1842, %v1812
    %v1844 = vadd.f32 %v1843, %v1813
    %v1845 = vadd.f32 %v1844, %v1814
    %v1846 = vadd.f32 %v1845, %v1815
    %v1847 = vadd.f32 %v1846, %v1816
    %v1848 = vadd.f32 %v1847, %v1817
    %v1849 = vadd.f32 %v1848, %v1818
    %v1850 = vadd.f32 %v1849, %v1819
    %v1851 = vadd.f32 %v1850, %v1820
    %v1852 = vadd.f32 %v1851, %v1821
    %v1853 = vadd.f32 %v1852, %v1822
    %v1854 = vadd.f32 %v1853, %v1823
    %v1855 = vadd.f32 %v1854, %v1824
    %v1856 = vadd.f32 %v1855, %v1825
    %v1857 = vadd.f32 %v1856, %v1826
    %v1858 = vadd.f32 %v1857, %v1827
    %v1859 = vadd.f32 %v1858, %v1828
    %v1860 = vadd.f32 %v1859, %v1829
    %v1861 = vadd.f32 %v1860, %v1830
    %v1862 = vadd.f32 %v1861, %v1831
    %v1863 = vadd.f32 %v1862, %v1832
    %v1864 = vadd.f32 %v1863, %v1833
    %v1865 = vadd.f32 %v1864, %v1834
    %v1866 = vadd.f32 %v1865, %v1835
    %v1867 = vadd.f32 %v1866, %v1836
    %v1868 = vadd.f32 %v1867, %v1837
    %v1869 = vadd.f32 %v1868, %v1838
    %v1870 = vrot.slane %v1869, 4
    %v1871 = vadd.f32 %v1869, %v1870
    %v1872 = vrot.slane %v1871, 2
    %v1873 = vadd.f32 %v1871, %v1872
    %v1874 = vrot.slane %v1873, 1
    %v1875 = vadd.f32 %v1873, %v1874
    %v1876 = vmul.f32 %v1806, 0.00390625
    %v1877 = vmul.f32 %v1875, 0.00390625
    %v1878 = vmul.f32 %v1876, %v1876
    %v1879 = vsub.f32 %v1877, %v1878
    %v1880 = vmax.f32 %v1879, 0.0
    %v1881 = vadd.f32 %v1880, 1e-05
    %v1882 = vrsqrt.pop %v1881
    %v1883 = vmul.f32 %v1882, %v1507
    %v1884 = vmul.f32 %v1876, %v1883
    %v1885 = vsub.f32 %v1508, %v1884
    %v1886 = vlaneseq
    %v1887 = vshrl.u32 %v1886, 7
    %v1888 = vsub.s32 0, %v1887
    %v1889 = vrot.slane %v1883, %v1888
    %v1890 = vmul.f32 %v1738, %v1889
    %v1891 = vmul.f32 %v1739, %v1889
    %v1892 = vmul.f32 %v1740, %v1889
    %v1893 = vmul.f32 %v1741, %v1889
    %v1894 = vmul.f32 %v1742, %v1889
    %v1895 = vmul.f32 %v1743, %v1889
    %v1896 = vmul.f32 %v1744, %v1889
    %v1897 = vmul.f32 %v1745, %v1889
    %v1898 = vmul.f32 %v1746, %v1889
    %v1899 = vmul.f32 %v1747, %v1889
    %v1900 = vmul.f32 %v1748, %v1889
    %v1901 = vmul.f32 %v1749, %v1889
    %v1902 = vmul.f32 %v1750, %v1889
    %v1903 = vmul.f32 %v1751, %v1889
    %v1904 = vmul.f32 %v1752, %v1889
    %v1905 = vmul.f32 %v1753, %v1889
    %v1906 = vmul.f32 %v1754, %v1889
    %v1907 = vmul.f32 %v1755, %v1889
    %v1908 = vmul.f32 %v1756, %v1889
    %v1909 = vmul.f32 %v1757, %v1889
    %v1910 = vmul.f32 %v1758, %v1889
    %v1911 = vmul.f32 %v1759, %v1889
    %v1912 = vmul.f32 %v1760, %v1889
    %v1913 = vmul.f32 %v1761, %v1889
    %v1914 = vmul.f32 %v1762, %v1889
    %v1915 = vmul.f32 %v1763, %v1889
    %v1916 = vmul.f32 %v1764, %v1889
    %v1917 = vmul.f32 %v1765, %v1889
    %v1918 = vmul.f32 %v1766, %v1889
    %v1919 = vmul.f32 %v1767, %v1889
    %v1920 = vmul.f32 %v1768, %v1889
    %v1921 = vmul.f32 %v1769, %v1889
    %v1922 = vlaneseq
    %v1923 = vshrl.u32 %v1922, 7
    %v1924 = vsub.s32 0, %v1923
    %v1925 = vrot.slane %v1885, %v1924
    %v1926 = vadd.f32 %v1890, %v1925
    %v1927 = vadd.f32 %v1891, %v1925
    %v1928 = vadd.f32 %v1892, %v1925
    %v1929 = vadd.f32 %v1893, %v1925
    %v1930 = vadd.f32 %v1894, %v1925
    %v1931 = vadd.f32 %v1895, %v1925
    %v1932 = vadd.f32 %v1896, %v1925
    %v1933 = vadd.f32 %v1897, %v1925
    %v1934 = vadd.f32 %v1898, %v1925
    %v1935 = vadd.f32 %v1899, %v1925
    %v1936 = vadd.f32 %v1900, %v1925
    %v1937 = vadd.f32 %v1901, %v1925
    %v1938 = vadd.f32 %v1902, %v1925
    %v1939 = vadd.f32 %v1903, %v1925
    %v1940 = vadd.f32 %v1904, %v1925
    %v1941 = vadd.f32 %v1905, %v1925
    %v1942 = vadd.f32 %v1906, %v1925
    %v1943 = vadd.f32 %v1907, %v1925
    %v1944 = vadd.f32 %v1908, %v1925
    %v1945 = vadd.f32 %v1909, %v1925
    %v1946 = vadd.f32 %v1910, %v1925
    %v1947 = vadd.f32 %v1911, %v1925
    %v1948 = vadd.f32 %v1912, %v1925
    %v1949 = vadd.f32 %v1913, %v1925
    %v1950 = vadd.f32 %v1914, %v1925
    %v1951 = vadd.f32 %v1915, %v1925
    %v1952 = vadd.f32 %v1916, %v1925
    %v1953 = vadd.f32 %v1917, %v1925
    %v1954 = vadd.f32 %v1918, %v1925
    %v1955 = vadd.f32 %v1919, %v1925
    %v1956 = vadd.f32 %v1920, %v1925
    %v1957 = vadd.f32 %v1921, %v1925
    %s1958 = scalar_lea.vmem %s2, 64
    %v1959 = vld [vmem:[%s1958] sm:$0xf]
    %v1960 = vld [vmem:[%s1958 + $0x4] sm:$0xf]
    %v1961 = vld [vmem:[%s1958 + $0x8] sm:$0xf]
    %v1962 = vld [vmem:[%s1958 + $0xc] sm:$0xf]
    %v1963 = vld [vmem:[%s1958 + $0x10] sm:$0xf]
    %v1964 = vld [vmem:[%s1958 + $0x14] sm:$0xf]
    %v1965 = vld [vmem:[%s1958 + $0x18] sm:$0xf]
    %v1966 = vld [vmem:[%s1958 + $0x1c] sm:$0xf]
    %v1967 = vld [vmem:[%s1958 + $0x20] sm:$0xf]
    %v1968 = vld [vmem:[%s1958 + $0x24] sm:$0xf]
    %v1969 = vld [vmem:[%s1958 + $0x28] sm:$0xf]
    %v1970 = vld [vmem:[%s1958 + $0x2c] sm:$0xf]
    %v1971 = vld [vmem:[%s1958 + $0x30] sm:$0xf]
    %v1972 = vld [vmem:[%s1958 + $0x34] sm:$0xf]
    %v1973 = vld [vmem:[%s1958 + $0x38] sm:$0xf]
    %v1974 = vld [vmem:[%s1958 + $0x3c] sm:$0xf]
    %v1975 = vld [vmem:[%s3 + $0x5] sm:$0x1]
    %v1976 = vld [vmem:[%s3 + $0x6] sm:$0x1]
    %v1977 = vld [vmem:[%s3 + $0x7] sm:$0x1]
    %v1978 = vpack.c.bf16 %v1927, %v1926
    %v1979 = vpack.c.bf16 %v1929, %v1928
    %v1980 = vpack.c.bf16 %v1931, %v1930
    %v1981 = vpack.c.bf16 %v1933, %v1932
    %v1982 = vpack.c.bf16 %v1935, %v1934
    %v1983 = vpack.c.bf16 %v1937, %v1936
    %v1984 = vpack.c.bf16 %v1939, %v1938
    %v1985 = vpack.c.bf16 %v1941, %v1940
    %v1986 = vpack.c.bf16 %v1943, %v1942
    %v1987 = vpack.c.bf16 %v1945, %v1944
    %v1988 = vpack.c.bf16 %v1947, %v1946
    %v1989 = vpack.c.bf16 %v1949, %v1948
    %v1990 = vpack.c.bf16 %v1951, %v1950
    %v1991 = vpack.c.bf16 %v1953, %v1952
    %v1992 = vpack.c.bf16 %v1955, %v1954
    %v1993 = vpack.c.bf16 %v1957, %v1956
    %v1994 = vlaneseq
    %v1995 = vshrl.u32 %v1994, 7
    %v1996 = vsub.s32 0, %v1995
    %v1997 = vrot.slane %v1975, %v1996
    %v2014 = vunpack.c.l.b16 %v1959
    %v2015 = vunpack.c.l.b16 %v1960
    %v2016 = vunpack.c.l.b16 %v1961
    %v2017 = vunpack.c.l.b16 %v1962
    %v2018 = vunpack.c.l.b16 %v1963
    %v2019 = vunpack.c.l.b16 %v1964
    %v2020 = vunpack.c.l.b16 %v1965
    %v2021 = vunpack.c.l.b16 %v1966
    %v2022 = vunpack.c.l.b16 %v1967
    %v2023 = vunpack.c.l.b16 %v1968
    %v2024 = vunpack.c.l.b16 %v1969
    %v2025 = vunpack.c.l.b16 %v1970
    %v2026 = vunpack.c.l.b16 %v1971
    %v2027 = vunpack.c.l.b16 %v1972
    %v2028 = vunpack.c.l.b16 %v1973
    %v2029 = vunpack.c.l.b16 %v1974
    %v2030 = vpack.c.b16 %v2015, %v2014
    %v2031 = vpack.c.b16 %v2017, %v2016
    %v2032 = vpack.c.b16 %v2019, %v2018
    %v2033 = vpack.c.b16 %v2021, %v2020
    %v2034 = vpack.c.b16 %v2023, %v2022
    %v2035 = vpack.c.b16 %v2025, %v2024
    %v2036 = vpack.c.b16 %v2027, %v2026
    %v2037 = vpack.c.b16 %v2029, %v2028
    %2046 = vmatprep.subr.bf16.mxu0 0
    %2047 = vmatpush1.bf16.msra.mxu0 %v2030
    %2048 = vmatprep.subr.bf16.mxu0 0
    %2049 = vmatpush1.bf16.msra.mxu0 %v2031
    %2050 = vmatprep.subr.bf16.mxu0 0
    %2051 = vmatpush1.bf16.msra.mxu0 %v2032
    %2052 = vmatprep.subr.bf16.mxu0 0
    %2053 = vmatpush1.bf16.msra.mxu0 %v2033
    %2054 = vmatprep.subr.bf16.mxu0 0
    %2055 = vmatpush1.bf16.msra.mxu0 %v2034
    %2056 = vmatprep.subr.bf16.mxu0 0
    %2057 = vmatpush1.bf16.msra.mxu0 %v2035
    %2058 = vmatprep.subr.bf16.mxu0 0
    %2059 = vmatpush1.bf16.msra.mxu0 %v2036
    %2060 = vmatprep.subr.bf16.mxu0 0
    %2061 = vmatpush1.bf16.msra.mxu0 %v2037
    %2062 = vmatprep.subr.bf16.mxu0 0
    %2063 = vmatpush1.bf16.msra.mxu0 0
    %2064 = vmatprep.subr.bf16.mxu0 0
    %2065 = vmatpush1.bf16.msra.mxu0 0
    %2066 = vmatprep.subr.bf16.mxu0 0
    %2067 = vmatpush1.bf16.msra.mxu0 0
    %2068 = vmatprep.subr.bf16.mxu0 0
    %2069 = vmatpush1.bf16.msra.mxu0 0
    %2070 = vmatprep.subr.bf16.mxu0 0
    %2071 = vmatpush1.bf16.msra.mxu0 0
    %2072 = vmatprep.subr.bf16.mxu0 0
    %2073 = vmatpush1.bf16.msra.mxu0 0
    %2074 = vmatprep.subr.bf16.mxu0 0
    %2075 = vmatpush1.bf16.msra.mxu0 0
    %2076 = vmatprep.subr.bf16.mxu0 0
    %2077 = vmatpush1.bf16.msra.mxu0 0
    %2078 = vmatprep.mubr.bf16.mxu0 0
    %2079 = vmatmul.mubr.bf16.gmra.mrb[0].mxu0 %v1978
    %v2080 = vpop.f32.mrb[0].mxu0
    %v2081 = vadd.f32 %v1997, %v2080
    %v2082 = vpop.f32.mrb[0].mxu0
    %v2083 = vpop.f32.mrb[0].mxu0
    %v2084 = vadd.f32 %v1997, %v2083
    %v2085 = vpop.f32.mrb[0].mxu0
    %2086 = vmatprep.mubr.bf16.mxu0 0
    %2087 = vmatmul.mubr.bf16.gmra.mrb[0].mxu0 %v1979
    %v2088 = vpop.f32.mrb[0].mxu0
    %v2089 = vadd.f32 %v1997, %v2088
    %v2090 = vpop.f32.mrb[0].mxu0
    %v2091 = vpop.f32.mrb[0].mxu0
    %v2092 = vadd.f32 %v1997, %v2091
    %v2093 = vpop.f32.mrb[0].mxu0
    %2094 = vmatprep.mubr.bf16.mxu0 0
    %2095 = vmatmul.mubr.bf16.gmra.mrb[0].mxu0 %v1980
    %v2096 = vpop.f32.mrb[0].mxu0
    %v2097 = vadd.f32 %v1997, %v2096
    %v2098 = vpop.f32.mrb[0].mxu0
    %v2099 = vpop.f32.mrb[0].mxu0
    %v2100 = vadd.f32 %v1997, %v2099
    %v2101 = vpop.f32.mrb[0].mxu0
    %2102 = vmatprep.mubr.bf16.mxu0 0
    %2103 = vmatmul.mubr.bf16.gmra.mrb[0].mxu0 %v1981
    %v2104 = vpop.f32.mrb[0].mxu0
    %v2105 = vadd.f32 %v1997, %v2104
    %v2106 = vpop.f32.mrb[0].mxu0
    %v2107 = vpop.f32.mrb[0].mxu0
    %v2108 = vadd.f32 %v1997, %v2107
    %v2109 = vpop.f32.mrb[0].mxu0
    %2110 = vmatprep.mubr.bf16.mxu0 0
    %2111 = vmatmul.mubr.bf16.gmra.mrb[0].mxu0 %v1982
    %v2112 = vpop.f32.mrb[0].mxu0
    %v2113 = vadd.f32 %v1997, %v2112
    %v2114 = vpop.f32.mrb[0].mxu0
    %v2115 = vpop.f32.mrb[0].mxu0
    %v2116 = vadd.f32 %v1997, %v2115
    %v2117 = vpop.f32.mrb[0].mxu0
    %2118 = vmatprep.mubr.bf16.mxu0 0
    %2119 = vmatmul.mubr.bf16.gmra.mrb[0].mxu0 %v1983
    %v2120 = vpop.f32.mrb[0].mxu0
    %v2121 = vadd.f32 %v1997, %v2120
    %v2122 = vpop.f32.mrb[0].mxu0
    %v2123 = vpop.f32.mrb[0].mxu0
    %v2124 = vadd.f32 %v1997, %v2123
    %v2125 = vpop.f32.mrb[0].mxu0
    %2126 = vmatprep.mubr.bf16.mxu0 0
    %2127 = vmatmul.mubr.bf16.gmra.mrb[0].mxu0 %v1984
    %v2128 = vpop.f32.mrb[0].mxu0
    %v2129 = vadd.f32 %v1997, %v2128
    %v2130 = vpop.f32.mrb[0].mxu0
    %v2131 = vpop.f32.mrb[0].mxu0
    %v2132 = vadd.f32 %v1997, %v2131
    %v2133 = vpop.f32.mrb[0].mxu0
    %2134 = vmatprep.mubr.bf16.mxu0 0
    %2135 = vmatmul.mubr.bf16.gmra.mrb[0].mxu0 %v1985
    %v2136 = vpop.f32.mrb[0].mxu0
    %v2137 = vadd.f32 %v1997, %v2136
    %v2138 = vpop.f32.mrb[0].mxu0
    %v2139 = vpop.f32.mrb[0].mxu0
    %v2140 = vadd.f32 %v1997, %v2139
    %v2141 = vpop.f32.mrb[0].mxu0
    %2142 = vmatprep.mubr.bf16.mxu0 0
    %2143 = vmatmul.mubr.bf16.gmra.mrb[0].mxu0 %v1986
    %v2144 = vpop.f32.mrb[0].mxu0
    %v2145 = vadd.f32 %v1997, %v2144
    %v2146 = vpop.f32.mrb[0].mxu0
    %v2147 = vpop.f32.mrb[0].mxu0
    %v2148 = vadd.f32 %v1997, %v2147
    %v2149 = vpop.f32.mrb[0].mxu0
    %2150 = vmatprep.mubr.bf16.mxu0 0
    %2151 = vmatmul.mubr.bf16.gmra.mrb[0].mxu0 %v1987
    %v2152 = vpop.f32.mrb[0].mxu0
    %v2153 = vadd.f32 %v1997, %v2152
    %v2154 = vpop.f32.mrb[0].mxu0
    %v2155 = vpop.f32.mrb[0].mxu0
    %v2156 = vadd.f32 %v1997, %v2155
    %v2157 = vpop.f32.mrb[0].mxu0
    %2158 = vmatprep.mubr.bf16.mxu0 0
    %2159 = vmatmul.mubr.bf16.gmra.mrb[0].mxu0 %v1988
    %v2160 = vpop.f32.mrb[0].mxu0
    %v2161 = vadd.f32 %v1997, %v2160
    %v2162 = vpop.f32.mrb[0].mxu0
    %v2163 = vpop.f32.mrb[0].mxu0
    %v2164 = vadd.f32 %v1997, %v2163
    %v2165 = vpop.f32.mrb[0].mxu0
    %2166 = vmatprep.mubr.bf16.mxu0 0
    %2167 = vmatmul.mubr.bf16.gmra.mrb[0].mxu0 %v1989
    %v2168 = vpop.f32.mrb[0].mxu0
    %v2169 = vadd.f32 %v1997, %v2168
    %v2170 = vpop.f32.mrb[0].mxu0
    %v2171 = vpop.f32.mrb[0].mxu0
    %v2172 = vadd.f32 %v1997, %v2171
    %v2173 = vpop.f32.mrb[0].mxu0
    %2174 = vmatprep.mubr.bf16.mxu0 0
    %2175 = vmatmul.mubr.bf16.gmra.mrb[0].mxu0 %v1990
    %v2176 = vpop.f32.mrb[0].mxu0
    %v2177 = vadd.f32 %v1997, %v2176
    %v2178 = vpop.f32.mrb[0].mxu0
    %v2179 = vpop.f32.mrb[0].mxu0
    %v2180 = vadd.f32 %v1997, %v2179
    %v2181 = vpop.f32.mrb[0].mxu0
    %2182 = vmatprep.mubr.bf16.mxu0 0
    %2183 = vmatmul.mubr.bf16.gmra.mrb[0].mxu0 %v1991
    %v2184 = vpop.f32.mrb[0].mxu0
    %v2185 = vadd.f32 %v1997, %v2184
    %v2186 = vpop.f32.mrb[0].mxu0
    %v2187 = vpop.f32.mrb[0].mxu0
    %v2188 = vadd.f32 %v1997, %v2187
    %v2189 = vpop.f32.mrb[0].mxu0
    %2190 = vmatprep.mubr.bf16.mxu0 0
    %2191 = vmatmul.mubr.bf16.gmra.mrb[0].mxu0 %v1992
    %v2192 = vpop.f32.mrb[0].mxu0
    %v2193 = vadd.f32 %v1997, %v2192
    %v2194 = vpop.f32.mrb[0].mxu0
    %v2195 = vpop.f32.mrb[0].mxu0
    %v2196 = vadd.f32 %v1997, %v2195
    %v2197 = vpop.f32.mrb[0].mxu0
    %2198 = vmatprep.mubr.bf16.mxu0 0
    %2199 = vmatmul.mubr.bf16.gmra.mrb[0].mxu0 %v1993
    %v2200 = vpop.f32.mrb[0].mxu0
    %v2201 = vadd.f32 %v1997, %v2200
    %v2202 = vpop.f32.mrb[0].mxu0
    %v2203 = vpop.f32.mrb[0].mxu0
    %v2204 = vadd.f32 %v1997, %v2203
    %v2205 = vpop.f32.mrb[0].mxu0
    %2206 = vdwg.mxu0
    %v2207 = vmax.f32 %v2081, 0.0
    %v2208 = vmax.f32 %v2084, 0.0
    %v2209 = vmax.f32 %v2089, 0.0
    %v2210 = vmax.f32 %v2092, 0.0
    %v2211 = vmax.f32 %v2097, 0.0
    %v2212 = vmax.f32 %v2100, 0.0
    %v2213 = vmax.f32 %v2105, 0.0
    %v2214 = vmax.f32 %v2108, 0.0
    %v2215 = vmax.f32 %v2113, 0.0
    %v2216 = vmax.f32 %v2116, 0.0
    %v2217 = vmax.f32 %v2121, 0.0
    %v2218 = vmax.f32 %v2124, 0.0
    %v2219 = vmax.f32 %v2129, 0.0
    %v2220 = vmax.f32 %v2132, 0.0
    %v2221 = vmax.f32 %v2137, 0.0
    %v2222 = vmax.f32 %v2140, 0.0
    %v2223 = vmax.f32 %v2145, 0.0
    %v2224 = vmax.f32 %v2148, 0.0
    %v2225 = vmax.f32 %v2153, 0.0
    %v2226 = vmax.f32 %v2156, 0.0
    %v2227 = vmax.f32 %v2161, 0.0
    %v2228 = vmax.f32 %v2164, 0.0
    %v2229 = vmax.f32 %v2169, 0.0
    %v2230 = vmax.f32 %v2172, 0.0
    %v2231 = vmax.f32 %v2177, 0.0
    %v2232 = vmax.f32 %v2180, 0.0
    %v2233 = vmax.f32 %v2185, 0.0
    %v2234 = vmax.f32 %v2188, 0.0
    %v2235 = vmax.f32 %v2193, 0.0
    %v2236 = vmax.f32 %v2196, 0.0
    %v2237 = vmax.f32 %v2201, 0.0
    %v2238 = vmax.f32 %v2204, 0.0
    %v2239 = vadd.f32 %v2207, %v2208
    %v2240 = vadd.f32 %v2239, %v2209
    %v2241 = vadd.f32 %v2240, %v2210
    %v2242 = vadd.f32 %v2241, %v2211
    %v2243 = vadd.f32 %v2242, %v2212
    %v2244 = vadd.f32 %v2243, %v2213
    %v2245 = vadd.f32 %v2244, %v2214
    %v2246 = vadd.f32 %v2245, %v2215
    %v2247 = vadd.f32 %v2246, %v2216
    %v2248 = vadd.f32 %v2247, %v2217
    %v2249 = vadd.f32 %v2248, %v2218
    %v2250 = vadd.f32 %v2249, %v2219
    %v2251 = vadd.f32 %v2250, %v2220
    %v2252 = vadd.f32 %v2251, %v2221
    %v2253 = vadd.f32 %v2252, %v2222
    %v2254 = vadd.f32 %v2253, %v2223
    %v2255 = vadd.f32 %v2254, %v2224
    %v2256 = vadd.f32 %v2255, %v2225
    %v2257 = vadd.f32 %v2256, %v2226
    %v2258 = vadd.f32 %v2257, %v2227
    %v2259 = vadd.f32 %v2258, %v2228
    %v2260 = vadd.f32 %v2259, %v2229
    %v2261 = vadd.f32 %v2260, %v2230
    %v2262 = vadd.f32 %v2261, %v2231
    %v2263 = vadd.f32 %v2262, %v2232
    %v2264 = vadd.f32 %v2263, %v2233
    %v2265 = vadd.f32 %v2264, %v2234
    %v2266 = vadd.f32 %v2265, %v2235
    %v2267 = vadd.f32 %v2266, %v2236
    %v2268 = vadd.f32 %v2267, %v2237
    %v2269 = vadd.f32 %v2268, %v2238
    %v2270 = vrot.slane %v2269, 4
    %v2271 = vadd.f32 %v2269, %v2270
    %v2272 = vrot.slane %v2271, 2
    %v2273 = vadd.f32 %v2271, %v2272
    %v2274 = vrot.slane %v2273, 1
    %v2275 = vadd.f32 %v2273, %v2274
    %v2276 = vmul.f32 %v2207, %v2207
    %v2277 = vmul.f32 %v2208, %v2208
    %v2278 = vmul.f32 %v2209, %v2209
    %v2279 = vmul.f32 %v2210, %v2210
    %v2280 = vmul.f32 %v2211, %v2211
    %v2281 = vmul.f32 %v2212, %v2212
    %v2282 = vmul.f32 %v2213, %v2213
    %v2283 = vmul.f32 %v2214, %v2214
    %v2284 = vmul.f32 %v2215, %v2215
    %v2285 = vmul.f32 %v2216, %v2216
    %v2286 = vmul.f32 %v2217, %v2217
    %v2287 = vmul.f32 %v2218, %v2218
    %v2288 = vmul.f32 %v2219, %v2219
    %v2289 = vmul.f32 %v2220, %v2220
    %v2290 = vmul.f32 %v2221, %v2221
    %v2291 = vmul.f32 %v2222, %v2222
    %v2292 = vmul.f32 %v2223, %v2223
    %v2293 = vmul.f32 %v2224, %v2224
    %v2294 = vmul.f32 %v2225, %v2225
    %v2295 = vmul.f32 %v2226, %v2226
    %v2296 = vmul.f32 %v2227, %v2227
    %v2297 = vmul.f32 %v2228, %v2228
    %v2298 = vmul.f32 %v2229, %v2229
    %v2299 = vmul.f32 %v2230, %v2230
    %v2300 = vmul.f32 %v2231, %v2231
    %v2301 = vmul.f32 %v2232, %v2232
    %v2302 = vmul.f32 %v2233, %v2233
    %v2303 = vmul.f32 %v2234, %v2234
    %v2304 = vmul.f32 %v2235, %v2235
    %v2305 = vmul.f32 %v2236, %v2236
    %v2306 = vmul.f32 %v2237, %v2237
    %v2307 = vmul.f32 %v2238, %v2238
    %v2308 = vadd.f32 %v2276, %v2277
    %v2309 = vadd.f32 %v2308, %v2278
    %v2310 = vadd.f32 %v2309, %v2279
    %v2311 = vadd.f32 %v2310, %v2280
    %v2312 = vadd.f32 %v2311, %v2281
    %v2313 = vadd.f32 %v2312, %v2282
    %v2314 = vadd.f32 %v2313, %v2283
    %v2315 = vadd.f32 %v2314, %v2284
    %v2316 = vadd.f32 %v2315, %v2285
    %v2317 = vadd.f32 %v2316, %v2286
    %v2318 = vadd.f32 %v2317, %v2287
    %v2319 = vadd.f32 %v2318, %v2288
    %v2320 = vadd.f32 %v2319, %v2289
    %v2321 = vadd.f32 %v2320, %v2290
    %v2322 = vadd.f32 %v2321, %v2291
    %v2323 = vadd.f32 %v2322, %v2292
    %v2324 = vadd.f32 %v2323, %v2293
    %v2325 = vadd.f32 %v2324, %v2294
    %v2326 = vadd.f32 %v2325, %v2295
    %v2327 = vadd.f32 %v2326, %v2296
    %v2328 = vadd.f32 %v2327, %v2297
    %v2329 = vadd.f32 %v2328, %v2298
    %v2330 = vadd.f32 %v2329, %v2299
    %v2331 = vadd.f32 %v2330, %v2300
    %v2332 = vadd.f32 %v2331, %v2301
    %v2333 = vadd.f32 %v2332, %v2302
    %v2334 = vadd.f32 %v2333, %v2303
    %v2335 = vadd.f32 %v2334, %v2304
    %v2336 = vadd.f32 %v2335, %v2305
    %v2337 = vadd.f32 %v2336, %v2306
    %v2338 = vadd.f32 %v2337, %v2307
    %v2339 = vrot.slane %v2338, 4
    %v2340 = vadd.f32 %v2338, %v2339
    %v2341 = vrot.slane %v2340, 2
    %v2342 = vadd.f32 %v2340, %v2341
    %v2343 = vrot.slane %v2342, 1
    %v2344 = vadd.f32 %v2342, %v2343
    %v2345 = vmul.f32 %v2275, 0.00390625
    %v2346 = vmul.f32 %v2344, 0.00390625
    %v2347 = vmul.f32 %v2345, %v2345
    %v2348 = vsub.f32 %v2346, %v2347
    %v2349 = vmax.f32 %v2348, 0.0
    %v2350 = vadd.f32 %v2349, 1e-05
    %v2351 = vrsqrt.pop %v2350
    %v2352 = vmul.f32 %v2351, %v1976
    %v2353 = vmul.f32 %v2345, %v2352
    %v2354 = vsub.f32 %v1977, %v2353
    %v2355 = vlaneseq
    %v2356 = vshrl.u32 %v2355, 7
    %v2357 = vsub.s32 0, %v2356
    %v2358 = vrot.slane %v2352, %v2357
    %v2359 = vmul.f32 %v2207, %v2358
    %v2360 = vmul.f32 %v2208, %v2358
    %v2361 = vmul.f32 %v2209, %v2358
    %v2362 = vmul.f32 %v2210, %v2358
    %v2363 = vmul.f32 %v2211, %v2358
    %v2364 = vmul.f32 %v2212, %v2358
    %v2365 = vmul.f32 %v2213, %v2358
    %v2366 = vmul.f32 %v2214, %v2358
    %v2367 = vmul.f32 %v2215, %v2358
    %v2368 = vmul.f32 %v2216, %v2358
    %v2369 = vmul.f32 %v2217, %v2358
    %v2370 = vmul.f32 %v2218, %v2358
    %v2371 = vmul.f32 %v2219, %v2358
    %v2372 = vmul.f32 %v2220, %v2358
    %v2373 = vmul.f32 %v2221, %v2358
    %v2374 = vmul.f32 %v2222, %v2358
    %v2375 = vmul.f32 %v2223, %v2358
    %v2376 = vmul.f32 %v2224, %v2358
    %v2377 = vmul.f32 %v2225, %v2358
    %v2378 = vmul.f32 %v2226, %v2358
    %v2379 = vmul.f32 %v2227, %v2358
    %v2380 = vmul.f32 %v2228, %v2358
    %v2381 = vmul.f32 %v2229, %v2358
    %v2382 = vmul.f32 %v2230, %v2358
    %v2383 = vmul.f32 %v2231, %v2358
    %v2384 = vmul.f32 %v2232, %v2358
    %v2385 = vmul.f32 %v2233, %v2358
    %v2386 = vmul.f32 %v2234, %v2358
    %v2387 = vmul.f32 %v2235, %v2358
    %v2388 = vmul.f32 %v2236, %v2358
    %v2389 = vmul.f32 %v2237, %v2358
    %v2390 = vmul.f32 %v2238, %v2358
    %v2391 = vlaneseq
    %v2392 = vshrl.u32 %v2391, 7
    %v2393 = vsub.s32 0, %v2392
    %v2394 = vrot.slane %v2354, %v2393
    %v2395 = vadd.f32 %v2359, %v2394
    %v2396 = vadd.f32 %v2360, %v2394
    %v2397 = vadd.f32 %v2361, %v2394
    %v2398 = vadd.f32 %v2362, %v2394
    %v2399 = vadd.f32 %v2363, %v2394
    %v2400 = vadd.f32 %v2364, %v2394
    %v2401 = vadd.f32 %v2365, %v2394
    %v2402 = vadd.f32 %v2366, %v2394
    %v2403 = vadd.f32 %v2367, %v2394
    %v2404 = vadd.f32 %v2368, %v2394
    %v2405 = vadd.f32 %v2369, %v2394
    %v2406 = vadd.f32 %v2370, %v2394
    %v2407 = vadd.f32 %v2371, %v2394
    %v2408 = vadd.f32 %v2372, %v2394
    %v2409 = vadd.f32 %v2373, %v2394
    %v2410 = vadd.f32 %v2374, %v2394
    %v2411 = vadd.f32 %v2375, %v2394
    %v2412 = vadd.f32 %v2376, %v2394
    %v2413 = vadd.f32 %v2377, %v2394
    %v2414 = vadd.f32 %v2378, %v2394
    %v2415 = vadd.f32 %v2379, %v2394
    %v2416 = vadd.f32 %v2380, %v2394
    %v2417 = vadd.f32 %v2381, %v2394
    %v2418 = vadd.f32 %v2382, %v2394
    %v2419 = vadd.f32 %v2383, %v2394
    %v2420 = vadd.f32 %v2384, %v2394
    %v2421 = vadd.f32 %v2385, %v2394
    %v2422 = vadd.f32 %v2386, %v2394
    %v2423 = vadd.f32 %v2387, %v2394
    %v2424 = vadd.f32 %v2388, %v2394
    %v2425 = vadd.f32 %v2389, %v2394
    %v2426 = vadd.f32 %v2390, %v2394
    %v2427 = vpack.c.bf16 %v2396, %v2395
    %v2428 = vpack.c.bf16 %v2398, %v2397
    %v2429 = vpack.c.bf16 %v2400, %v2399
    %v2430 = vpack.c.bf16 %v2402, %v2401
    %v2431 = vpack.c.bf16 %v2404, %v2403
    %v2432 = vpack.c.bf16 %v2406, %v2405
    %v2433 = vpack.c.bf16 %v2408, %v2407
    %v2434 = vpack.c.bf16 %v2410, %v2409
    %v2435 = vpack.c.bf16 %v2412, %v2411
    %v2436 = vpack.c.bf16 %v2414, %v2413
    %v2437 = vpack.c.bf16 %v2416, %v2415
    %v2438 = vpack.c.bf16 %v2418, %v2417
    %v2439 = vpack.c.bf16 %v2420, %v2419
    %v2440 = vpack.c.bf16 %v2422, %v2421
    %v2441 = vpack.c.bf16 %v2424, %v2423
    %v2442 = vpack.c.bf16 %v2426, %v2425
    %s2443 = scalar_lea.vmem %s2, 128
    %v2444 = vld [vmem:[%s2443] sm:$0xf]
    %v2445 = vld [vmem:[%s2443 + $0x4] sm:$0xf]
    %v2446 = vld [vmem:[%s2443 + $0x8] sm:$0xf]
    %v2447 = vld [vmem:[%s2443 + $0xc] sm:$0xf]
    %v2448 = vld [vmem:[%s2443 + $0x10] sm:$0xf]
    %v2449 = vld [vmem:[%s2443 + $0x14] sm:$0xf]
    %v2450 = vld [vmem:[%s2443 + $0x18] sm:$0xf]
    %v2451 = vld [vmem:[%s2443 + $0x1c] sm:$0xf]
    %v2452 = vld [vmem:[%s2443 + $0x20] sm:$0xf]
    %v2453 = vld [vmem:[%s2443 + $0x24] sm:$0xf]
    %v2454 = vld [vmem:[%s2443 + $0x28] sm:$0xf]
    %v2455 = vld [vmem:[%s2443 + $0x2c] sm:$0xf]
    %v2456 = vld [vmem:[%s2443 + $0x30] sm:$0xf]
    %v2457 = vld [vmem:[%s2443 + $0x34] sm:$0xf]
    %v2458 = vld [vmem:[%s2443 + $0x38] sm:$0xf]
    %v2459 = vld [vmem:[%s2443 + $0x3c] sm:$0xf]
    %v2460 = vld [vmem:[%s3 + $0x8] sm:$0x1]
    %v2461 = vlaneseq
    %v2462 = vshrl.u32 %v2461, 7
    %v2463 = vsub.s32 0, %v2462
    %v2464 = vrot.slane %v2460, %v2463
    %v2481 = vunpack.c.l.b16 %v2444
    %v2482 = vunpack.c.l.b16 %v2445
    %v2483 = vunpack.c.l.b16 %v2446
    %v2484 = vunpack.c.l.b16 %v2447
    %v2485 = vunpack.c.l.b16 %v2448
    %v2486 = vunpack.c.l.b16 %v2449
    %v2487 = vunpack.c.l.b16 %v2450
    %v2488 = vunpack.c.l.b16 %v2451
    %v2489 = vunpack.c.l.b16 %v2452
    %v2490 = vunpack.c.l.b16 %v2453
    %v2491 = vunpack.c.l.b16 %v2454
    %v2492 = vunpack.c.l.b16 %v2455
    %v2493 = vunpack.c.l.b16 %v2456
    %v2494 = vunpack.c.l.b16 %v2457
    %v2495 = vunpack.c.l.b16 %v2458
    %v2496 = vunpack.c.l.b16 %v2459
    %v2497 = vpack.c.b16 %v2482, %v2481
    %v2498 = vpack.c.b16 %v2484, %v2483
    %v2499 = vpack.c.b16 %v2486, %v2485
    %v2500 = vpack.c.b16 %v2488, %v2487
    %v2501 = vpack.c.b16 %v2490, %v2489
    %v2502 = vpack.c.b16 %v2492, %v2491
    %v2503 = vpack.c.b16 %v2494, %v2493
    %v2504 = vpack.c.b16 %v2496, %v2495
    %2513 = vmatprep.subr.bf16.mxu0 0
    %2514 = vmatpush1.bf16.msra.mxu0 %v2497
    %2515 = vmatprep.subr.bf16.mxu0 0
    %2516 = vmatpush1.bf16.msra.mxu0 %v2498
    %2517 = vmatprep.subr.bf16.mxu0 0
    %2518 = vmatpush1.bf16.msra.mxu0 %v2499
    %2519 = vmatprep.subr.bf16.mxu0 0
    %2520 = vmatpush1.bf16.msra.mxu0 %v2500
    %2521 = vmatprep.subr.bf16.mxu0 0
    %2522 = vmatpush1.bf16.msra.mxu0 %v2501
    %2523 = vmatprep.subr.bf16.mxu0 0
    %2524 = vmatpush1.bf16.msra.mxu0 %v2502
    %2525 = vmatprep.subr.bf16.mxu0 0
    %2526 = vmatpush1.bf16.msra.mxu0 %v2503
    %2527 = vmatprep.subr.bf16.mxu0 0
    %2528 = vmatpush1.bf16.msra.mxu0 %v2504
    %2529 = vmatprep.subr.bf16.mxu0 0
    %2530 = vmatpush1.bf16.msra.mxu0 0
    %2531 = vmatprep.subr.bf16.mxu0 0
    %2532 = vmatpush1.bf16.msra.mxu0 0
    %2533 = vmatprep.subr.bf16.mxu0 0
    %2534 = vmatpush1.bf16.msra.mxu0 0
    %2535 = vmatprep.subr.bf16.mxu0 0
    %2536 = vmatpush1.bf16.msra.mxu0 0
    %2537 = vmatprep.subr.bf16.mxu0 0
    %2538 = vmatpush1.bf16.msra.mxu0 0
    %2539 = vmatprep.subr.bf16.mxu0 0
    %2540 = vmatpush1.bf16.msra.mxu0 0
    %2541 = vmatprep.subr.bf16.mxu0 0
    %2542 = vmatpush1.bf16.msra.mxu0 0
    %2543 = vmatprep.subr.bf16.mxu0 0
    %2544 = vmatpush1.bf16.msra.mxu0 0
    %2545 = vmatprep.mubr.bf16.mxu0 0
    %2546 = vmatmul.mubr.bf16.gmra.mrb[0].mxu0 %v2427
    %v2547 = vpop.f32.mrb[0].mxu0
    %v2548 = vadd.f32 %v2464, %v2547
    %v2549 = vpop.f32.mrb[0].mxu0
    %v2550 = vpop.f32.mrb[0].mxu0
    %v2551 = vadd.f32 %v2464, %v2550
    %v2552 = vpop.f32.mrb[0].mxu0
    %2553 = vmatprep.mubr.bf16.mxu0 0
    %2554 = vmatmul.mubr.bf16.gmra.mrb[0].mxu0 %v2428
    %v2555 = vpop.f32.mrb[0].mxu0
    %v2556 = vadd.f32 %v2464, %v2555
    %v2557 = vpop.f32.mrb[0].mxu0
    %v2558 = vpop.f32.mrb[0].mxu0
    %v2559 = vadd.f32 %v2464, %v2558
    %v2560 = vpop.f32.mrb[0].mxu0
    %2561 = vmatprep.mubr.bf16.mxu0 0
    %2562 = vmatmul.mubr.bf16.gmra.mrb[0].mxu0 %v2429
    %v2563 = vpop.f32.mrb[0].mxu0
    %v2564 = vadd.f32 %v2464, %v2563
    %v2565 = vpop.f32.mrb[0].mxu0
    %v2566 = vpop.f32.mrb[0].mxu0
    %v2567 = vadd.f32 %v2464, %v2566
    %v2568 = vpop.f32.mrb[0].mxu0
    %2569 = vmatprep.mubr.bf16.mxu0 0
    %2570 = vmatmul.mubr.bf16.gmra.mrb[0].mxu0 %v2430
    %v2571 = vpop.f32.mrb[0].mxu0
    %v2572 = vadd.f32 %v2464, %v2571
    %v2573 = vpop.f32.mrb[0].mxu0
    %v2574 = vpop.f32.mrb[0].mxu0
    %v2575 = vadd.f32 %v2464, %v2574
    %v2576 = vpop.f32.mrb[0].mxu0
    %2577 = vmatprep.mubr.bf16.mxu0 0
    %2578 = vmatmul.mubr.bf16.gmra.mrb[0].mxu0 %v2431
    %v2579 = vpop.f32.mrb[0].mxu0
    %v2580 = vadd.f32 %v2464, %v2579
    %v2581 = vpop.f32.mrb[0].mxu0
    %v2582 = vpop.f32.mrb[0].mxu0
    %v2583 = vadd.f32 %v2464, %v2582
    %v2584 = vpop.f32.mrb[0].mxu0
    %2585 = vmatprep.mubr.bf16.mxu0 0
    %2586 = vmatmul.mubr.bf16.gmra.mrb[0].mxu0 %v2432
    %v2587 = vpop.f32.mrb[0].mxu0
    %v2588 = vadd.f32 %v2464, %v2587
    %v2589 = vpop.f32.mrb[0].mxu0
    %v2590 = vpop.f32.mrb[0].mxu0
    %v2591 = vadd.f32 %v2464, %v2590
    %v2592 = vpop.f32.mrb[0].mxu0
    %2593 = vmatprep.mubr.bf16.mxu0 0
    %2594 = vmatmul.mubr.bf16.gmra.mrb[0].mxu0 %v2433
    %v2595 = vpop.f32.mrb[0].mxu0
    %v2596 = vadd.f32 %v2464, %v2595
    %v2597 = vpop.f32.mrb[0].mxu0
    %v2598 = vpop.f32.mrb[0].mxu0
    %v2599 = vadd.f32 %v2464, %v2598
    %v2600 = vpop.f32.mrb[0].mxu0
    %2601 = vmatprep.mubr.bf16.mxu0 0
    %2602 = vmatmul.mubr.bf16.gmra.mrb[0].mxu0 %v2434
    %v2603 = vpop.f32.mrb[0].mxu0
    %v2604 = vadd.f32 %v2464, %v2603
    %v2605 = vpop.f32.mrb[0].mxu0
    %v2606 = vpop.f32.mrb[0].mxu0
    %v2607 = vadd.f32 %v2464, %v2606
    %v2608 = vpop.f32.mrb[0].mxu0
    %2609 = vmatprep.mubr.bf16.mxu0 0
    %2610 = vmatmul.mubr.bf16.gmra.mrb[0].mxu0 %v2435
    %v2611 = vpop.f32.mrb[0].mxu0
    %v2612 = vadd.f32 %v2464, %v2611
    %v2613 = vpop.f32.mrb[0].mxu0
    %v2614 = vpop.f32.mrb[0].mxu0
    %v2615 = vadd.f32 %v2464, %v2614
    %v2616 = vpop.f32.mrb[0].mxu0
    %2617 = vmatprep.mubr.bf16.mxu0 0
    %2618 = vmatmul.mubr.bf16.gmra.mrb[0].mxu0 %v2436
    %v2619 = vpop.f32.mrb[0].mxu0
    %v2620 = vadd.f32 %v2464, %v2619
    %v2621 = vpop.f32.mrb[0].mxu0
    %v2622 = vpop.f32.mrb[0].mxu0
    %v2623 = vadd.f32 %v2464, %v2622
    %v2624 = vpop.f32.mrb[0].mxu0
    %2625 = vmatprep.mubr.bf16.mxu0 0
    %2626 = vmatmul.mubr.bf16.gmra.mrb[0].mxu0 %v2437
    %v2627 = vpop.f32.mrb[0].mxu0
    %v2628 = vadd.f32 %v2464, %v2627
    %v2629 = vpop.f32.mrb[0].mxu0
    %v2630 = vpop.f32.mrb[0].mxu0
    %v2631 = vadd.f32 %v2464, %v2630
    %v2632 = vpop.f32.mrb[0].mxu0
    %2633 = vmatprep.mubr.bf16.mxu0 0
    %2634 = vmatmul.mubr.bf16.gmra.mrb[0].mxu0 %v2438
    %v2635 = vpop.f32.mrb[0].mxu0
    %v2636 = vadd.f32 %v2464, %v2635
    %v2637 = vpop.f32.mrb[0].mxu0
    %v2638 = vpop.f32.mrb[0].mxu0
    %v2639 = vadd.f32 %v2464, %v2638
    %v2640 = vpop.f32.mrb[0].mxu0
    %2641 = vmatprep.mubr.bf16.mxu0 0
    %2642 = vmatmul.mubr.bf16.gmra.mrb[0].mxu0 %v2439
    %v2643 = vpop.f32.mrb[0].mxu0
    %v2644 = vadd.f32 %v2464, %v2643
    %v2645 = vpop.f32.mrb[0].mxu0
    %v2646 = vpop.f32.mrb[0].mxu0
    %v2647 = vadd.f32 %v2464, %v2646
    %v2648 = vpop.f32.mrb[0].mxu0
    %2649 = vmatprep.mubr.bf16.mxu0 0
    %2650 = vmatmul.mubr.bf16.gmra.mrb[0].mxu0 %v2440
    %v2651 = vpop.f32.mrb[0].mxu0
    %v2652 = vadd.f32 %v2464, %v2651
    %v2653 = vpop.f32.mrb[0].mxu0
    %v2654 = vpop.f32.mrb[0].mxu0
    %v2655 = vadd.f32 %v2464, %v2654
    %v2656 = vpop.f32.mrb[0].mxu0
    %2657 = vmatprep.mubr.bf16.mxu0 0
    %2658 = vmatmul.mubr.bf16.gmra.mrb[0].mxu0 %v2441
    %v2659 = vpop.f32.mrb[0].mxu0
    %v2660 = vadd.f32 %v2464, %v2659
    %v2661 = vpop.f32.mrb[0].mxu0
    %v2662 = vpop.f32.mrb[0].mxu0
    %v2663 = vadd.f32 %v2464, %v2662
    %v2664 = vpop.f32.mrb[0].mxu0
    %2665 = vmatprep.mubr.bf16.mxu0 0
    %2666 = vmatmul.mubr.bf16.gmra.mrb[0].mxu0 %v2442
    %v2667 = vpop.f32.mrb[0].mxu0
    %v2668 = vadd.f32 %v2464, %v2667
    %v2669 = vpop.f32.mrb[0].mxu0
    %v2670 = vpop.f32.mrb[0].mxu0
    %v2671 = vadd.f32 %v2464, %v2670
    %v2672 = vpop.f32.mrb[0].mxu0
    %2673 = vdwg.mxu0
    %2674 = vmax.xlane.f32.xlu0 %v2548
    %v2675 = vpop.xlane.xlu0 %2674
    %2676 = vmax.xlane.f32.xlu0 %v2551
    %v2677 = vpop.xlane.xlu0 %2676
    %2678 = vmax.xlane.f32.xlu0 %v2556
    %v2679 = vpop.xlane.xlu0 %2678
    %2680 = vmax.xlane.f32.xlu0 %v2559
    %v2681 = vpop.xlane.xlu0 %2680
    %2682 = vmax.xlane.f32.xlu0 %v2564
    %v2683 = vpop.xlane.xlu0 %2682
    %2684 = vmax.xlane.f32.xlu0 %v2567
    %v2685 = vpop.xlane.xlu0 %2684
    %2686 = vmax.xlane.f32.xlu0 %v2572
    %v2687 = vpop.xlane.xlu0 %2686
    %2688 = vmax.xlane.f32.xlu0 %v2575
    %v2689 = vpop.xlane.xlu0 %2688
    %2690 = vmax.xlane.f32.xlu0 %v2580
    %v2691 = vpop.xlane.xlu0 %2690
    %2692 = vmax.xlane.f32.xlu0 %v2583
    %v2693 = vpop.xlane.xlu0 %2692
    %2694 = vmax.xlane.f32.xlu0 %v2588
    %v2695 = vpop.xlane.xlu0 %2694
    %2696 = vmax.xlane.f32.xlu0 %v2591
    %v2697 = vpop.xlane.xlu0 %2696
    %2698 = vmax.xlane.f32.xlu0 %v2596
    %v2699 = vpop.xlane.xlu0 %2698
    %2700 = vmax.xlane.f32.xlu0 %v2599
    %v2701 = vpop.xlane.xlu0 %2700
    %2702 = vmax.xlane.f32.xlu0 %v2604
    %v2703 = vpop.xlane.xlu0 %2702
    %2704 = vmax.xlane.f32.xlu0 %v2607
    %v2705 = vpop.xlane.xlu0 %2704
    %2706 = vmax.xlane.f32.xlu0 %v2612
    %v2707 = vpop.xlane.xlu0 %2706
    %2708 = vmax.xlane.f32.xlu0 %v2615
    %v2709 = vpop.xlane.xlu0 %2708
    %2710 = vmax.xlane.f32.xlu0 %v2620
    %v2711 = vpop.xlane.xlu0 %2710
    %2712 = vmax.xlane.f32.xlu0 %v2623
    %v2713 = vpop.xlane.xlu0 %2712
    %2714 = vmax.xlane.f32.xlu0 %v2628
    %v2715 = vpop.xlane.xlu0 %2714
    %2716 = vmax.xlane.f32.xlu0 %v2631
    %v2717 = vpop.xlane.xlu0 %2716
    %2718 = vmax.xlane.f32.xlu0 %v2636
    %v2719 = vpop.xlane.xlu0 %2718
    %2720 = vmax.xlane.f32.xlu0 %v2639
    %v2721 = vpop.xlane.xlu0 %2720
    %2722 = vmax.xlane.f32.xlu0 %v2644
    %v2723 = vpop.xlane.xlu0 %2722
    %2724 = vmax.xlane.f32.xlu0 %v2647
    %v2725 = vpop.xlane.xlu0 %2724
    %2726 = vmax.xlane.f32.xlu0 %v2652
    %v2727 = vpop.xlane.xlu0 %2726
    %2728 = vmax.xlane.f32.xlu0 %v2655
    %v2729 = vpop.xlane.xlu0 %2728
    %2730 = vmax.xlane.f32.xlu0 %v2660
    %v2731 = vpop.xlane.xlu0 %2730
    %2732 = vmax.xlane.f32.xlu0 %v2663
    %v2733 = vpop.xlane.xlu0 %2732
    %2734 = vmax.xlane.f32.xlu0 %v2668
    %v2735 = vpop.xlane.xlu0 %2734
    %2736 = vmax.xlane.f32.xlu0 %v2671
    %v2737 = vpop.xlane.xlu0 %2736
    %v2738 = vsub.f32 %v2548, %v2675
    %v2739 = vsub.f32 %v2551, %v2677
    %v2740 = vsub.f32 %v2556, %v2679
    %v2741 = vsub.f32 %v2559, %v2681
    %v2742 = vsub.f32 %v2564, %v2683
    %v2743 = vsub.f32 %v2567, %v2685
    %v2744 = vsub.f32 %v2572, %v2687
    %v2745 = vsub.f32 %v2575, %v2689
    %v2746 = vsub.f32 %v2580, %v2691
    %v2747 = vsub.f32 %v2583, %v2693
    %v2748 = vsub.f32 %v2588, %v2695
    %v2749 = vsub.f32 %v2591, %v2697
    %v2750 = vsub.f32 %v2596, %v2699
    %v2751 = vsub.f32 %v2599, %v2701
    %v2752 = vsub.f32 %v2604, %v2703
    %v2753 = vsub.f32 %v2607, %v2705
    %v2754 = vsub.f32 %v2612, %v2707
    %v2755 = vsub.f32 %v2615, %v2709
    %v2756 = vsub.f32 %v2620, %v2711
    %v2757 = vsub.f32 %v2623, %v2713
    %v2758 = vsub.f32 %v2628, %v2715
    %v2759 = vsub.f32 %v2631, %v2717
    %v2760 = vsub.f32 %v2636, %v2719
    %v2761 = vsub.f32 %v2639, %v2721
    %v2762 = vsub.f32 %v2644, %v2723
    %v2763 = vsub.f32 %v2647, %v2725
    %v2764 = vsub.f32 %v2652, %v2727
    %v2765 = vsub.f32 %v2655, %v2729
    %v2766 = vsub.f32 %v2660, %v2731
    %v2767 = vsub.f32 %v2663, %v2733
    %v2768 = vsub.f32 %v2668, %v2735
    %v2769 = vsub.f32 %v2671, %v2737
    %v2770 = vmul.f32 %v2738, 1.442695
    %v2771 = vpow.pop %v2770
    %v2772 = vmul.f32 %v2739, 1.442695
    %v2773 = vpow.pop %v2772
    %v2774 = vmul.f32 %v2740, 1.442695
    %v2775 = vpow.pop %v2774
    %v2776 = vmul.f32 %v2741, 1.442695
    %v2777 = vpow.pop %v2776
    %v2778 = vmul.f32 %v2742, 1.442695
    %v2779 = vpow.pop %v2778
    %v2780 = vmul.f32 %v2743, 1.442695
    %v2781 = vpow.pop %v2780
    %v2782 = vmul.f32 %v2744, 1.442695
    %v2783 = vpow.pop %v2782
    %v2784 = vmul.f32 %v2745, 1.442695
    %v2785 = vpow.pop %v2784
    %v2786 = vmul.f32 %v2746, 1.442695
    %v2787 = vpow.pop %v2786
    %v2788 = vmul.f32 %v2747, 1.442695
    %v2789 = vpow.pop %v2788
    %v2790 = vmul.f32 %v2748, 1.442695
    %v2791 = vpow.pop %v2790
    %v2792 = vmul.f32 %v2749, 1.442695
    %v2793 = vpow.pop %v2792
    %v2794 = vmul.f32 %v2750, 1.442695
    %v2795 = vpow.pop %v2794
    %v2796 = vmul.f32 %v2751, 1.442695
    %v2797 = vpow.pop %v2796
    %v2798 = vmul.f32 %v2752, 1.442695
    %v2799 = vpow.pop %v2798
    %v2800 = vmul.f32 %v2753, 1.442695
    %v2801 = vpow.pop %v2800
    %v2802 = vmul.f32 %v2754, 1.442695
    %v2803 = vpow.pop %v2802
    %v2804 = vmul.f32 %v2755, 1.442695
    %v2805 = vpow.pop %v2804
    %v2806 = vmul.f32 %v2756, 1.442695
    %v2807 = vpow.pop %v2806
    %v2808 = vmul.f32 %v2757, 1.442695
    %v2809 = vpow.pop %v2808
    %v2810 = vmul.f32 %v2758, 1.442695
    %v2811 = vpow.pop %v2810
    %v2812 = vmul.f32 %v2759, 1.442695
    %v2813 = vpow.pop %v2812
    %v2814 = vmul.f32 %v2760, 1.442695
    %v2815 = vpow.pop %v2814
    %v2816 = vmul.f32 %v2761, 1.442695
    %v2817 = vpow.pop %v2816
    %v2818 = vmul.f32 %v2762, 1.442695
    %v2819 = vpow.pop %v2818
    %v2820 = vmul.f32 %v2763, 1.442695
    %v2821 = vpow.pop %v2820
    %v2822 = vmul.f32 %v2764, 1.442695
    %v2823 = vpow.pop %v2822
    %v2824 = vmul.f32 %v2765, 1.442695
    %v2825 = vpow.pop %v2824
    %v2826 = vmul.f32 %v2766, 1.442695
    %v2827 = vpow.pop %v2826
    %v2828 = vmul.f32 %v2767, 1.442695
    %v2829 = vpow.pop %v2828
    %v2830 = vmul.f32 %v2768, 1.442695
    %v2831 = vpow.pop %v2830
    %v2832 = vmul.f32 %v2769, 1.442695
    %v2833 = vpow.pop %v2832
    %2834 = vadd.xlane.f32.xlu0 %v2771
    %v2835 = vpop.xlane.xlu0 %2834
    %2836 = vadd.xlane.f32.xlu0 %v2773
    %v2837 = vpop.xlane.xlu0 %2836
    %2838 = vadd.xlane.f32.xlu0 %v2775
    %v2839 = vpop.xlane.xlu0 %2838
    %2840 = vadd.xlane.f32.xlu0 %v2777
    %v2841 = vpop.xlane.xlu0 %2840
    %2842 = vadd.xlane.f32.xlu0 %v2779
    %v2843 = vpop.xlane.xlu0 %2842
    %2844 = vadd.xlane.f32.xlu0 %v2781
    %v2845 = vpop.xlane.xlu0 %2844
    %2846 = vadd.xlane.f32.xlu0 %v2783
    %v2847 = vpop.xlane.xlu0 %2846
    %2848 = vadd.xlane.f32.xlu0 %v2785
    %v2849 = vpop.xlane.xlu0 %2848
    %2850 = vadd.xlane.f32.xlu0 %v2787
    %v2851 = vpop.xlane.xlu0 %2850
    %2852 = vadd.xlane.f32.xlu0 %v2789
    %v2853 = vpop.xlane.xlu0 %2852
    %2854 = vadd.xlane.f32.xlu0 %v2791
    %v2855 = vpop.xlane.xlu0 %2854
    %2856 = vadd.xlane.f32.xlu0 %v2793
    %v2857 = vpop.xlane.xlu0 %2856
    %2858 = vadd.xlane.f32.xlu0 %v2795
    %v2859 = vpop.xlane.xlu0 %2858
    %2860 = vadd.xlane.f32.xlu0 %v2797
    %v2861 = vpop.xlane.xlu0 %2860
    %2862 = vadd.xlane.f32.xlu0 %v2799
    %v2863 = vpop.xlane.xlu0 %2862
    %2864 = vadd.xlane.f32.xlu0 %v2801
    %v2865 = vpop.xlane.xlu0 %2864
    %2866 = vadd.xlane.f32.xlu0 %v2803
    %v2867 = vpop.xlane.xlu0 %2866
    %2868 = vadd.xlane.f32.xlu0 %v2805
    %v2869 = vpop.xlane.xlu0 %2868
    %2870 = vadd.xlane.f32.xlu0 %v2807
    %v2871 = vpop.xlane.xlu0 %2870
    %2872 = vadd.xlane.f32.xlu0 %v2809
    %v2873 = vpop.xlane.xlu0 %2872
    %2874 = vadd.xlane.f32.xlu0 %v2811
    %v2875 = vpop.xlane.xlu0 %2874
    %2876 = vadd.xlane.f32.xlu0 %v2813
    %v2877 = vpop.xlane.xlu0 %2876
    %2878 = vadd.xlane.f32.xlu0 %v2815
    %v2879 = vpop.xlane.xlu0 %2878
    %2880 = vadd.xlane.f32.xlu0 %v2817
    %v2881 = vpop.xlane.xlu0 %2880
    %2882 = vadd.xlane.f32.xlu0 %v2819
    %v2883 = vpop.xlane.xlu0 %2882
    %2884 = vadd.xlane.f32.xlu0 %v2821
    %v2885 = vpop.xlane.xlu0 %2884
    %2886 = vadd.xlane.f32.xlu0 %v2823
    %v2887 = vpop.xlane.xlu0 %2886
    %2888 = vadd.xlane.f32.xlu0 %v2825
    %v2889 = vpop.xlane.xlu0 %2888
    %2890 = vadd.xlane.f32.xlu0 %v2827
    %v2891 = vpop.xlane.xlu0 %2890
    %2892 = vadd.xlane.f32.xlu0 %v2829
    %v2893 = vpop.xlane.xlu0 %2892
    %2894 = vadd.xlane.f32.xlu0 %v2831
    %v2895 = vpop.xlane.xlu0 %2894
    %2896 = vadd.xlane.f32.xlu0 %v2833
    %v2897 = vpop.xlane.xlu0 %2896
    %v2898 = vrcp.pop %v2835
    %v2899 = vrcp.pop %v2837
    %v2900 = vrcp.pop %v2839
    %v2901 = vrcp.pop %v2841
    %v2902 = vrcp.pop %v2843
    %v2903 = vrcp.pop %v2845
    %v2904 = vrcp.pop %v2847
    %v2905 = vrcp.pop %v2849
    %v2906 = vrcp.pop %v2851
    %v2907 = vrcp.pop %v2853
    %v2908 = vrcp.pop %v2855
    %v2909 = vrcp.pop %v2857
    %v2910 = vrcp.pop %v2859
    %v2911 = vrcp.pop %v2861
    %v2912 = vrcp.pop %v2863
    %v2913 = vrcp.pop %v2865
    %v2914 = vrcp.pop %v2867
    %v2915 = vrcp.pop %v2869
    %v2916 = vrcp.pop %v2871
    %v2917 = vrcp.pop %v2873
    %v2918 = vrcp.pop %v2875
    %v2919 = vrcp.pop %v2877
    %v2920 = vrcp.pop %v2879
    %v2921 = vrcp.pop %v2881
    %v2922 = vrcp.pop %v2883
    %v2923 = vrcp.pop %v2885
    %v2924 = vrcp.pop %v2887
    %v2925 = vrcp.pop %v2889
    %v2926 = vrcp.pop %v2891
    %v2927 = vrcp.pop %v2893
    %v2928 = vrcp.pop %v2895
    %v2929 = vrcp.pop %v2897
    %v2930 = vmul.f32 %v2771, %v2898
    %v2931 = vmul.f32 %v2773, %v2899
    %v2932 = vmul.f32 %v2775, %v2900
    %v2933 = vmul.f32 %v2777, %v2901
    %v2934 = vmul.f32 %v2779, %v2902
    %v2935 = vmul.f32 %v2781, %v2903
    %v2936 = vmul.f32 %v2783, %v2904
    %v2937 = vmul.f32 %v2785, %v2905
    %v2938 = vmul.f32 %v2787, %v2906
    %v2939 = vmul.f32 %v2789, %v2907
    %v2940 = vmul.f32 %v2791, %v2908
    %v2941 = vmul.f32 %v2793, %v2909
    %v2942 = vmul.f32 %v2795, %v2910
    %v2943 = vmul.f32 %v2797, %v2911
    %v2944 = vmul.f32 %v2799, %v2912
    %v2945 = vmul.f32 %v2801, %v2913
    %v2946 = vmul.f32 %v2803, %v2914
    %v2947 = vmul.f32 %v2805, %v2915
    %v2948 = vmul.f32 %v2807, %v2916
    %v2949 = vmul.f32 %v2809, %v2917
    %v2950 = vmul.f32 %v2811, %v2918
    %v2951 = vmul.f32 %v2813, %v2919
    %v2952 = vmul.f32 %v2815, %v2920
    %v2953 = vmul.f32 %v2817, %v2921
    %v2954 = vmul.f32 %v2819, %v2922
    %v2955 = vmul.f32 %v2821, %v2923
    %v2956 = vmul.f32 %v2823, %v2924
    %v2957 = vmul.f32 %v2825, %v2925
    %v2958 = vmul.f32 %v2827, %v2926
    %v2959 = vmul.f32 %v2829, %v2927
    %v2960 = vmul.f32 %v2831, %v2928
    %v2961 = vmul.f32 %v2833, %v2929
    %2962 = vst [vmem:[#allocation5] sm:$0xff] %v2930
    %2963 = vst [vmem:[#allocation5 + $0x8] sm:$0xff] %v2931
    %2964 = vst [vmem:[#allocation5 + $0x10] sm:$0xff] %v2932
    %2965 = vst [vmem:[#allocation5 + $0x18] sm:$0xff] %v2933
    %2966 = vst [vmem:[#allocation5 + $0x20] sm:$0xff] %v2934
    %2967 = vst [vmem:[#allocation5 + $0x28] sm:$0xff] %v2935
    %2968 = vst [vmem:[#allocation5 + $0x30] sm:$0xff] %v2936
    %2969 = vst [vmem:[#allocation5 + $0x38] sm:$0xff] %v2937
    %2970 = vst [vmem:[#allocation5 + $0x40] sm:$0xff] %v2938
    %2971 = vst [vmem:[#allocation5 + $0x48] sm:$0xff] %v2939
    %2972 = vst [vmem:[#allocation5 + $0x50] sm:$0xff] %v2940
    %2973 = vst [vmem:[#allocation5 + $0x58] sm:$0xff] %v2941
    %2974 = vst [vmem:[#allocation5 + $0x60] sm:$0xff] %v2942
    %2975 = vst [vmem:[#allocation5 + $0x68] sm:$0xff] %v2943
    %2976 = vst [vmem:[#allocation5 + $0x70] sm:$0xff] %v2944
    %2977 = vst [vmem:[#allocation5 + $0x78] sm:$0xff] %v2945
    %2978 = vst [vmem:[#allocation5 + $0x80] sm:$0xff] %v2946
    %2979 = vst [vmem:[#allocation5 + $0x88] sm:$0xff] %v2947
    %2980 = vst [vmem:[#allocation5 + $0x90] sm:$0xff] %v2948
    %2981 = vst [vmem:[#allocation5 + $0x98] sm:$0xff] %v2949
    %2982 = vst [vmem:[#allocation5 + $0xa0] sm:$0xff] %v2950
    %2983 = vst [vmem:[#allocation5 + $0xa8] sm:$0xff] %v2951
    %2984 = vst [vmem:[#allocation5 + $0xb0] sm:$0xff] %v2952
    %2985 = vst [vmem:[#allocation5 + $0xb8] sm:$0xff] %v2953
    %2986 = vst [vmem:[#allocation5 + $0xc0] sm:$0xff] %v2954
    %2987 = vst [vmem:[#allocation5 + $0xc8] sm:$0xff] %v2955
    %2988 = vst [vmem:[#allocation5 + $0xd0] sm:$0xff] %v2956
    %2989 = vst [vmem:[#allocation5 + $0xd8] sm:$0xff] %v2957
    %2990 = vst [vmem:[#allocation5 + $0xe0] sm:$0xff] %v2958
    %2991 = vst [vmem:[#allocation5 + $0xe8] sm:$0xff] %v2959
    %2992 = vst [vmem:[#allocation5 + $0xf0] sm:$0xff] %v2960
    %2993 = vst [vmem:[#allocation5 + $0xf8] sm:$0xff] %v2961
    // Predicated region
    $region22: #{tpu_custom_call.1} parent=1 // pred_check
      _
    $region23: #{tpu_custom_call.1} parent=1 // pred_check_branch
      %2995 = sbr.rel (0) target = $region25
    $region24: #{tpu_custom_call.1} parent=1 // pred_region
      %s2997 = ssub.s32 4096, 4096
      %2998 = vsyncadd [#allocation4], %s2997
      %s2999 = sshll.u32 [#allocation5], 4
      %s3000 = int_to_ptr.vmem [resolvable:$true] %s2999
      %3005 = dma.vmem_to_hbm [thread:$0]  %s3000, 4096, %s4, [#allocation4], 128, 128, 8
    $region25: #{tpu_custom_call.1} parent=1 // pred_fallthru
      _
    // Predicated region
    $region26: #{tpu_custom_call.1} parent=1 // pred_check
      _
    $region27: #{tpu_custom_call.1} parent=1 // pred_check_branch
      %3007 = sbr.rel (0) target = $region29
    $region28: #{tpu_custom_call.1} parent=1 // pred_region
      %3008 = dma.done [#allocation4], 4096
    $region29: #{tpu_custom_call.1} parent=1 // pred_fallthru
      _
    %3009 = vsyncpa [#allocation3], 1
    %3010 = vsyncpa [#allocation4], 1

</llo_original>
